<compile_context>
chip_gen: v6e
topology: v6e:2x2x1
jax: 0.10.0
libtpu: 0.0.40
codegen_flags: <defaults>
</compile_context>

<pallas_src>
import math
import numpy as np
import jax
import jax.numpy as jnp
from jax.experimental import pallas as pl
from jax.experimental.pallas import tpu as pltpu


def _choose_block_b(B, S, NQ, D, H, *, vmem_budget_bytes=24 << 20, min_steps=2):
    """Largest divisor TB of B whose per-step working set fits the VMEM budget,
    preferring >= min_steps grid steps (so both v7x TensorCores get work)."""
    HNQ = H * NQ

    def est(tb):
        m = tb * S
        streams = 2 * (m * D * 2 + m * 2 + tb * NQ * D * 4)   # dbl-buf value/mask/out
        weights = (D * HNQ + 2 * D * D) * 2 + (HNQ * HNQ + HNQ + 2 * D) * 4
        temps = m * D * (4 + 2 + 2) + 4 * m * HNQ * 4 + tb * NQ * D * 4
        return streams + weights + temps

    divisors = [d for d in range(1, B + 1) if B % d == 0]
    fits = [d for d in divisors if est(d) <= vmem_budget_bytes] or [1]
    multi = [d for d in fits if B // d >= min_steps]
    return max(multi) if multi else max(fits)


def make_kernel(TB, NQ, S, D, H):
    d_k = D // H
    HNQ = H * NQ
    M = TB * S

    def kernel(qeff_ref, qb_ref, v_ref, mv_ref, g_ref,
               wv_ref, bv_ref, wo_ref, bo_ref, o_ref, ctx_ref):
        # qeff_ref : (D, H*NQ) bf16  query with Wq, Wk and 1/sqrt(d_k) folded in
        # qb_ref   : (1, H*NQ) f32   folded (q_heads . bk) * scale
        # v_ref    : (TB, S, D) bf16 value block      mv_ref : (TB, S, 1) bf16 mask
        # g_ref    : (H*NQ, H*NQ) f32 block-diag ones (head-group sum)
        # wv_ref   : (D, D) bf16 Wv^T   bv_ref : (1, D) f32
        # wo_ref   : (D, D) bf16 Wo^T   bo_ref : (1, D) f32
        # o_ref    : (TB, NQ, D) f32
        # ctx_ref  : (TB*NQ, D) f32 VMEM scratch (concatenated head contexts)

        nv = (v_ref[...] * mv_ref[...]).reshape(M, D)           # bf16 masked value

        # ---- scores for ALL heads/queries: one (M, D) x (D, H*NQ) matmul ----
        scores = jnp.dot(nv, qeff_ref[...],
                         preferred_element_type=jnp.float32) + qb_ref[...]

        # masked_fill (replace, not add): the softmax runs over the query axis,
        # so fully-masked key rows must become uniform 1/NQ, exactly like torch.
        km = mv_ref[...].reshape(M, 1)
        scores = jnp.where(km == 0, -1000000000.0, scores)

        # ---- softmax over the query axis within each head group -------------
        # Row-global max is constant within every head group -> softmax exact,
        # all exponents <= 0.  (Per-group max would only matter if cross-head
        # score gaps exceeded ~87, far outside realistic ranges.)
        scores = scores - jnp.max(scores, axis=-1, keepdims=True)
        e = jnp.exp(scores)
        denom = jnp.dot(e, g_ref[...], preferred_element_type=jnp.float32)
        probs = e * pl.reciprocal(denom, approx=True)           # (M, H*NQ) f32

        # ---- V projection: one (M, D) x (D, D) matmul ------------------------
        vp = jnp.dot(nv, wv_ref[...],
                     preferred_element_type=jnp.float32) + bv_ref[...]
        vp = vp.astype(jnp.bfloat16).reshape(TB, S, D)

        # One transpose of the (small) probability block to query-major layout;
        # per-head work below then only needs aligned sublane slices.
        probs_qm = jnp.swapaxes(probs.reshape(TB, S, HNQ), 1, 2)  # (TB, H*NQ, S)
        probs_qm = probs_qm.astype(jnp.bfloat16)

        # ---- per-head context, written straight into the concat scratch -----
        for h in range(H):
            p_h = probs_qm[:, h * NQ:(h + 1) * NQ, :]             # (TB, NQ, S)
            v_h = vp[:, :, h * d_k:(h + 1) * d_k]                 # (TB, S, d_k)
            ctx = jnp.einsum('bqs,bsd->bqd', p_h, v_h,
                             preferred_element_type=jnp.float32)  # (TB, NQ, d_k)
            ctx_ref[:, h * d_k:(h + 1) * d_k] = ctx.reshape(TB * NQ, d_k)

        # ---- output projection: (TB*NQ, D) x (D, D) --------------------------
        out = jnp.dot(ctx_ref[...].astype(jnp.bfloat16), wo_ref[...],
                      preferred_element_type=jnp.float32) + bo_ref[...]
        o_ref[...] = out.reshape(TB, NQ, D).astype(o_ref.dtype)

    return kernel


def utterance_attention(query, value, attention_mask, params, attn_head,
                        *, block_b=None, operand_dtype=jnp.bfloat16):
    """query:[NQ,D], value:[B,S,D], attention_mask:[B,S] or None -> [B,NQ,D] f32."""
    NQ, D = query.shape
    B, S, _ = value.shape
    H = attn_head
    assert D % H == 0
    d_k = D // H
    HNQ = H * NQ
    scale = 1.0 / math.sqrt(d_k)

    wq, bq, wk, bk, wv, bv, wo, bo = [jnp.asarray(p, jnp.float32) for p in params]

    if attention_mask is None:
        attention_mask = jnp.ones((B, S), dtype=jnp.float32)
    mask_v = attention_mask.astype(operand_dtype).reshape(B, S, 1)

    # Batch-invariant query path: Wq, Wk, bk and the 1/sqrt(d_k) scale are all
    # folded in on the host (computed once, tiny).
    qp = jnp.dot(query.astype(jnp.float32), wq.T) + bq               # (NQ, D)
    q_heads = qp.reshape(NQ, H, d_k).transpose(1, 0, 2)              # (H, NQ, d_k)
    qeff = jnp.einsum('hqd,hde->hqe', q_heads, wk.reshape(H, d_k, D)) * scale
    qeff_t = qeff.reshape(HNQ, D).T.astype(operand_dtype)            # (D, H*NQ)
    qb = (jnp.einsum('hqd,hd->hq', q_heads, bk.reshape(H, d_k)) * scale
          ).reshape(1, HNQ).astype(jnp.float32)

    # Head-group summation matrix for the query-axis softmax denominator.
    gmat = jnp.kron(jnp.eye(H, dtype=jnp.float32),
                    jnp.ones((NQ, NQ), dtype=jnp.float32))           # (HNQ, HNQ)

    wv_t = wv.T.astype(operand_dtype)
    wo_t = wo.T.astype(operand_dtype)
    bv2 = bv.reshape(1, D)
    bo2 = bo.reshape(1, D)

    TB = _choose_block_b(B, S, NQ, D, H) if block_b is None else block_b
    assert B % TB == 0, "batch block must divide the batch size"

    kernel = make_kernel(TB, NQ, S, D, H)
    args = (qeff_t, qb, value.astype(operand_dtype), mask_v, gmat,
            wv_t, bv2, wo_t, bo2)

    def run(single_buffer_weights):
        const_kw = dict(pipeline_mode=pl.Buffered(1)) if single_buffer_weights else {}

        def const(shape):
            nd = len(shape)
            return pl.BlockSpec(shape, lambda i, _nd=nd: (0,) * _nd, **const_kw)

        return pl.pallas_call(
            kernel,
            out_shape=jax.ShapeDtypeStruct((B, NQ, D), jnp.float32),
            grid=(B // TB,),
            in_specs=[
                const((D, HNQ)),                                  # qeff_t (shared)
                const((1, HNQ)),                                  # qb     (shared)
                pl.BlockSpec((TB, S, D), lambda i: (i, 0, 0)),    # value block
                pl.BlockSpec((TB, S, 1), lambda i: (i, 0, 0)),    # mask block
                const((HNQ, HNQ)),                                # group-sum matrix
                const((D, D)), const((1, D)),                     # Wv^T, bv
                const((D, D)), const((1, D)),                     # Wout^T, bout
            ],
            out_specs=pl.BlockSpec((TB, NQ, D), lambda i: (i, 0, 0)),
            scratch_shapes=[pltpu.VMEM((TB * NQ, D), jnp.float32)],
            compiler_params=pltpu.CompilerParams(
                dimension_semantics=("parallel",),
                vmem_limit_bytes=40 * 1024 * 1024,
            ),
        )(*args)

    try:
        return run(True)
    except Exception:
        # Fallback if single-buffered (Buffered(1)) weight specs are rejected
        # by this Pallas version; correctness/perf structure is otherwise equal.
        return run(False)


def reference(query, value, attention_mask, params, attn_head):
    """Pure-JAX f32 reference mirroring the PyTorch forward exactly."""
    NQ, D = query.shape
    B, S, _ = value.shape
    H = attn_head
    d_k = D // H
    wq, bq, wk, bk, wv, bv, wo, bo = params
    hp = jax.lax.Precision.HIGHEST

    exp_q = jnp.broadcast_to(query[None], (B, NQ, D))
    if attention_mask is not None:
        m = attention_mask.astype(jnp.float32)
        new_value = value * m[:, :, None]
        attn_mask = jnp.broadcast_to(m[:, None, :], (B, NQ, S))
    else:
        new_value = value
        attn_mask = None

    lin = lambda x, w, b: jnp.einsum('bnd,ed->bne', x, w, precision=hp) + b
    q = lin(exp_q, wq, bq).reshape(B, NQ, H, d_k).transpose(0, 2, 1, 3)
    k = lin(new_value, wk, bk).reshape(B, S, H, d_k).transpose(0, 2, 1, 3)
    v = lin(new_value, wv, bv).reshape(B, S, H, d_k).transpose(0, 2, 1, 3)

    scores = jnp.einsum('bhqd,bhkd->bhqk', q, k, precision=hp) / math.sqrt(d_k)
    if attn_mask is not None:
        scores = jnp.where(attn_mask[:, None] == 0, -1000000000.0, scores)
    scores = jax.nn.softmax(scores, axis=-2)   # softmax over the query axis
    out = jnp.einsum('bhqk,bhkd->bhqd', scores, v, precision=hp)
    concat = out.transpose(0, 2, 1, 3).reshape(B, NQ, D)
    return jnp.einsum('bnd,ed->bne', concat, wo, precision=hp) + bo


if __name__ == "__main__":
    B, S, NQ, D, H = 4, 8, 8, 32, 4

    key = jax.random.PRNGKey(0)
    keys = jax.random.split(key, 12)

    bound = 1.0 / math.sqrt(D)
    init_w = lambda k: jax.random.uniform(k, (D, D), jnp.float32, -bound, bound)
    init_b = lambda k: jax.random.uniform(k, (D,), jnp.float32, -bound, bound)
    params = (init_w(keys[0]), init_b(keys[1]),   # q_linear
              init_w(keys[2]), init_b(keys[3]),   # k_linear
              init_w(keys[4]), init_b(keys[5]),   # v_linear
              init_w(keys[6]), init_b(keys[7]))   # out

    query = jax.random.normal(keys[8], (NQ, D), jnp.float32)
    value = jax.random.normal(keys[9], (B, S, D), jnp.float32)
    attention_mask = (jax.random.uniform(keys[10], (B, S)) > 0.3).astype(jnp.float32)

    out = utterance_attention(query, value, attention_mask, params, H)
    out = jax.block_until_ready(out)

    ref = reference(query, value, attention_mask, params, H)
    # Tolerance covers bf16 MXU operands (f32 accumulation) and the approximate
    # EUP reciprocal in the softmax.
    np.testing.assert_allclose(np.asarray(out), np.asarray(ref),
                               rtol=2e-2, atol=2e-2)

    print("KERNEL_OK")
</pallas_src>

<mosaic_0001>
module attributes {stable_mosaic.version = 11 : i64} {
  func.func @kernel(%arg0: i32, %arg1: memref<32x32xbf16, #tpu.memory_space<vmem>>, %arg2: memref<1x32xf32, #tpu.memory_space<vmem>>, %arg3: memref<2x8x32xbf16, #tpu.memory_space<vmem>>, %arg4: memref<2x8x1xbf16, #tpu.memory_space<vmem>>, %arg5: memref<32x32xf32, #tpu.memory_space<vmem>>, %arg6: memref<32x32xbf16, #tpu.memory_space<vmem>>, %arg7: memref<1x32xf32, #tpu.memory_space<vmem>>, %arg8: memref<32x32xbf16, #tpu.memory_space<vmem>>, %arg9: memref<1x32xf32, #tpu.memory_space<vmem>>, %arg10: memref<2x8x32xf32, #tpu.memory_space<vmem>>, %arg11: memref<16x32xf32, #tpu.memory_space<vmem>>) attributes {dimension_semantics = [#tpu.dimension_semantics<parallel>], iteration_bounds = array<i64: 2>, scalar_prefetch = 0 : i64, scratch_operands = 1 : i64, tpu.core_type = #tpu.core_type<tc>, window_params = [{pipeline_mode = #tpu.pipeline_mode<synchronous>, transform_indices = @transform_0, window_bounds = array<i64: 32, 32>}, {pipeline_mode = #tpu.pipeline_mode<synchronous>, transform_indices = @transform_1, window_bounds = array<i64: 1, 32>}, {transform_indices = @transform_2, window_bounds = array<i64: 2, 8, 32>}, {transform_indices = @transform_3, window_bounds = array<i64: 2, 8, 1>}, {pipeline_mode = #tpu.pipeline_mode<synchronous>, transform_indices = @transform_4, window_bounds = array<i64: 32, 32>}, {pipeline_mode = #tpu.pipeline_mode<synchronous>, transform_indices = @transform_5, window_bounds = array<i64: 32, 32>}, {pipeline_mode = #tpu.pipeline_mode<synchronous>, transform_indices = @transform_6, window_bounds = array<i64: 1, 32>}, {pipeline_mode = #tpu.pipeline_mode<synchronous>, transform_indices = @transform_7, window_bounds = array<i64: 32, 32>}, {pipeline_mode = #tpu.pipeline_mode<synchronous>, transform_indices = @transform_8, window_bounds = array<i64: 1, 32>}, {transform_indices = @transform_9, window_bounds = array<i64: 2, 8, 32>}]} {
    %c0 = arith.constant 0 : index
    %c0_0 = arith.constant 0 : index
    %c0_1 = arith.constant 0 : index
    %0 = vector.load %arg3[%c0, %c0_0, %c0_1] : memref<2x8x32xbf16, #tpu.memory_space<vmem>>, vector<2x8x32xbf16>
    %c0_2 = arith.constant 0 : index
    %c0_3 = arith.constant 0 : index
    %c0_4 = arith.constant 0 : index
    %1 = vector.load %arg4[%c0_2, %c0_3, %c0_4] : memref<2x8x1xbf16, #tpu.memory_space<vmem>>, vector<2x8x1xbf16>
    %2 = vector.broadcast %1 : vector<2x8x1xbf16> to vector<2x8x32xbf16>
    %3 = arith.mulf %0, %2 : vector<2x8x32xbf16>
    %4 = vector.shape_cast %3 : vector<2x8x32xbf16> to vector<16x32xbf16>
    %c0_5 = arith.constant 0 : index
    %c0_6 = arith.constant 0 : index
    %5 = vector.load %arg1[%c0_5, %c0_6] : memref<32x32xbf16, #tpu.memory_space<vmem>>, vector<32x32xbf16>
    %cst = arith.constant dense<0.000000e+00> : vector<16x32xf32>
    %6 = tpu.matmul %4, %5, %cst {dimension_numbers = #tpu.dot_dimension_numbers<[1], [0], [0], [1], [0, 0, 1, 1], [], []>} : vector<16x32xbf16>, vector<32x32xbf16>, vector<16x32xf32> -> vector<16x32xf32>
    %c0_7 = arith.constant 0 : index
    %c0_8 = arith.constant 0 : index
    %7 = vector.load %arg2[%c0_7, %c0_8] : memref<1x32xf32, #tpu.memory_space<vmem>>, vector<1x32xf32>
    %8 = vector.broadcast %7 : vector<1x32xf32> to vector<16x32xf32>
    %9 = arith.addf %6, %8 : vector<16x32xf32>
    %c0_9 = arith.constant 0 : index
    %c0_10 = arith.constant 0 : index
    %c0_11 = arith.constant 0 : index
    %10 = vector.load %arg4[%c0_9, %c0_10, %c0_11] : memref<2x8x1xbf16, #tpu.memory_space<vmem>>, vector<2x8x1xbf16>
    %11 = vector.shape_cast %10 : vector<2x8x1xbf16> to vector<16x1xbf16>
    %cst_12 = arith.constant 0.000000e+00 : bf16
    %12 = vector.broadcast %cst_12 : bf16 to vector<16x1xbf16>
    %13 = arith.cmpf oeq, %11, %12 : vector<16x1xbf16>
    %cst_13 = arith.constant -1.000000e+09 : f32
    %14 = vector.shape_cast %13 : vector<16x1xi1> to vector<16x1xi1>
    %15 = vector.broadcast %14 : vector<16x1xi1> to vector<16x32xi1>
    %16 = vector.broadcast %cst_13 : f32 to vector<16x32xf32>
    %17 = arith.select %15, %16, %9 : vector<16x32xi1>, vector<16x32xf32>
    %cst_14 = arith.constant dense<0xFF800000> : vector<16xf32>
    %18 = vector.multi_reduction <maximumf>, %17, %cst_14 [1] : vector<16x32xf32> to vector<16xf32>
    %19 = vector.shape_cast %18 : vector<16xf32> to vector<16x1xf32>
    %20 = vector.broadcast %19 : vector<16x1xf32> to vector<16x32xf32>
    %21 = arith.subf %17, %20 : vector<16x32xf32>
    %22 = math.exp %21 : vector<16x32xf32>
    %c0_15 = arith.constant 0 : index
    %c0_16 = arith.constant 0 : index
    %23 = vector.load %arg5[%c0_15, %c0_16] : memref<32x32xf32, #tpu.memory_space<vmem>>, vector<32x32xf32>
    %cst_17 = arith.constant dense<0.000000e+00> : vector<16x32xf32>
    %24 = tpu.matmul %22, %23, %cst_17 {dimension_numbers = #tpu.dot_dimension_numbers<[1], [0], [0], [1], [0, 0, 1, 1], [], []>} : vector<16x32xf32>, vector<32x32xf32>, vector<16x32xf32> -> vector<16x32xf32>
    %25 = tpu.reciprocal %24 {approx = true} : vector<16x32xf32> -> vector<16x32xf32>
    %26 = arith.mulf %22, %25 : vector<16x32xf32>
    %c0_18 = arith.constant 0 : index
    %c0_19 = arith.constant 0 : index
    %27 = vector.load %arg6[%c0_18, %c0_19] : memref<32x32xbf16, #tpu.memory_space<vmem>>, vector<32x32xbf16>
    %cst_20 = arith.constant dense<0.000000e+00> : vector<16x32xf32>
    %28 = tpu.matmul %4, %27, %cst_20 {dimension_numbers = #tpu.dot_dimension_numbers<[1], [0], [0], [1], [0, 0, 1, 1], [], []>} : vector<16x32xbf16>, vector<32x32xbf16>, vector<16x32xf32> -> vector<16x32xf32>
    %c0_21 = arith.constant 0 : index
    %c0_22 = arith.constant 0 : index
    %29 = vector.load %arg7[%c0_21, %c0_22] : memref<1x32xf32, #tpu.memory_space<vmem>>, vector<1x32xf32>
    %30 = vector.broadcast %29 : vector<1x32xf32> to vector<16x32xf32>
    %31 = arith.addf %28, %30 : vector<16x32xf32>
    %32 = arith.truncf %31 : vector<16x32xf32> to vector<16x32xbf16>
    %33 = vector.shape_cast %32 : vector<16x32xbf16> to vector<2x8x32xbf16>
    %34 = vector.shape_cast %26 : vector<16x32xf32> to vector<2x8x32xf32>
    %35 = tpu.transpose %34, [0, 2, 1] : vector<2x8x32xf32> -> vector<2x32x8xf32>
    %36 = arith.truncf %35 : vector<2x32x8xf32> to vector<2x32x8xbf16>
    %37 = vector.extract_strided_slice %36 {offsets = [0, 0, 0], sizes = [2, 8, 8], strides = [1, 1, 1]} : vector<2x32x8xbf16> to vector<2x8x8xbf16>
    %38 = vector.extract_strided_slice %33 {offsets = [0, 0, 0], sizes = [2, 8, 8], strides = [1, 1, 1]} : vector<2x8x32xbf16> to vector<2x8x8xbf16>
    "tpu.trace_start"() <{level = 10 : i32, message = "bqs,bsd->bqd"}> : () -> ()
    %cst_23 = arith.constant dense<0.000000e+00> : vector<2x8x8xf32>
    %39 = tpu.matmul %37, %38, %cst_23 {dimension_numbers = #tpu.dot_dimension_numbers<[2], [1], [1], [2], [0, 0, 0, 1, 1, 2], [0], [0]>} : vector<2x8x8xbf16>, vector<2x8x8xbf16>, vector<2x8x8xf32> -> vector<2x8x8xf32>
    "tpu.trace_stop"() : () -> ()
    %40 = vector.shape_cast %39 : vector<2x8x8xf32> to vector<16x8xf32>
    %c0_24 = arith.constant 0 : index
    %c0_25 = arith.constant 0 : index
    %41 = vector.load %arg11[%c0_24, %c0_25] : memref<16x32xf32, #tpu.memory_space<vmem>>, vector<16x8xf32>
    tpu.vector_store %arg11[%c0_24, %c0_25], %40 {strides = array<i32>} : memref<16x32xf32, #tpu.memory_space<vmem>>, vector<16x8xf32>,
    %42 = vector.extract_strided_slice %36 {offsets = [0, 8, 0], sizes = [2, 8, 8], strides = [1, 1, 1]} : vector<2x32x8xbf16> to vector<2x8x8xbf16>
    %43 = vector.extract_strided_slice %33 {offsets = [0, 0, 8], sizes = [2, 8, 8], strides = [1, 1, 1]} : vector<2x8x32xbf16> to vector<2x8x8xbf16>
    "tpu.trace_start"() <{level = 10 : i32, message = "bqs,bsd->bqd"}> : () -> ()
    %cst_26 = arith.constant dense<0.000000e+00> : vector<2x8x8xf32>
    %44 = tpu.matmul %42, %43, %cst_26 {dimension_numbers = #tpu.dot_dimension_numbers<[2], [1], [1], [2], [0, 0, 0, 1, 1, 2], [0], [0]>} : vector<2x8x8xbf16>, vector<2x8x8xbf16>, vector<2x8x8xf32> -> vector<2x8x8xf32>
    "tpu.trace_stop"() : () -> ()
    %45 = vector.shape_cast %44 : vector<2x8x8xf32> to vector<16x8xf32>
    %c0_27 = arith.constant 0 : index
    %c8 = arith.constant 8 : index
    %46 = vector.load %arg11[%c0_27, %c8] : memref<16x32xf32, #tpu.memory_space<vmem>>, vector<16x8xf32>
    tpu.vector_store %arg11[%c0_27, %c8], %45 {strides = array<i32>} : memref<16x32xf32, #tpu.memory_space<vmem>>, vector<16x8xf32>,
    %47 = vector.extract_strided_slice %36 {offsets = [0, 16, 0], sizes = [2, 8, 8], strides = [1, 1, 1]} : vector<2x32x8xbf16> to vector<2x8x8xbf16>
    %48 = vector.extract_strided_slice %33 {offsets = [0, 0, 16], sizes = [2, 8, 8], strides = [1, 1, 1]} : vector<2x8x32xbf16> to vector<2x8x8xbf16>
    "tpu.trace_start"() <{level = 10 : i32, message = "bqs,bsd->bqd"}> : () -> ()
    %cst_28 = arith.constant dense<0.000000e+00> : vector<2x8x8xf32>
    %49 = tpu.matmul %47, %48, %cst_28 {dimension_numbers = #tpu.dot_dimension_numbers<[2], [1], [1], [2], [0, 0, 0, 1, 1, 2], [0], [0]>} : vector<2x8x8xbf16>, vector<2x8x8xbf16>, vector<2x8x8xf32> -> vector<2x8x8xf32>
    "tpu.trace_stop"() : () -> ()
    %50 = vector.shape_cast %49 : vector<2x8x8xf32> to vector<16x8xf32>
    %c0_29 = arith.constant 0 : index
    %c16 = arith.constant 16 : index
    %51 = vector.load %arg11[%c0_29, %c16] : memref<16x32xf32, #tpu.memory_space<vmem>>, vector<16x8xf32>
    tpu.vector_store %arg11[%c0_29, %c16], %50 {strides = array<i32>} : memref<16x32xf32, #tpu.memory_space<vmem>>, vector<16x8xf32>,
    %52 = vector.extract_strided_slice %36 {offsets = [0, 24, 0], sizes = [2, 8, 8], strides = [1, 1, 1]} : vector<2x32x8xbf16> to vector<2x8x8xbf16>
    %53 = vector.extract_strided_slice %33 {offsets = [0, 0, 24], sizes = [2, 8, 8], strides = [1, 1, 1]} : vector<2x8x32xbf16> to vector<2x8x8xbf16>
    "tpu.trace_start"() <{level = 10 : i32, message = "bqs,bsd->bqd"}> : () -> ()
    %cst_30 = arith.constant dense<0.000000e+00> : vector<2x8x8xf32>
    %54 = tpu.matmul %52, %53, %cst_30 {dimension_numbers = #tpu.dot_dimension_numbers<[2], [1], [1], [2], [0, 0, 0, 1, 1, 2], [0], [0]>} : vector<2x8x8xbf16>, vector<2x8x8xbf16>, vector<2x8x8xf32> -> vector<2x8x8xf32>
    "tpu.trace_stop"() : () -> ()
    %55 = vector.shape_cast %54 : vector<2x8x8xf32> to vector<16x8xf32>
    %c0_31 = arith.constant 0 : index
    %c24 = arith.constant 24 : index
    %56 = vector.load %arg11[%c0_31, %c24] : memref<16x32xf32, #tpu.memory_space<vmem>>, vector<16x8xf32>
    tpu.vector_store %arg11[%c0_31, %c24], %55 {strides = array<i32>} : memref<16x32xf32, #tpu.memory_space<vmem>>, vector<16x8xf32>,
    %c0_32 = arith.constant 0 : index
    %c0_33 = arith.constant 0 : index
    %57 = vector.load %arg11[%c0_32, %c0_33] : memref<16x32xf32, #tpu.memory_space<vmem>>, vector<16x32xf32>
    %58 = arith.truncf %57 : vector<16x32xf32> to vector<16x32xbf16>
    %c0_34 = arith.constant 0 : index
    %c0_35 = arith.constant 0 : index
    %59 = vector.load %arg8[%c0_34, %c0_35] : memref<32x32xbf16, #tpu.memory_space<vmem>>, vector<32x32xbf16>
    %cst_36 = arith.constant dense<0.000000e+00> : vector<16x32xf32>
    %60 = tpu.matmul %58, %59, %cst_36 {dimension_numbers = #tpu.dot_dimension_numbers<[1], [0], [0], [1], [0, 0, 1, 1], [], []>} : vector<16x32xbf16>, vector<32x32xbf16>, vector<16x32xf32> -> vector<16x32xf32>
    %c0_37 = arith.constant 0 : index
    %c0_38 = arith.constant 0 : index
    %61 = vector.load %arg9[%c0_37, %c0_38] : memref<1x32xf32, #tpu.memory_space<vmem>>, vector<1x32xf32>
    %62 = vector.broadcast %61 : vector<1x32xf32> to vector<16x32xf32>
    %63 = arith.addf %60, %62 : vector<16x32xf32>
    %64 = vector.shape_cast %63 : vector<16x32xf32> to vector<2x8x32xf32>
    %c0_39 = arith.constant 0 : index
    %c0_40 = arith.constant 0 : index
    %c0_41 = arith.constant 0 : index
    %65 = vector.load %arg10[%c0_39, %c0_40, %c0_41] : memref<2x8x32xf32, #tpu.memory_space<vmem>>, vector<2x8x32xf32>
    tpu.vector_store %arg10[%c0_39, %c0_40, %c0_41], %64 {strides = array<i32>} : memref<2x8x32xf32, #tpu.memory_space<vmem>>, vector<2x8x32xf32>,
    return
  }
  func.func @transform_0(%arg0: i32) -> (i32, i32) {
    %c0_i32 = arith.constant 0 : i32
    %c0_i32_0 = arith.constant 0 : i32
    %c0_i32_1 = arith.constant 0 : i32
    return %c0_i32, %c0_i32_0 : i32, i32
  }
  func.func @transform_1(%arg0: i32) -> (i32, i32) {
    %c0_i32 = arith.constant 0 : i32
    %c0_i32_0 = arith.constant 0 : i32
    %c0_i32_1 = arith.constant 0 : i32
    return %c0_i32, %c0_i32_0 : i32, i32
  }
  func.func @transform_2(%arg0: i32) -> (i32, i32, i32) {
    %c0_i32 = arith.constant 0 : i32
    %c0_i32_0 = arith.constant 0 : i32
    %c0_i32_1 = arith.constant 0 : i32
    return %arg0, %c0_i32, %c0_i32_0 : i32, i32, i32
  }
  func.func @transform_3(%arg0: i32) -> (i32, i32, i32) {
    %c0_i32 = arith.constant 0 : i32
    %c0_i32_0 = arith.constant 0 : i32
    %c0_i32_1 = arith.constant 0 : i32
    return %arg0, %c0_i32, %c0_i32_0 : i32, i32, i32
  }
  func.func @transform_4(%arg0: i32) -> (i32, i32) {
    %c0_i32 = arith.constant 0 : i32
    %c0_i32_0 = arith.constant 0 : i32
    %c0_i32_1 = arith.constant 0 : i32
    return %c0_i32, %c0_i32_0 : i32, i32
  }
  func.func @transform_5(%arg0: i32) -> (i32, i32) {
    %c0_i32 = arith.constant 0 : i32
    %c0_i32_0 = arith.constant 0 : i32
    %c0_i32_1 = arith.constant 0 : i32
    return %c0_i32, %c0_i32_0 : i32, i32
  }
  func.func @transform_6(%arg0: i32) -> (i32, i32) {
    %c0_i32 = arith.constant 0 : i32
    %c0_i32_0 = arith.constant 0 : i32
    %c0_i32_1 = arith.constant 0 : i32
    return %c0_i32, %c0_i32_0 : i32, i32
  }
  func.func @transform_7(%arg0: i32) -> (i32, i32) {
    %c0_i32 = arith.constant 0 : i32
    %c0_i32_0 = arith.constant 0 : i32
    %c0_i32_1 = arith.constant 0 : i32
    return %c0_i32, %c0_i32_0 : i32, i32
  }
  func.func @transform_8(%arg0: i32) -> (i32, i32) {
    %c0_i32 = arith.constant 0 : i32
    %c0_i32_0 = arith.constant 0 : i32
    %c0_i32_1 = arith.constant 0 : i32
    return %c0_i32, %c0_i32_0 : i32, i32
  }
  func.func @transform_9(%arg0: i32) -> (i32, i32, i32) {
    %c0_i32 = arith.constant 0 : i32
    %c0_i32_0 = arith.constant 0 : i32
    %c0_i32_1 = arith.constant 0 : i32
    return %arg0, %c0_i32, %c0_i32_0 : i32, i32, i32
  }
}

module attributes {stable_mosaic.version = 11 : i64} {
  func.func @kernel(%arg0: i32, %arg1: memref<32x32xbf16, #tpu.memory_space<vmem>>, %arg2: memref<1x32xf32, #tpu.memory_space<vmem>>, %arg3: memref<2x8x32xbf16, #tpu.memory_space<vmem>>, %arg4: memref<2x8x1xbf16, #tpu.memory_space<vmem>>, %arg5: memref<32x32xf32, #tpu.memory_space<vmem>>, %arg6: memref<32x32xbf16, #tpu.memory_space<vmem>>, %arg7: memref<1x32xf32, #tpu.memory_space<vmem>>, %arg8: memref<32x32xbf16, #tpu.memory_space<vmem>>, %arg9: memref<1x32xf32, #tpu.memory_space<vmem>>, %arg10: memref<2x8x32xf32, #tpu.memory_space<vmem>>, %arg11: memref<16x32xf32, #tpu.memory_space<vmem>>) attributes {dimension_semantics = [#tpu.dimension_semantics<parallel>], iteration_bounds = array<i64: 2>, scalar_prefetch = 0 : i64, scratch_operands = 1 : i64, tpu.core_type = #tpu.core_type<tc>, window_params = [{pipeline_mode = #tpu.pipeline_mode<synchronous>, transform_indices = @transform_0, window_bounds = array<i64: 32, 32>}, {pipeline_mode = #tpu.pipeline_mode<synchronous>, transform_indices = @transform_1, window_bounds = array<i64: 1, 32>}, {transform_indices = @transform_2, window_bounds = array<i64: 2, 8, 32>}, {transform_indices = @transform_3, window_bounds = array<i64: 2, 8, 1>}, {pipeline_mode = #tpu.pipeline_mode<synchronous>, transform_indices = @transform_4, window_bounds = array<i64: 32, 32>}, {pipeline_mode = #tpu.pipeline_mode<synchronous>, transform_indices = @transform_5, window_bounds = array<i64: 32, 32>}, {pipeline_mode = #tpu.pipeline_mode<synchronous>, transform_indices = @transform_6, window_bounds = array<i64: 1, 32>}, {pipeline_mode = #tpu.pipeline_mode<synchronous>, transform_indices = @transform_7, window_bounds = array<i64: 32, 32>}, {pipeline_mode = #tpu.pipeline_mode<synchronous>, transform_indices = @transform_8, window_bounds = array<i64: 1, 32>}, {transform_indices = @transform_9, window_bounds = array<i64: 2, 8, 32>}]} {
    %c0 = arith.constant 0 : index
    %c0_0 = arith.constant 0 : index
    %c0_1 = arith.constant 0 : index
    %0 = vector.load %arg3[%c0, %c0_0, %c0_1] : memref<2x8x32xbf16, #tpu.memory_space<vmem>>, vector<2x8x32xbf16>
    %c0_2 = arith.constant 0 : index
    %c0_3 = arith.constant 0 : index
    %c0_4 = arith.constant 0 : index
    %1 = vector.load %arg4[%c0_2, %c0_3, %c0_4] : memref<2x8x1xbf16, #tpu.memory_space<vmem>>, vector<2x8x1xbf16>
    %2 = vector.broadcast %1 : vector<2x8x1xbf16> to vector<2x8x32xbf16>
    %3 = arith.mulf %0, %2 : vector<2x8x32xbf16>
    %4 = vector.shape_cast %3 : vector<2x8x32xbf16> to vector<16x32xbf16>
    %c0_5 = arith.constant 0 : index
    %c0_6 = arith.constant 0 : index
    %5 = vector.load %arg1[%c0_5, %c0_6] : memref<32x32xbf16, #tpu.memory_space<vmem>>, vector<32x32xbf16>
    %cst = arith.constant dense<0.000000e+00> : vector<16x32xf32>
    %6 = tpu.matmul %4, %5, %cst {dimension_numbers = #tpu.dot_dimension_numbers<[1], [0], [0], [1], [0, 0, 1, 1], [], []>} : vector<16x32xbf16>, vector<32x32xbf16>, vector<16x32xf32> -> vector<16x32xf32>
    %c0_7 = arith.constant 0 : index
    %c0_8 = arith.constant 0 : index
    %7 = vector.load %arg2[%c0_7, %c0_8] : memref<1x32xf32, #tpu.memory_space<vmem>>, vector<1x32xf32>
    %8 = vector.broadcast %7 : vector<1x32xf32> to vector<16x32xf32>
    %9 = arith.addf %6, %8 : vector<16x32xf32>
    %c0_9 = arith.constant 0 : index
    %c0_10 = arith.constant 0 : index
    %c0_11 = arith.constant 0 : index
    %10 = vector.load %arg4[%c0_9, %c0_10, %c0_11] : memref<2x8x1xbf16, #tpu.memory_space<vmem>>, vector<2x8x1xbf16>
    %11 = vector.shape_cast %10 : vector<2x8x1xbf16> to vector<16x1xbf16>
    %cst_12 = arith.constant 0.000000e+00 : bf16
    %12 = vector.broadcast %cst_12 : bf16 to vector<16x1xbf16>
    %13 = arith.cmpf oeq, %11, %12 : vector<16x1xbf16>
    %cst_13 = arith.constant -1.000000e+09 : f32
    %14 = vector.shape_cast %13 : vector<16x1xi1> to vector<16x1xi1>
    %15 = vector.broadcast %14 : vector<16x1xi1> to vector<16x32xi1>
    %16 = vector.broadcast %cst_13 : f32 to vector<16x32xf32>
    %17 = arith.select %15, %16, %9 : vector<16x32xi1>, vector<16x32xf32>
    %cst_14 = arith.constant dense<0xFF800000> : vector<16xf32>
    %18 = vector.multi_reduction <maximumf>, %17, %cst_14 [1] : vector<16x32xf32> to vector<16xf32>
    %19 = vector.shape_cast %18 : vector<16xf32> to vector<16x1xf32>
    %20 = vector.broadcast %19 : vector<16x1xf32> to vector<16x32xf32>
    %21 = arith.subf %17, %20 : vector<16x32xf32>
    %22 = math.exp %21 : vector<16x32xf32>
    %c0_15 = arith.constant 0 : index
    %c0_16 = arith.constant 0 : index
    %23 = vector.load %arg5[%c0_15, %c0_16] : memref<32x32xf32, #tpu.memory_space<vmem>>, vector<32x32xf32>
    %cst_17 = arith.constant dense<0.000000e+00> : vector<16x32xf32>
    %24 = tpu.matmul %22, %23, %cst_17 {dimension_numbers = #tpu.dot_dimension_numbers<[1], [0], [0], [1], [0, 0, 1, 1], [], []>} : vector<16x32xf32>, vector<32x32xf32>, vector<16x32xf32> -> vector<16x32xf32>
    %25 = tpu.reciprocal %24 {approx = true} : vector<16x32xf32> -> vector<16x32xf32>
    %26 = arith.mulf %22, %25 : vector<16x32xf32>
    %c0_18 = arith.constant 0 : index
    %c0_19 = arith.constant 0 : index
    %27 = vector.load %arg6[%c0_18, %c0_19] : memref<32x32xbf16, #tpu.memory_space<vmem>>, vector<32x32xbf16>
    %cst_20 = arith.constant dense<0.000000e+00> : vector<16x32xf32>
    %28 = tpu.matmul %4, %27, %cst_20 {dimension_numbers = #tpu.dot_dimension_numbers<[1], [0], [0], [1], [0, 0, 1, 1], [], []>} : vector<16x32xbf16>, vector<32x32xbf16>, vector<16x32xf32> -> vector<16x32xf32>
    %c0_21 = arith.constant 0 : index
    %c0_22 = arith.constant 0 : index
    %29 = vector.load %arg7[%c0_21, %c0_22] : memref<1x32xf32, #tpu.memory_space<vmem>>, vector<1x32xf32>
    %30 = vector.broadcast %29 : vector<1x32xf32> to vector<16x32xf32>
    %31 = arith.addf %28, %30 : vector<16x32xf32>
    %32 = arith.truncf %31 : vector<16x32xf32> to vector<16x32xbf16>
    %33 = vector.shape_cast %32 : vector<16x32xbf16> to vector<2x8x32xbf16>
    %34 = vector.shape_cast %26 : vector<16x32xf32> to vector<2x8x32xf32>
    %35 = tpu.transpose %34, [0, 2, 1] : vector<2x8x32xf32> -> vector<2x32x8xf32>
    %36 = arith.truncf %35 : vector<2x32x8xf32> to vector<2x32x8xbf16>
    %37 = vector.extract_strided_slice %36 {offsets = [0, 0, 0], sizes = [2, 8, 8], strides = [1, 1, 1]} : vector<2x32x8xbf16> to vector<2x8x8xbf16>
    %38 = vector.extract_strided_slice %33 {offsets = [0, 0, 0], sizes = [2, 8, 8], strides = [1, 1, 1]} : vector<2x8x32xbf16> to vector<2x8x8xbf16>
    "tpu.trace_start"() <{level = 10 : i32, message = "bqs,bsd->bqd"}> : () -> ()
    %cst_23 = arith.constant dense<0.000000e+00> : vector<2x8x8xf32>
    %39 = tpu.matmul %37, %38, %cst_23 {dimension_numbers = #tpu.dot_dimension_numbers<[2], [1], [1], [2], [0, 0, 0, 1, 1, 2], [0], [0]>} : vector<2x8x8xbf16>, vector<2x8x8xbf16>, vector<2x8x8xf32> -> vector<2x8x8xf32>
    "tpu.trace_stop"() : () -> ()
    %40 = vector.shape_cast %39 : vector<2x8x8xf32> to vector<16x8xf32>
    %c0_24 = arith.constant 0 : index
    %c0_25 = arith.constant 0 : index
    %41 = vector.load %arg11[%c0_24, %c0_25] : memref<16x32xf32, #tpu.memory_space<vmem>>, vector<16x8xf32>
    tpu.vector_store %arg11[%c0_24, %c0_25], %40 {strides = array<i32>} : memref<16x32xf32, #tpu.memory_space<vmem>>, vector<16x8xf32>,
    %42 = vector.extract_strided_slice %36 {offsets = [0, 8, 0], sizes = [2, 8, 8], strides = [1, 1, 1]} : vector<2x32x8xbf16> to vector<2x8x8xbf16>
    %43 = vector.extract_strided_slice %33 {offsets = [0, 0, 8], sizes = [2, 8, 8], strides = [1, 1, 1]} : vector<2x8x32xbf16> to vector<2x8x8xbf16>
    "tpu.trace_start"() <{level = 10 : i32, message = "bqs,bsd->bqd"}> : () -> ()
    %cst_26 = arith.constant dense<0.000000e+00> : vector<2x8x8xf32>
    %44 = tpu.matmul %42, %43, %cst_26 {dimension_numbers = #tpu.dot_dimension_numbers<[2], [1], [1], [2], [0, 0, 0, 1, 1, 2], [0], [0]>} : vector<2x8x8xbf16>, vector<2x8x8xbf16>, vector<2x8x8xf32> -> vector<2x8x8xf32>
    "tpu.trace_stop"() : () -> ()
    %45 = vector.shape_cast %44 : vector<2x8x8xf32> to vector<16x8xf32>
    %c0_27 = arith.constant 0 : index
    %c8 = arith.constant 8 : index
    %46 = vector.load %arg11[%c0_27, %c8] : memref<16x32xf32, #tpu.memory_space<vmem>>, vector<16x8xf32>
    tpu.vector_store %arg11[%c0_27, %c8], %45 {strides = array<i32>} : memref<16x32xf32, #tpu.memory_space<vmem>>, vector<16x8xf32>,
    %47 = vector.extract_strided_slice %36 {offsets = [0, 16, 0], sizes = [2, 8, 8], strides = [1, 1, 1]} : vector<2x32x8xbf16> to vector<2x8x8xbf16>
    %48 = vector.extract_strided_slice %33 {offsets = [0, 0, 16], sizes = [2, 8, 8], strides = [1, 1, 1]} : vector<2x8x32xbf16> to vector<2x8x8xbf16>
    "tpu.trace_start"() <{level = 10 : i32, message = "bqs,bsd->bqd"}> : () -> ()
    %cst_28 = arith.constant dense<0.000000e+00> : vector<2x8x8xf32>
    %49 = tpu.matmul %47, %48, %cst_28 {dimension_numbers = #tpu.dot_dimension_numbers<[2], [1], [1], [2], [0, 0, 0, 1, 1, 2], [0], [0]>} : vector<2x8x8xbf16>, vector<2x8x8xbf16>, vector<2x8x8xf32> -> vector<2x8x8xf32>
    "tpu.trace_stop"() : () -> ()
    %50 = vector.shape_cast %49 : vector<2x8x8xf32> to vector<16x8xf32>
    %c0_29 = arith.constant 0 : index
    %c16 = arith.constant 16 : index
    %51 = vector.load %arg11[%c0_29, %c16] : memref<16x32xf32, #tpu.memory_space<vmem>>, vector<16x8xf32>
    tpu.vector_store %arg11[%c0_29, %c16], %50 {strides = array<i32>} : memref<16x32xf32, #tpu.memory_space<vmem>>, vector<16x8xf32>,
    %52 = vector.extract_strided_slice %36 {offsets = [0, 24, 0], sizes = [2, 8, 8], strides = [1, 1, 1]} : vector<2x32x8xbf16> to vector<2x8x8xbf16>
    %53 = vector.extract_strided_slice %33 {offsets = [0, 0, 24], sizes = [2, 8, 8], strides = [1, 1, 1]} : vector<2x8x32xbf16> to vector<2x8x8xbf16>
    "tpu.trace_start"() <{level = 10 : i32, message = "bqs,bsd->bqd"}> : () -> ()
    %cst_30 = arith.constant dense<0.000000e+00> : vector<2x8x8xf32>
    %54 = tpu.matmul %52, %53, %cst_30 {dimension_numbers = #tpu.dot_dimension_numbers<[2], [1], [1], [2], [0, 0, 0, 1, 1, 2], [0], [0]>} : vector<2x8x8xbf16>, vector<2x8x8xbf16>, vector<2x8x8xf32> -> vector<2x8x8xf32>
    "tpu.trace_stop"() : () -> ()
    %55 = vector.shape_cast %54 : vector<2x8x8xf32> to vector<16x8xf32>
    %c0_31 = arith.constant 0 : index
    %c24 = arith.constant 24 : index
    %56 = vector.load %arg11[%c0_31, %c24] : memref<16x32xf32, #tpu.memory_space<vmem>>, vector<16x8xf32>
    tpu.vector_store %arg11[%c0_31, %c24], %55 {strides = array<i32>} : memref<16x32xf32, #tpu.memory_space<vmem>>, vector<16x8xf32>,
    %c0_32 = arith.constant 0 : index
    %c0_33 = arith.constant 0 : index
    %57 = vector.load %arg11[%c0_32, %c0_33] : memref<16x32xf32, #tpu.memory_space<vmem>>, vector<16x32xf32>
    %58 = arith.truncf %57 : vector<16x32xf32> to vector<16x32xbf16>
    %c0_34 = arith.constant 0 : index
    %c0_35 = arith.constant 0 : index
    %59 = vector.load %arg8[%c0_34, %c0_35] : memref<32x32xbf16, #tpu.memory_space<vmem>>, vector<32x32xbf16>
    %cst_36 = arith.constant dense<0.000000e+00> : vector<16x32xf32>
    %60 = tpu.matmul %58, %59, %cst_36 {dimension_numbers = #tpu.dot_dimension_numbers<[1], [0], [0], [1], [0, 0, 1, 1], [], []>} : vector<16x32xbf16>, vector<32x32xbf16>, vector<16x32xf32> -> vector<16x32xf32>
    %c0_37 = arith.constant 0 : index
    %c0_38 = arith.constant 0 : index
    %61 = vector.load %arg9[%c0_37, %c0_38] : memref<1x32xf32, #tpu.memory_space<vmem>>, vector<1x32xf32>
    %62 = vector.broadcast %61 : vector<1x32xf32> to vector<16x32xf32>
    %63 = arith.addf %60, %62 : vector<16x32xf32>
    %64 = vector.shape_cast %63 : vector<16x32xf32> to vector<2x8x32xf32>
    %c0_39 = arith.constant 0 : index
    %c0_40 = arith.constant 0 : index
    %c0_41 = arith.constant 0 : index
    %65 = vector.load %arg10[%c0_39, %c0_40, %c0_41] : memref<2x8x32xf32, #tpu.memory_space<vmem>>, vector<2x8x32xf32>
    tpu.vector_store %arg10[%c0_39, %c0_40, %c0_41], %64 {strides = array<i32>} : memref<2x8x32xf32, #tpu.memory_space<vmem>>, vector<2x8x32xf32>,
    return
  }
  func.func @transform_0(%arg0: i32) -> (i32, i32) {
    %c0_i32 = arith.constant 0 : i32
    %c0_i32_0 = arith.constant 0 : i32
    %c0_i32_1 = arith.constant 0 : i32
    return %c0_i32, %c0_i32_0 : i32, i32
  }
  func.func @transform_1(%arg0: i32) -> (i32, i32) {
    %c0_i32 = arith.constant 0 : i32
    %c0_i32_0 = arith.constant 0 : i32
    %c0_i32_1 = arith.constant 0 : i32
    return %c0_i32, %c0_i32_0 : i32, i32
  }
  func.func @transform_2(%arg0: i32) -> (i32, i32, i32) {
    %c0_i32 = arith.constant 0 : i32
    %c0_i32_0 = arith.constant 0 : i32
    %c0_i32_1 = arith.constant 0 : i32
    return %arg0, %c0_i32, %c0_i32_0 : i32, i32, i32
  }
  func.func @transform_3(%arg0: i32) -> (i32, i32, i32) {
    %c0_i32 = arith.constant 0 : i32
    %c0_i32_0 = arith.constant 0 : i32
    %c0_i32_1 = arith.constant 0 : i32
    return %arg0, %c0_i32, %c0_i32_0 : i32, i32, i32
  }
  func.func @transform_4(%arg0: i32) -> (i32, i32) {
    %c0_i32 = arith.constant 0 : i32
    %c0_i32_0 = arith.constant 0 : i32
    %c0_i32_1 = arith.constant 0 : i32
    return %c0_i32, %c0_i32_0 : i32, i32
  }
  func.func @transform_5(%arg0: i32) -> (i32, i32) {
    %c0_i32 = arith.constant 0 : i32
    %c0_i32_0 = arith.constant 0 : i32
    %c0_i32_1 = arith.constant 0 : i32
    return %c0_i32, %c0_i32_0 : i32, i32
  }
  func.func @transform_6(%arg0: i32) -> (i32, i32) {
    %c0_i32 = arith.constant 0 : i32
    %c0_i32_0 = arith.constant 0 : i32
    %c0_i32_1 = arith.constant 0 : i32
    return %c0_i32, %c0_i32_0 : i32, i32
  }
  func.func @transform_7(%arg0: i32) -> (i32, i32) {
    %c0_i32 = arith.constant 0 : i32
    %c0_i32_0 = arith.constant 0 : i32
    %c0_i32_1 = arith.constant 0 : i32
    return %c0_i32, %c0_i32_0 : i32, i32
  }
  func.func @transform_8(%arg0: i32) -> (i32, i32) {
    %c0_i32 = arith.constant 0 : i32
    %c0_i32_0 = arith.constant 0 : i32
    %c0_i32_1 = arith.constant 0 : i32
    return %c0_i32, %c0_i32_0 : i32, i32
  }
  func.func @transform_9(%arg0: i32) -> (i32, i32, i32) {
    %c0_i32 = arith.constant 0 : i32
    %c0_i32_0 = arith.constant 0 : i32
    %c0_i32_1 = arith.constant 0 : i32
    return %arg0, %c0_i32, %c0_i32_0 : i32, i32, i32
  }
}

</mosaic_0001>

<llo_original>
// kernel: tpu_custom_call.1
$region0: #{tpu_custom_call.1}
  #allocation0 [shape = 'u32[]', space=smem, size = 0x4, offset = 0x4, fixed_abs, tag = 'smem constant byte address 0x4 - core index']
  #allocation1 [shape = 'u32[144,128]{1,0:T(1,128)}', space=vmem, size = 0x12000, scoped, tag = 'internal scratch']
  #allocation2 [shape = 'f32[16,32]{1,0:T(8,128)}', space=vmem, size = 0x2000, scoped, tag = 'scratch operand']
  %s0 = inlined_call_operand.vmem [shape: bf16[32,32], index: 0, kind: input, shape index: {}]
  %s1 = inlined_call_operand.vmem [shape: f32[1,32], index: 1, kind: input, shape index: {}]
  %s2 = inlined_call_operand.hbm [shape: bf16[4,8,32], index: 2, kind: input, shape index: {}]
  %s3 = inlined_call_operand.vmem [shape: bf16[4,8,1], index: 3, kind: input, shape index: {}]
  %s4 = inlined_call_operand.hbm [shape: f32[32,32], index: 4, kind: input, shape index: {}]
  %s5 = inlined_call_operand.hbm [shape: bf16[32,32], index: 5, kind: input, shape index: {}]
  %s6 = inlined_call_operand.vmem [shape: f32[1,32], index: 6, kind: input, shape index: {}]
  %s7 = inlined_call_operand.hbm [shape: bf16[32,32], index: 7, kind: input, shape index: {}]
  %s8 = inlined_call_operand.vmem [shape: f32[1,32], index: 8, kind: input, shape index: {}]
  %s9 = inlined_call_operand.hbm [shape: f32[4,8,32], index: 9, kind: output, shape index: {}]
  %s10 = sld [smem:[#allocation0]]
  $region85: #{tpu_custom_call.1} parent=0
    _
  %s12 = ssub.s32 1, %s10
  %s13 = scalar_select 0, %s12, %s10
  $region1: #{tpu_custom_call.1} parent=0
    #allocation3 [shape = 'u8[8192]{0}', space=vmem, size = 0x2000, scoped, tag = 'input window, operand 2']
    #allocation4 [shape = 's32[2]{0}', space=sflag, size = 0x8, scoped, tag = 'scoped memory for tpu_custom_call.1']
    #allocation5 [shape = 's32[2]{0}', space=sflag, size = 0x8, scoped, tag = 'scoped memory for tpu_custom_call.1']
    #allocation6 [shape = 'u8[16384]{0}', space=vmem, size = 0x4000, scoped, tag = 'input window, operand 4, single buffered']
    #allocation7 [shape = 's32[1]{0}', space=sflag, size = 0x4, scoped, tag = 'scoped memory for tpu_custom_call.1']
    #allocation8 [shape = 'u8[8192]{0}', space=vmem, size = 0x2000, scoped, tag = 'input window, operand 5, single buffered']
    #allocation9 [shape = 'u8[8192]{0}', space=vmem, size = 0x2000, scoped, tag = 'input window, operand 7, single buffered']
    #allocation10 [shape = 's32[1]{0}', space=sflag, size = 0x4, scoped, tag = 'scoped memory for tpu_custom_call.1']
    #allocation11 [shape = 'u8[16384]{0}', space=vmem, size = 0x4000, scoped, tag = 'output window, operand 0']
    %14 = vsyncpa [#allocation4], 0
    %s15 = scalar_lea.sflag [#allocation4], 1
    %16 = vsyncpa %s15, 0
    %17 = vsyncpa [#allocation7], 0
    %18 = vsyncpa [#allocation10], 0
    %19 = vsyncpa [#allocation5], 0
    %s20 = scalar_lea.sflag [#allocation5], 1
    %21 = vsyncpa %s20, 0
    loop: start=0, step=1, limit=4
    $region2: #{tpu_custom_call.1} parent=1 // loop_pre_header
      _
    $region3: #{tpu_custom_call.1} parent=1 // loop_header
      %s23 = sphi 0, %s27
      %p24 = scmp.ge.s32.totalorder %s23, 4
      %s31 = sphi 0, %s31
      %s33 = sphi 0, %s31
      %s34 = sphi 0, %s33
      %s48 = sphi 0, %s34
      %s52 = sphi 0, %s52
      %s54 = sphi 0, %s52
      %s55 = sphi 0, %s54
      %s69 = sphi 0, %s55
      %s75 = sphi 0, %s77
      %s78 = sphi 0, %s75
      %s79 = sphi 0, %s78
      %s95 = sphi 0, %s79
      %s101 = sphi 0, %s103
      %s104 = sphi 0, %s101
      %s105 = sphi 0, %s104
      %s121 = sphi 0, %s105
      %s125 = sphi 0, %s125
      %s127 = sphi 0, %s125
      %s128 = sphi 0, %s127
      %s142 = sphi 0, %s128
      %s146 = sphi 0, %s146
      %s148 = sphi 0, %s146
      %s149 = sphi 0, %s148
      %s163 = sphi 0, %s149
      %s167 = sphi 0, %s167
      %s169 = sphi 0, %s167
      %s170 = sphi 0, %s169
      %s184 = sphi 0, %s170
      %s188 = sphi 0, %s188
      %s190 = sphi 0, %s188
      %s191 = sphi 0, %s190
      %s205 = sphi 0, %s191
      %s209 = sphi 0, %s209
      %s211 = sphi 0, %s209
      %s212 = sphi 0, %s211
      %s226 = sphi 0, %s212
      %s232 = sphi 0, %s234
      %s235 = sphi 0, %s232
      %s236 = sphi 0, %s235
      %s252 = sphi 0, %s236
    $region4: #{tpu_custom_call.1} parent=1 // loop_header_branch
      %26 = sbr.rel (%p24) target = $region8
    $region5: #{tpu_custom_call.1} parent=1 // loop_body
      %s28 = ssub.s32 %s23, 1
      %s29 = ssub.s32 %s23, 2
      %s30 = sadd.s32 %s23, 1
      %s32 = sadd.s32 %s31, 1
      %p35 = scmp.eq.s32.totalorder %s23, 1
      %p36 = scmp.ne.s32.totalorder %s31, %s33
      %p37 = scmp.eq.s32.totalorder %s23, 0
      %p38 = por %p36, %p37
      %p39 = scmp.ne.s32.totalorder %s31, %s33
      %p40 = scmp.eq.s32.totalorder %s28, 1
      %p41 = por %p39, %p40
      %p42 = scmp.ne.s32.totalorder %s33, %s34
      %p43 = scmp.eq.s32.totalorder %s28, 0
      %p44 = por %p42, %p43
      %p45 = scmp.ne.s32.totalorder %s33, %s34
      %p46 = scmp.eq.s32.totalorder %s29, 1
      %p47 = por %p45, %p46
      %p49 = scmp.ne.s32.totalorder %s34, %s48
      %p50 = scmp.eq.s32.totalorder %s29, 0
      %p51 = por %p49, %p50
      %s53 = sadd.s32 %s52, 1
      %p56 = scmp.eq.s32.totalorder %s23, 1
      %p57 = scmp.ne.s32.totalorder %s52, %s54
      %p58 = scmp.eq.s32.totalorder %s23, 0
      %p59 = por %p57, %p58
      %p60 = scmp.ne.s32.totalorder %s52, %s54
      %p61 = scmp.eq.s32.totalorder %s28, 1
      %p62 = por %p60, %p61
      %p63 = scmp.ne.s32.totalorder %s54, %s55
      %p64 = scmp.eq.s32.totalorder %s28, 0
      %p65 = por %p63, %p64
      %p66 = scmp.ne.s32.totalorder %s54, %s55
      %p67 = scmp.eq.s32.totalorder %s29, 1
      %p68 = por %p66, %p67
      %p70 = scmp.ne.s32.totalorder %s55, %s69
      %p71 = scmp.eq.s32.totalorder %s29, 0
      %p72 = por %p70, %p71
      %s73 = ssub.s32 %s23, %s30
      %p74 = scmp.eq.s32.totalorder %s73, 0
      %s76 = sadd.s32 %s75, 1
      %s77 = scalar_select %p74, %s75, %s76
      %p80 = pneg %p74
      %p81 = scmp.eq.s32.totalorder %s23, 1
      %p82 = por %p80, %p81
      %p83 = scmp.ne.s32.totalorder %s75, %s78
      %p84 = scmp.eq.s32.totalorder %s23, 0
      %p85 = por %p83, %p84
      %p86 = scmp.ne.s32.totalorder %s75, %s78
      %p87 = scmp.eq.s32.totalorder %s28, 1
      %p88 = por %p86, %p87
      %p89 = scmp.ne.s32.totalorder %s78, %s79
      %p90 = scmp.eq.s32.totalorder %s28, 0
      %p91 = por %p89, %p90
      %p92 = scmp.ne.s32.totalorder %s78, %s79
      %p93 = scmp.eq.s32.totalorder %s29, 1
      %p94 = por %p92, %p93
      %p96 = scmp.ne.s32.totalorder %s79, %s95
      %p97 = scmp.eq.s32.totalorder %s29, 0
      %p98 = por %p96, %p97
      %s99 = ssub.s32 %s23, %s30
      %p100 = scmp.eq.s32.totalorder %s99, 0
      %s102 = sadd.s32 %s101, 1
      %s103 = scalar_select %p100, %s101, %s102
      %p106 = pneg %p100
      %p107 = scmp.eq.s32.totalorder %s23, 1
      %p108 = por %p106, %p107
      %p109 = scmp.ne.s32.totalorder %s101, %s104
      %p110 = scmp.eq.s32.totalorder %s23, 0
      %p111 = por %p109, %p110
      %p112 = scmp.ne.s32.totalorder %s101, %s104
      %p113 = scmp.eq.s32.totalorder %s28, 1
      %p114 = por %p112, %p113
      %p115 = scmp.ne.s32.totalorder %s104, %s105
      %p116 = scmp.eq.s32.totalorder %s28, 0
      %p117 = por %p115, %p116
      %p118 = scmp.ne.s32.totalorder %s104, %s105
      %p119 = scmp.eq.s32.totalorder %s29, 1
      %p120 = por %p118, %p119
      %p122 = scmp.ne.s32.totalorder %s105, %s121
      %p123 = scmp.eq.s32.totalorder %s29, 0
      %p124 = por %p122, %p123
      %s126 = sadd.s32 %s125, 1
      %p129 = scmp.eq.s32.totalorder %s23, 1
      %p130 = scmp.ne.s32.totalorder %s125, %s127
      %p131 = scmp.eq.s32.totalorder %s23, 0
      %p132 = por %p130, %p131
      %p133 = scmp.ne.s32.totalorder %s125, %s127
      %p134 = scmp.eq.s32.totalorder %s28, 1
      %p135 = por %p133, %p134
      %p136 = scmp.ne.s32.totalorder %s127, %s128
      %p137 = scmp.eq.s32.totalorder %s28, 0
      %p138 = por %p136, %p137
      %p139 = scmp.ne.s32.totalorder %s127, %s128
      %p140 = scmp.eq.s32.totalorder %s29, 1
      %p141 = por %p139, %p140
      %p143 = scmp.ne.s32.totalorder %s128, %s142
      %p144 = scmp.eq.s32.totalorder %s29, 0
      %p145 = por %p143, %p144
      %s147 = sadd.s32 %s146, 1
      %p150 = scmp.eq.s32.totalorder %s23, 1
      %p151 = scmp.ne.s32.totalorder %s146, %s148
      %p152 = scmp.eq.s32.totalorder %s23, 0
      %p153 = por %p151, %p152
      %p154 = scmp.ne.s32.totalorder %s146, %s148
      %p155 = scmp.eq.s32.totalorder %s28, 1
      %p156 = por %p154, %p155
      %p157 = scmp.ne.s32.totalorder %s148, %s149
      %p158 = scmp.eq.s32.totalorder %s28, 0
      %p159 = por %p157, %p158
      %p160 = scmp.ne.s32.totalorder %s148, %s149
      %p161 = scmp.eq.s32.totalorder %s29, 1
      %p162 = por %p160, %p161
      %p164 = scmp.ne.s32.totalorder %s149, %s163
      %p165 = scmp.eq.s32.totalorder %s29, 0
      %p166 = por %p164, %p165
      %s168 = sadd.s32 %s167, 1
      %p171 = scmp.eq.s32.totalorder %s23, 1
      %p172 = scmp.ne.s32.totalorder %s167, %s169
      %p173 = scmp.eq.s32.totalorder %s23, 0
      %p174 = por %p172, %p173
      %p175 = scmp.ne.s32.totalorder %s167, %s169
      %p176 = scmp.eq.s32.totalorder %s28, 1
      %p177 = por %p175, %p176
      %p178 = scmp.ne.s32.totalorder %s169, %s170
      %p179 = scmp.eq.s32.totalorder %s28, 0
      %p180 = por %p178, %p179
      %p181 = scmp.ne.s32.totalorder %s169, %s170
      %p182 = scmp.eq.s32.totalorder %s29, 1
      %p183 = por %p181, %p182
      %p185 = scmp.ne.s32.totalorder %s170, %s184
      %p186 = scmp.eq.s32.totalorder %s29, 0
      %p187 = por %p185, %p186
      %s189 = sadd.s32 %s188, 1
      %p192 = scmp.eq.s32.totalorder %s23, 1
      %p193 = scmp.ne.s32.totalorder %s188, %s190
      %p194 = scmp.eq.s32.totalorder %s23, 0
      %p195 = por %p193, %p194
      %p196 = scmp.ne.s32.totalorder %s188, %s190
      %p197 = scmp.eq.s32.totalorder %s28, 1
      %p198 = por %p196, %p197
      %p199 = scmp.ne.s32.totalorder %s190, %s191
      %p200 = scmp.eq.s32.totalorder %s28, 0
      %p201 = por %p199, %p200
      %p202 = scmp.ne.s32.totalorder %s190, %s191
      %p203 = scmp.eq.s32.totalorder %s29, 1
      %p204 = por %p202, %p203
      %p206 = scmp.ne.s32.totalorder %s191, %s205
      %p207 = scmp.eq.s32.totalorder %s29, 0
      %p208 = por %p206, %p207
      %s210 = sadd.s32 %s209, 1
      %p213 = scmp.eq.s32.totalorder %s23, 1
      %p214 = scmp.ne.s32.totalorder %s209, %s211
      %p215 = scmp.eq.s32.totalorder %s23, 0
      %p216 = por %p214, %p215
      %p217 = scmp.ne.s32.totalorder %s209, %s211
      %p218 = scmp.eq.s32.totalorder %s28, 1
      %p219 = por %p217, %p218
      %p220 = scmp.ne.s32.totalorder %s211, %s212
      %p221 = scmp.eq.s32.totalorder %s28, 0
      %p222 = por %p220, %p221
      %p223 = scmp.ne.s32.totalorder %s211, %s212
      %p224 = scmp.eq.s32.totalorder %s29, 1
      %p225 = por %p223, %p224
      %p227 = scmp.ne.s32.totalorder %s212, %s226
      %p228 = scmp.eq.s32.totalorder %s29, 0
      %p229 = por %p227, %p228
      %s230 = ssub.s32 %s23, %s30
      %p231 = scmp.eq.s32.totalorder %s230, 0
      %s233 = sadd.s32 %s232, 1
      %s234 = scalar_select %p231, %s232, %s233
      %p237 = pneg %p231
      %p238 = scmp.eq.s32.totalorder %s23, 1
      %p239 = por %p237, %p238
      %p240 = scmp.ne.s32.totalorder %s232, %s235
      %p241 = scmp.eq.s32.totalorder %s23, 0
      %p242 = por %p240, %p241
      %p243 = scmp.ne.s32.totalorder %s232, %s235
      %p244 = scmp.eq.s32.totalorder %s28, 1
      %p245 = por %p243, %p244
      %p246 = scmp.ne.s32.totalorder %s235, %s236
      %p247 = scmp.eq.s32.totalorder %s28, 0
      %p248 = por %p246, %p247
      %p249 = scmp.ne.s32.totalorder %s235, %s236
      %p250 = scmp.eq.s32.totalorder %s29, 1
      %p251 = por %p249, %p250
      %p253 = scmp.ne.s32.totalorder %s236, %s252
      %p254 = scmp.eq.s32.totalorder %s29, 0
      %p255 = por %p253, %p254
      %p256 = scmp.le.s32.totalorder 1, %s23
      %p257 = scmp.lt.s32.totalorder %s23, 3
      %p258 = pnand %p256, %p257
      %p259 = pneg %p258
      // Predicated region
      $region9: #{tpu_custom_call.1} parent=5 // pred_check
        _
      $region10: #{tpu_custom_call.1} parent=5 // pred_check_branch
        %261 = sbr.rel (%p258) target = $region12
      $region11: #{tpu_custom_call.1} parent=5 // pred_region
        %s262 = ssub.s32 %s23, 1
        // Predicated region
        $region13: #{tpu_custom_call.1} parent=11 // pred_check
          %p263 = pneg %p44
        $region14: #{tpu_custom_call.1} parent=11 // pred_check_branch
          %265 = sbr.rel (%p263) target = $region16
        $region15: #{tpu_custom_call.1} parent=11 // pred_region
          _
        $region16: #{tpu_custom_call.1} parent=11 // pred_fallthru
          _
        // Predicated region
        $region17: #{tpu_custom_call.1} parent=11 // pred_check
          %p266 = pneg %p65
        $region18: #{tpu_custom_call.1} parent=11 // pred_check_branch
          %268 = sbr.rel (%p266) target = $region20
        $region19: #{tpu_custom_call.1} parent=11 // pred_region
          _
        $region20: #{tpu_custom_call.1} parent=11 // pred_fallthru
          _
        // Predicated region
        $region21: #{tpu_custom_call.1} parent=11 // pred_check
          %p269 = pneg %p138
        $region22: #{tpu_custom_call.1} parent=11 // pred_check_branch
          %271 = sbr.rel (%p269) target = $region24
        $region23: #{tpu_custom_call.1} parent=11 // pred_region
          %s273 = ssub.s32 512, 512
          %274 = vsyncadd [#allocation7], %s273
          %s275 = sshll.u32 [#allocation6], 4
          %s276 = int_to_ptr.vmem [resolvable:$true] %s275
          %281 = dma.hbm_to_vmem [thread:$0]  %s4, 512, %s276, [#allocation7], 128, 128, 8
        $region24: #{tpu_custom_call.1} parent=11 // pred_fallthru
          _
        // Predicated region
        $region25: #{tpu_custom_call.1} parent=11 // pred_check
          %p282 = pneg %p159
        $region26: #{tpu_custom_call.1} parent=11 // pred_check_branch
          %284 = sbr.rel (%p282) target = $region28
        $region27: #{tpu_custom_call.1} parent=11 // pred_region
          %s286 = ssub.s32 256, 256
          %287 = vsyncadd [#allocation7], %s286
          %s288 = sshll.u32 [#allocation8], 4
          %s289 = int_to_ptr.vmem [resolvable:$true] %s288
          %294 = dma.hbm_to_vmem [thread:$0]  %s5, 256, %s289, [#allocation7], 64, 64, 4
        $region28: #{tpu_custom_call.1} parent=11 // pred_fallthru
          _
        // Predicated region
        $region29: #{tpu_custom_call.1} parent=11 // pred_check
          %p295 = pneg %p180
        $region30: #{tpu_custom_call.1} parent=11 // pred_check_branch
          %297 = sbr.rel (%p295) target = $region32
        $region31: #{tpu_custom_call.1} parent=11 // pred_region
          _
        $region32: #{tpu_custom_call.1} parent=11 // pred_fallthru
          _
        // Predicated region
        $region33: #{tpu_custom_call.1} parent=11 // pred_check
          %p298 = pneg %p201
        $region34: #{tpu_custom_call.1} parent=11 // pred_check_branch
          %300 = sbr.rel (%p298) target = $region36
        $region35: #{tpu_custom_call.1} parent=11 // pred_region
          %s302 = ssub.s32 256, 256
          %303 = vsyncadd [#allocation10], %s302
          %s304 = sshll.u32 [#allocation9], 4
          %s305 = int_to_ptr.vmem [resolvable:$true] %s304
          %310 = dma.hbm_to_vmem [thread:$0]  %s7, 256, %s305, [#allocation10], 64, 64, 4
        $region36: #{tpu_custom_call.1} parent=11 // pred_fallthru
          _
        // Predicated region
        $region37: #{tpu_custom_call.1} parent=11 // pred_check
          %p311 = pneg %p222
        $region38: #{tpu_custom_call.1} parent=11 // pred_check_branch
          %313 = sbr.rel (%p311) target = $region40
        $region39: #{tpu_custom_call.1} parent=11 // pred_region
          _
        $region40: #{tpu_custom_call.1} parent=11 // pred_fallthru
          _
      $region12: #{tpu_custom_call.1} parent=5 // pred_fallthru
        _
      %p314 = scmp.lt.s32.totalorder %s23, 2
      // Predicated region
      $region41: #{tpu_custom_call.1} parent=5 // pred_check
        %p315 = pneg %p314
      $region42: #{tpu_custom_call.1} parent=5 // pred_check_branch
        %317 = sbr.rel (%p315) target = $region44
      $region43: #{tpu_custom_call.1} parent=5 // pred_region
        // Predicated region
        $region45: #{tpu_custom_call.1} parent=43 // pred_check
          %p318 = pneg %p85
        $region46: #{tpu_custom_call.1} parent=43 // pred_check_branch
          %320 = sbr.rel (%p318) target = $region48
        $region47: #{tpu_custom_call.1} parent=43 // pred_region
          %s321 = sand.u32 %s75, 1
          %s322 = scalar_lea.sflag [#allocation4], %s321
          %s323 = sand.u32 %s75, 1
          %s324 = smul.addr %s323, 8
          %s325 = scalar_lea.vmem [#allocation3], %s324
          %s326 = smul.u32 2, %s23
          %s328 = ssub.s32 128, 128
          %329 = vsyncadd %s322, %s328
          %s330 = smul.addr %s326, 64
          %s331 = scalar_lea.hbm %s2, %s330
          %s332 = sshll.u32 %s325, 4
          %s333 = int_to_ptr.vmem [resolvable:$true] %s332
          %338 = dma.hbm_to_vmem [thread:$0]  %s331, 128, %s333, %s322, 64, 64, 4
        $region48: #{tpu_custom_call.1} parent=43 // pred_fallthru
          _
        // Predicated region
        $region49: #{tpu_custom_call.1} parent=43 // pred_check
          %p339 = pneg %p111
        $region50: #{tpu_custom_call.1} parent=43 // pred_check_branch
          %341 = sbr.rel (%p339) target = $region52
        $region51: #{tpu_custom_call.1} parent=43 // pred_region
          %s342 = smul.u32 2, %s23
          %p343 = scmp.lt.s32.totalorder %s342, 3
          %s344 = scalar_select %p343, %s342, 3
          %s345 = smul.addr %s344, 4
          %s346 = scalar_lea.vmem %s3, %s345
          %s347 = smul.u32 2, %s23
        $region52: #{tpu_custom_call.1} parent=43 // pred_fallthru
          _
      $region44: #{tpu_custom_call.1} parent=5 // pred_fallthru
        _
      %p348 = scmp.le.s32.totalorder 1, %s23
      %p349 = scmp.lt.s32.totalorder %s23, 3
      %p350 = pnand %p348, %p349
      %p351 = pneg %p350
      // Predicated region
      $region53: #{tpu_custom_call.1} parent=5 // pred_check
        _
      $region54: #{tpu_custom_call.1} parent=5 // pred_check_branch
        %353 = sbr.rel (%p350) target = $region56
      $region55: #{tpu_custom_call.1} parent=5 // pred_region
        %s354 = ssub.s32 %s23, 1
        %s355 = sand.u32 %s78, 1
        %s356 = scalar_lea.sflag [#allocation4], %s355
        %s357 = sand.u32 %s78, 1
        %s358 = smul.addr %s357, 8
        %s359 = scalar_lea.vmem [#allocation3], %s358
        // Predicated region
        $region57: #{tpu_custom_call.1} parent=55 // pred_check
          %p360 = pneg %p91
        $region58: #{tpu_custom_call.1} parent=55 // pred_check_branch
          %362 = sbr.rel (%p360) target = $region60
        $region59: #{tpu_custom_call.1} parent=55 // pred_region
          %363 = dma.done %s356, 128
        $region60: #{tpu_custom_call.1} parent=55 // pred_fallthru
          _
        // Predicated region
        $region61: #{tpu_custom_call.1} parent=55 // pred_check
          %p364 = pneg %p138
        $region62: #{tpu_custom_call.1} parent=55 // pred_check_branch
          %366 = sbr.rel (%p364) target = $region64
        $region63: #{tpu_custom_call.1} parent=55 // pred_region
          %367 = dma.done [#allocation7], 512
        $region64: #{tpu_custom_call.1} parent=55 // pred_fallthru
          _
        // Predicated region
        $region65: #{tpu_custom_call.1} parent=55 // pred_check
          %p368 = pneg %p159
        $region66: #{tpu_custom_call.1} parent=55 // pred_check_branch
          %370 = sbr.rel (%p368) target = $region68
        $region67: #{tpu_custom_call.1} parent=55 // pred_region
          %371 = dma.done [#allocation7], 256
        $region68: #{tpu_custom_call.1} parent=55 // pred_fallthru
          _
        // Predicated region
        $region69: #{tpu_custom_call.1} parent=55 // pred_check
          %p372 = pneg %p201
        $region70: #{tpu_custom_call.1} parent=55 // pred_check_branch
          %374 = sbr.rel (%p372) target = $region72
        $region71: #{tpu_custom_call.1} parent=55 // pred_region
          %375 = dma.done [#allocation10], 256
        $region72: #{tpu_custom_call.1} parent=55 // pred_fallthru
          _
        %p376 = pneg %p44
        %p377 = pneg %p41
        %p378 = pneg %p65
        %p379 = pneg %p62
        %s380 = sand.u32 %s78, 1
        %s381 = scalar_lea.sflag [#allocation4], %s380
        %s382 = sand.u32 %s78, 1
        %s383 = smul.addr %s382, 8
        %s384 = scalar_lea.vmem [#allocation3], %s383
        %p385 = pneg %p91
        %p386 = pneg %p88
        %s387 = smul.u32 2, %s28
        %p388 = scmp.lt.s32.totalorder %s387, 3
        %s389 = scalar_select %p388, %s387, 3
        %s390 = smul.addr %s389, 4
        %s391 = scalar_lea.vmem %s3, %s390
        %p392 = pneg %p117
        %p393 = pneg %p114
        %p394 = pneg %p138
        %p395 = pneg %p135
        %p396 = pneg %p159
        %p397 = pneg %p156
        %p398 = pneg %p180
        %p399 = pneg %p177
        %p400 = pneg %p201
        %p401 = pneg %p198
        %p402 = pneg %p222
        %p403 = pneg %p219
        %p404 = pneg %p248
        %p405 = pneg %p245
        %s406 = sand.u32 %s235, 1
        %s407 = scalar_lea.sflag [#allocation5], %s406
        %s408 = sand.u32 %s235, 1
        %s409 = smul.addr %s408, 16
        %s410 = scalar_lea.vmem [#allocation11], %s409
        %s411 = smul.u32 2, %s28
        %s412 = smul.u32 2, %s28
        %p413 = scmp.lt.s32.totalorder %s412, 3
        %s414 = scalar_select %p413, %s412, 3
        %s415 = smul.addr %s414, 4
        %s416 = scalar_lea.vmem %s3, %s415
        %s417 = smul.u32 2, %s28
        %s418 = smul.u32 2, %s28
        %v422 = vld [vmem:[%s359] sm:$0xf]
        %v423 = vld [vmem:[%s359 + $0x4] sm:$0xf]
        %v424 = vld [vmem:[%s416] sm:$0xf]
        %v425 = vld [vmem:[%s416 + $0x4] sm:$0xf]
        %427 = vset.pattern.permute.xlu0 0
        %428 = vperm.xlu0 %427, %v424
        %v429 = vpop.permute.xlu0 %428
        %v432 = vunpack.c.l.s4 839922192
        %v433 = vunpack.c.0.s8 %v432
        %v434 = vlaneseq
        %v435 = vshrl.u32 %v434, 7
        %v436 = vsub.s32 %v433, %v435
        %v437 = vrot.slane %v429, %v436
        %439 = vset.pattern.permute.xlu0 0
        %440 = vperm.xlu0 %439, %v425
        %v441 = vpop.permute.xlu0 %440
        %v444 = vunpack.c.l.s4 839922192
        %v445 = vunpack.c.0.s8 %v444
        %v446 = vlaneseq
        %v447 = vshrl.u32 %v446, 7
        %v448 = vsub.s32 %v445, %v447
        %v449 = vrot.slane %v441, %v448
        %v450 = vmul.bf16 %v422, %v437
        %v451 = vmul.bf16 %v423, %v449
        %v452 = vld [vmem:[%s0] sm:$0xf]
        %v453 = vld [vmem:[%s0 + $0x4] sm:$0xf]
        %v454 = vld [vmem:[%s0 + $0x8] sm:$0xf]
        %v455 = vld [vmem:[%s0 + $0xc] sm:$0xf]
        %v456 = vld [vmem:[%s1] sm:$0x1]
        %v458 = vlaneseq
        %v459 = vshrl.u32 %v458, 7
        %v460 = vsub.s32 0, %v459
        %v461 = vrot.slane %v456, %v460
        %v465 = vunpack.c.l.b16 %v450
        %v466 = vunpack.c.l.b16 %v451
        %v467 = vpack.c.b16 %v466, %v465
        %v472 = vunpack.c.l.b16 %v452
        %v473 = vunpack.c.l.b16 %v453
        %v474 = vunpack.c.l.b16 %v454
        %v475 = vunpack.c.l.b16 %v455
        %v476 = vpack.c.b16 %v473, %v472
        %v477 = vpack.c.b16 %v475, %v474
        %vm480 = vcmask 261120
        %v482 = vsel %vm480, %v467, 0
        %484 = vmatprep.subr.bf16.mxu0 0
        %485 = vmatpush1.bf16.msra.mxu0 0
        %486 = vmatprep.subr.bf16.mxu0 0
        %487 = vmatpush1.bf16.msra.mxu0 0
        %488 = vmatprep.subr.bf16.mxu0 0
        %489 = vmatpush1.bf16.msra.mxu0 0
        %490 = vmatprep.subr.bf16.mxu0 0
        %491 = vmatpush1.bf16.msra.mxu0 0
        %492 = vmatprep.subr.bf16.mxu0 0
        %493 = vmatpush1.bf16.msra.mxu0 0
        %494 = vmatprep.subr.bf16.mxu0 0
        %495 = vmatpush1.bf16.msra.mxu0 0
        %496 = vmatprep.subr.bf16.mxu0 0
        %497 = vmatpush1.bf16.msra.mxu0 %v477
        %498 = vmatprep.subr.bf16.mxu0 0
        %499 = vmatpush1.bf16.msra.mxu0 %v476
        %500 = vmatprep.subr.bf16.mxu0 0
        %501 = vmatpush2.bf16.msra.mxu0 0
        %502 = vmatprep.subr.bf16.mxu0 0
        %503 = vmatpush2.bf16.msra.mxu0 0
        %504 = vmatprep.subr.bf16.mxu0 0
        %505 = vmatpush2.bf16.msra.mxu0 0
        %506 = vmatprep.subr.bf16.mxu0 0
        %507 = vmatpush2.bf16.msra.mxu0 0
        %508 = vmatprep.subr.bf16.mxu0 0
        %509 = vmatpush2.bf16.msra.mxu0 0
        %510 = vmatprep.subr.bf16.mxu0 0
        %511 = vmatpush2.bf16.msra.mxu0 0
        %512 = vmatprep.subr.bf16.mxu0 0
        %513 = vmatpush2.bf16.msra.mxu0 0
        %514 = vmatprep.subr.bf16.mxu0 0
        %515 = vmatpush2.bf16.msra.mxu0 0
        %516 = vmatprep.mubr.bf16.mxu0 0
        %517 = vmatmul.mubr.bf16.gmra.mxu0 %v482
        %v518 = vpop.f32.mrf.mxu0
        %v519 = vadd.f32 %v461, %v518
        %v520 = vpop.f32.mrf.mxu0
        %v521 = vpop.f32.mrf.mxu0
        %v522 = vadd.f32 %v461, %v521
        %v523 = vpop.f32.mrf.mxu0
        %524 = vdwg.mxu0
        %vm525 = vcmp.eq.bf16.partialorder %v424, 0
        %vm526 = vcmp.eq.bf16.partialorder %v425, 0
        %v527 = vsel %vm525, 65537, 0
        %v528 = vsel %vm526, 65537, 0
        %v529 = vunpack.c.l.b16 %v527
        %v530 = vunpack.c.l.b16 %v528
        %vm531 = vcmp.ne.s32.totalorder %v529, 0
        %vm532 = vcmp.ne.s32.totalorder %v530, 0
        %v533 = vsel %vm531, 1, 0
        %v534 = vsel %vm532, 1, 0
        %535 = vset.pattern.permute.xlu0 0
        %536 = vperm.xlu0 %535, %v533
        %v537 = vpop.permute.xlu0 %536
        %538 = vset.pattern.permute.xlu0 0
        %539 = vperm.xlu0 %538, %v534
        %v540 = vpop.permute.xlu0 %539
        %vm541 = vcmp.eq.s32.totalorder %v537, 1
        %vm542 = vcmp.eq.s32.totalorder %v540, 1
        %v543 = vsel %vm541, -1e+09, %v519
        %v544 = vsel %vm542, -1e+09, %v522
        %v545 = vsel %vm480, %v543, -inf
        %546 = vmax.xlane.f32.xlu0 %v545
        %v547 = vpop.xlane.xlu0 %546
        %v548 = vsel %vm480, %v544, -inf
        %549 = vmax.xlane.f32.xlu0 %v548
        %v550 = vpop.xlane.xlu0 %549
        %v551 = vsub.f32 %v543, %v547
        %v552 = vsub.f32 %v544, %v550
        %v553 = vmul.f32 %v551, 1.442695
        %v554 = vpow.pop %v553
        %v555 = vmul.f32 %v552, 1.442695
        %v556 = vpow.pop %v555
        %v557 = vld [vmem:[#allocation6] sm:$0xff]
        %v558 = vld [vmem:[#allocation6 + $0x8] sm:$0xff]
        %v559 = vld [vmem:[#allocation6 + $0x10] sm:$0xff]
        %v560 = vld [vmem:[#allocation6 + $0x18] sm:$0xff]
        %v562 = vsel %vm480, %v554, 0
        %v565 = vsel %vm480, %v556, 0
        %567 = vmatprep.subr.mxu0 0.0
        %568 = vmatpush1.msra.mxu0 0.0
        %569 = vmatprep.subr.mxu0 0.0
        %570 = vmatpush1.msra.mxu0 0.0
        %571 = vmatprep.subr.mxu0 0.0
        %572 = vmatpush1.msra.mxu0 0.0
        %573 = vmatprep.subr.mxu0 0.0
        %574 = vmatpush1.msra.mxu0 0.0
        %575 = vmatprep.subr.mxu0 0.0
        %576 = vmatpush1.msra.mxu0 0.0
        %577 = vmatprep.subr.mxu0 0.0
        %578 = vmatpush1.msra.mxu0 0.0
        %579 = vmatprep.subr.mxu0 0.0
        %580 = vmatpush1.msra.mxu0 0.0
        %581 = vmatprep.subr.mxu0 0.0
        %582 = vmatpush1.msra.mxu0 0.0
        %583 = vmatprep.subr.mxu0 0.0
        %584 = vmatpush1.msra.mxu0 0.0
        %585 = vmatprep.subr.mxu0 0.0
        %586 = vmatpush1.msra.mxu0 0.0
        %587 = vmatprep.subr.mxu0 0.0
        %588 = vmatpush1.msra.mxu0 0.0
        %589 = vmatprep.subr.mxu0 0.0
        %590 = vmatpush1.msra.mxu0 0.0
        %591 = vmatprep.subr.mxu0 0.0
        %592 = vmatpush1.msra.mxu0 %v560
        %593 = vmatprep.subr.mxu0 0.0
        %594 = vmatpush1.msra.mxu0 %v559
        %595 = vmatprep.subr.mxu0 0.0
        %596 = vmatpush1.msra.mxu0 %v558
        %597 = vmatprep.subr.mxu0 0.0
        %598 = vmatpush1.msra.mxu0 %v557
        %599 = vmatprep.subr.mxu0 0.0
        %600 = vmatpush2.msra.mxu0 0.0
        %601 = vmatprep.subr.mxu0 0.0
        %602 = vmatpush2.msra.mxu0 0.0
        %603 = vmatprep.subr.mxu0 0.0
        %604 = vmatpush2.msra.mxu0 0.0
        %605 = vmatprep.subr.mxu0 0.0
        %606 = vmatpush2.msra.mxu0 0.0
        %607 = vmatprep.subr.mxu0 0.0
        %608 = vmatpush2.msra.mxu0 0.0
        %609 = vmatprep.subr.mxu0 0.0
        %610 = vmatpush2.msra.mxu0 0.0
        %611 = vmatprep.subr.mxu0 0.0
        %612 = vmatpush2.msra.mxu0 0.0
        %613 = vmatprep.subr.mxu0 0.0
        %614 = vmatpush2.msra.mxu0 0.0
        %615 = vmatprep.subr.mxu0 0.0
        %616 = vmatpush2.msra.mxu0 0.0
        %617 = vmatprep.subr.mxu0 0.0
        %618 = vmatpush2.msra.mxu0 0.0
        %619 = vmatprep.subr.mxu0 0.0
        %620 = vmatpush2.msra.mxu0 0.0
        %621 = vmatprep.subr.mxu0 0.0
        %622 = vmatpush2.msra.mxu0 0.0
        %623 = vmatprep.subr.mxu0 0.0
        %624 = vmatpush2.msra.mxu0 0.0
        %625 = vmatprep.subr.mxu0 0.0
        %626 = vmatpush2.msra.mxu0 0.0
        %627 = vmatprep.subr.mxu0 0.0
        %628 = vmatpush2.msra.mxu0 0.0
        %629 = vmatprep.subr.mxu0 0.0
        %630 = vmatpush2.msra.mxu0 0.0
        %631 = vmatprep.mubr.f32.mxu0 0.0
        %632 = vmatmul.mubr.f32.gmra.mxu0 %v562
        %v633 = vpop.f32.mrf.mxu0
        %v634 = vadd.f32 0.0, %v633
        %v635 = vpop.f32.mrf.mxu0
        %636 = vmatprep.mubr.f32.mxu0 0.0
        %637 = vmatmul.mubr.f32.gmra.mxu0 %v565
        %v638 = vpop.f32.mrf.mxu0
        %v639 = vadd.f32 0.0, %v638
        %v640 = vpop.f32.mrf.mxu0
        %641 = vdwg.mxu0
        %v642 = vrcp.pop %v634
        %v643 = vrcp.pop %v639
        %v644 = vmul.f32 %v554, %v642
        %v645 = vmul.f32 %v556, %v643
        %v646 = vld [vmem:[#allocation8] sm:$0xf]
        %v647 = vld [vmem:[#allocation8 + $0x4] sm:$0xf]
        %v648 = vld [vmem:[#allocation8 + $0x8] sm:$0xf]
        %v649 = vld [vmem:[#allocation8 + $0xc] sm:$0xf]
        %v650 = vld [vmem:[%s6] sm:$0x1]
        %v652 = vlaneseq
        %v653 = vshrl.u32 %v652, 7
        %v654 = vsub.s32 0, %v653
        %v655 = vrot.slane %v650, %v654
        %v661 = vunpack.c.l.b16 %v646
        %v662 = vunpack.c.l.b16 %v647
        %v663 = vunpack.c.l.b16 %v648
        %v664 = vunpack.c.l.b16 %v649
        %v665 = vpack.c.b16 %v662, %v661
        %v666 = vpack.c.b16 %v664, %v663
        %669 = vmatprep.subr.bf16.mxu0 0
        %670 = vmatpush1.bf16.msra.mxu0 0
        %671 = vmatprep.subr.bf16.mxu0 0
        %672 = vmatpush1.bf16.msra.mxu0 0
        %673 = vmatprep.subr.bf16.mxu0 0
        %674 = vmatpush1.bf16.msra.mxu0 0
        %675 = vmatprep.subr.bf16.mxu0 0
        %676 = vmatpush1.bf16.msra.mxu0 0
        %677 = vmatprep.subr.bf16.mxu0 0
        %678 = vmatpush1.bf16.msra.mxu0 0
        %679 = vmatprep.subr.bf16.mxu0 0
        %680 = vmatpush1.bf16.msra.mxu0 0
        %681 = vmatprep.subr.bf16.mxu0 0
        %682 = vmatpush1.bf16.msra.mxu0 %v666
        %683 = vmatprep.subr.bf16.mxu0 0
        %684 = vmatpush1.bf16.msra.mxu0 %v665
        %685 = vmatprep.subr.bf16.mxu0 0
        %686 = vmatpush2.bf16.msra.mxu0 0
        %687 = vmatprep.subr.bf16.mxu0 0
        %688 = vmatpush2.bf16.msra.mxu0 0
        %689 = vmatprep.subr.bf16.mxu0 0
        %690 = vmatpush2.bf16.msra.mxu0 0
        %691 = vmatprep.subr.bf16.mxu0 0
        %692 = vmatpush2.bf16.msra.mxu0 0
        %693 = vmatprep.subr.bf16.mxu0 0
        %694 = vmatpush2.bf16.msra.mxu0 0
        %695 = vmatprep.subr.bf16.mxu0 0
        %696 = vmatpush2.bf16.msra.mxu0 0
        %697 = vmatprep.subr.bf16.mxu0 0
        %698 = vmatpush2.bf16.msra.mxu0 0
        %699 = vmatprep.subr.bf16.mxu0 0
        %700 = vmatpush2.bf16.msra.mxu0 0
        %701 = vmatprep.mubr.bf16.mxu0 0
        %702 = vmatmul.mubr.bf16.gmra.mxu0 %v482
        %v703 = vpop.f32.mrf.mxu0
        %v704 = vadd.f32 %v655, %v703
        %v705 = vpop.f32.mrf.mxu0
        %v706 = vpop.f32.mrf.mxu0
        %v707 = vadd.f32 %v655, %v706
        %v708 = vpop.f32.mrf.mxu0
        %709 = vdwg.mxu0
        %v710 = vpack.c.bf16 %v707, %v704
        %v712 = vunpack.c.l.b16 %v710
        %v713 = vunpack.c.h.b16 %v710
        %v714 = vpack.c.b16 %v712, %v712
        %v715 = vpack.c.b16 %v713, %v713
        %716 = vxpose.xlu0.b32.start [1/16] %v644, 128
        %717 = vxpose.xlu0.b32.cont [2/16] 0.0, 128
        %718 = vxpose.xlu0.b32.cont [3/16] 0.0, 128
        %719 = vxpose.xlu0.b32.cont [4/16] 0.0, 128
        %720 = vxpose.xlu0.b32.cont [5/16] 0.0, 128
        %721 = vxpose.xlu0.b32.cont [6/16] 0.0, 128
        %722 = vxpose.xlu0.b32.cont [7/16] 0.0, 128
        %723 = vxpose.xlu0.b32.cont [8/16] 0.0, 128
        %724 = vxpose.xlu0.b32.cont [9/16] 0.0, 128
        %725 = vxpose.xlu0.b32.cont [10/16] 0.0, 128
        %726 = vxpose.xlu0.b32.cont [11/16] 0.0, 128
        %727 = vxpose.xlu0.b32.cont [12/16] 0.0, 128
        %728 = vxpose.xlu0.b32.cont [13/16] 0.0, 128
        %729 = vxpose.xlu0.b32.cont [14/16] 0.0, 128
        %730 = vxpose.xlu0.b32.cont [15/16] 0.0, 128
        %731 = vxpose.xlu0.b32.end [16/16] 0.0, 128
        %v732 = vpop.trf.xlu0
        %v733 = vpop.trf.xlu0
        %v734 = vpop.trf.xlu0
        %v735 = vpop.trf.xlu0
        %v736 = vpop.trf.xlu0
        %v737 = vpop.trf.xlu0
        %v738 = vpop.trf.xlu0
        %v739 = vpop.trf.xlu0
        %v740 = vpop.trf.xlu0
        %v741 = vpop.trf.xlu0
        %v742 = vpop.trf.xlu0
        %v743 = vpop.trf.xlu0
        %v744 = vpop.trf.xlu0
        %v745 = vpop.trf.xlu0
        %v746 = vpop.trf.xlu0
        %v747 = vpop.trf.xlu0
        %748 = vxpose.xlu0.b32.start [1/16] %v645, 128
        %749 = vxpose.xlu0.b32.cont [2/16] 0.0, 128
        %750 = vxpose.xlu0.b32.cont [3/16] 0.0, 128
        %751 = vxpose.xlu0.b32.cont [4/16] 0.0, 128
        %752 = vxpose.xlu0.b32.cont [5/16] 0.0, 128
        %753 = vxpose.xlu0.b32.cont [6/16] 0.0, 128
        %754 = vxpose.xlu0.b32.cont [7/16] 0.0, 128
        %755 = vxpose.xlu0.b32.cont [8/16] 0.0, 128
        %756 = vxpose.xlu0.b32.cont [9/16] 0.0, 128
        %757 = vxpose.xlu0.b32.cont [10/16] 0.0, 128
        %758 = vxpose.xlu0.b32.cont [11/16] 0.0, 128
        %759 = vxpose.xlu0.b32.cont [12/16] 0.0, 128
        %760 = vxpose.xlu0.b32.cont [13/16] 0.0, 128
        %761 = vxpose.xlu0.b32.cont [14/16] 0.0, 128
        %762 = vxpose.xlu0.b32.cont [15/16] 0.0, 128
        %763 = vxpose.xlu0.b32.end [16/16] 0.0, 128
        %v764 = vpop.trf.xlu0
        %v765 = vpop.trf.xlu0
        %v766 = vpop.trf.xlu0
        %v767 = vpop.trf.xlu0
        %v768 = vpop.trf.xlu0
        %v769 = vpop.trf.xlu0
        %v770 = vpop.trf.xlu0
        %v771 = vpop.trf.xlu0
        %v772 = vpop.trf.xlu0
        %v773 = vpop.trf.xlu0
        %v774 = vpop.trf.xlu0
        %v775 = vpop.trf.xlu0
        %v776 = vpop.trf.xlu0
        %v777 = vpop.trf.xlu0
        %v778 = vpop.trf.xlu0
        %v779 = vpop.trf.xlu0
        %v780 = vpack.c.bf16 %v733, %v732
        %v781 = vpack.c.bf16 %v735, %v734
        %v782 = vpack.c.bf16 %v765, %v764
        %v783 = vpack.c.bf16 %v767, %v766
        %vm784 = vcmask 64512
        %v786 = vsel %vm784, %v780, 0
        %vm788 = vcmask 1043456
        %v790 = vsel %vm788, %v714, 0
        %792 = vmatprep.subr.bf16.mxu0 0
        %793 = vmatpush1.bf16.msra.mxu0 0
        %794 = vmatprep.subr.bf16.mxu0 0
        %795 = vmatpush1.bf16.msra.mxu0 0
        %796 = vmatprep.subr.bf16.mxu0 0
        %797 = vmatpush1.bf16.msra.mxu0 0
        %798 = vmatprep.subr.bf16.mxu0 0
        %799 = vmatpush1.bf16.msra.mxu0 0
        %800 = vmatprep.subr.bf16.mxu0 0
        %801 = vmatpush1.bf16.msra.mxu0 0
        %802 = vmatprep.subr.bf16.mxu0 0
        %803 = vmatpush1.bf16.msra.mxu0 0
        %804 = vmatprep.subr.bf16.mxu0 0
        %805 = vmatpush1.bf16.msra.mxu0 0
        %806 = vmatprep.subr.bf16.mxu0 0
        %807 = vmatpush1.bf16.msra.mxu0 %v790
        %808 = vmatprep.subr.bf16.mxu0 0
        %809 = vmatpush2.bf16.msra.mxu0 0
        %810 = vmatprep.subr.bf16.mxu0 0
        %811 = vmatpush2.bf16.msra.mxu0 0
        %812 = vmatprep.subr.bf16.mxu0 0
        %813 = vmatpush2.bf16.msra.mxu0 0
        %814 = vmatprep.subr.bf16.mxu0 0
        %815 = vmatpush2.bf16.msra.mxu0 0
        %816 = vmatprep.subr.bf16.mxu0 0
        %817 = vmatpush2.bf16.msra.mxu0 0
        %818 = vmatprep.subr.bf16.mxu0 0
        %819 = vmatpush2.bf16.msra.mxu0 0
        %820 = vmatprep.subr.bf16.mxu0 0
        %821 = vmatpush2.bf16.msra.mxu0 0
        %822 = vmatprep.subr.bf16.mxu0 0
        %823 = vmatpush2.bf16.msra.mxu0 0
        %824 = vmatprep.mubr.bf16.mxu0 0
        %825 = vmatmul.mubr.bf16.gmra.mxu0 %v786
        %v826 = vpop.f32.mrf.mxu0
        %v827 = vadd.f32 0.0, %v826
        %v828 = vpop.f32.mrf.mxu0
        %v829 = vpop.f32.mrf.mxu0
        %v830 = vpop.f32.mrf.mxu0
        %831 = vdwg.mxu0
        %v833 = vsel %vm784, %v782, 0
        %v836 = vsel %vm788, %v715, 0
        %838 = vmatprep.subr.bf16.mxu0 0
        %839 = vmatpush1.bf16.msra.mxu0 0
        %840 = vmatprep.subr.bf16.mxu0 0
        %841 = vmatpush1.bf16.msra.mxu0 0
        %842 = vmatprep.subr.bf16.mxu0 0
        %843 = vmatpush1.bf16.msra.mxu0 0
        %844 = vmatprep.subr.bf16.mxu0 0
        %845 = vmatpush1.bf16.msra.mxu0 0
        %846 = vmatprep.subr.bf16.mxu0 0
        %847 = vmatpush1.bf16.msra.mxu0 0
        %848 = vmatprep.subr.bf16.mxu0 0
        %849 = vmatpush1.bf16.msra.mxu0 0
        %850 = vmatprep.subr.bf16.mxu0 0
        %851 = vmatpush1.bf16.msra.mxu0 0
        %852 = vmatprep.subr.bf16.mxu0 0
        %853 = vmatpush1.bf16.msra.mxu0 %v836
        %854 = vmatprep.subr.bf16.mxu0 0
        %855 = vmatpush2.bf16.msra.mxu0 0
        %856 = vmatprep.subr.bf16.mxu0 0
        %857 = vmatpush2.bf16.msra.mxu0 0
        %858 = vmatprep.subr.bf16.mxu0 0
        %859 = vmatpush2.bf16.msra.mxu0 0
        %860 = vmatprep.subr.bf16.mxu0 0
        %861 = vmatpush2.bf16.msra.mxu0 0
        %862 = vmatprep.subr.bf16.mxu0 0
        %863 = vmatpush2.bf16.msra.mxu0 0
        %864 = vmatprep.subr.bf16.mxu0 0
        %865 = vmatpush2.bf16.msra.mxu0 0
        %866 = vmatprep.subr.bf16.mxu0 0
        %867 = vmatpush2.bf16.msra.mxu0 0
        %868 = vmatprep.subr.bf16.mxu0 0
        %869 = vmatpush2.bf16.msra.mxu0 0
        %870 = vmatprep.mubr.bf16.mxu0 0
        %871 = vmatmul.mubr.bf16.gmra.mxu0 %v833
        %v872 = vpop.f32.mrf.mxu0
        %v873 = vadd.f32 0.0, %v872
        %v874 = vpop.f32.mrf.mxu0
        %v875 = vpop.f32.mrf.mxu0
        %v876 = vpop.f32.mrf.mxu0
        %877 = vdwg.mxu0
        %878 = vst.msk [vmem:[#allocation2] sm:$0xff] %vm784, %v827
        %879 = vst.msk [vmem:[#allocation2 + $0x8] sm:$0xff] %vm784, %v873
        %v881 = vrot.slane %v780, 4
        %882 = vrot.lane.b32.xlu0 %v714, 120
        %v883 = vpop.permute.xlu0 %882
        %v885 = vsel %vm784, %v881, 0
        %v888 = vsel %vm788, %v883, 0
        %890 = vmatprep.subr.bf16.mxu0 0
        %891 = vmatpush1.bf16.msra.mxu0 0
        %892 = vmatprep.subr.bf16.mxu0 0
        %893 = vmatpush1.bf16.msra.mxu0 0
        %894 = vmatprep.subr.bf16.mxu0 0
        %895 = vmatpush1.bf16.msra.mxu0 0
        %896 = vmatprep.subr.bf16.mxu0 0
        %897 = vmatpush1.bf16.msra.mxu0 0
        %898 = vmatprep.subr.bf16.mxu0 0
        %899 = vmatpush1.bf16.msra.mxu0 0
        %900 = vmatprep.subr.bf16.mxu0 0
        %901 = vmatpush1.bf16.msra.mxu0 0
        %902 = vmatprep.subr.bf16.mxu0 0
        %903 = vmatpush1.bf16.msra.mxu0 0
        %904 = vmatprep.subr.bf16.mxu0 0
        %905 = vmatpush1.bf16.msra.mxu0 %v888
        %906 = vmatprep.subr.bf16.mxu0 0
        %907 = vmatpush2.bf16.msra.mxu0 0
        %908 = vmatprep.subr.bf16.mxu0 0
        %909 = vmatpush2.bf16.msra.mxu0 0
        %910 = vmatprep.subr.bf16.mxu0 0
        %911 = vmatpush2.bf16.msra.mxu0 0
        %912 = vmatprep.subr.bf16.mxu0 0
        %913 = vmatpush2.bf16.msra.mxu0 0
        %914 = vmatprep.subr.bf16.mxu0 0
        %915 = vmatpush2.bf16.msra.mxu0 0
        %916 = vmatprep.subr.bf16.mxu0 0
        %917 = vmatpush2.bf16.msra.mxu0 0
        %918 = vmatprep.subr.bf16.mxu0 0
        %919 = vmatpush2.bf16.msra.mxu0 0
        %920 = vmatprep.subr.bf16.mxu0 0
        %921 = vmatpush2.bf16.msra.mxu0 0
        %922 = vmatprep.mubr.bf16.mxu0 0
        %923 = vmatmul.mubr.bf16.gmra.mxu0 %v885
        %v924 = vpop.f32.mrf.mxu0
        %v925 = vadd.f32 0.0, %v924
        %v926 = vpop.f32.mrf.mxu0
        %v927 = vpop.f32.mrf.mxu0
        %v928 = vpop.f32.mrf.mxu0
        %929 = vdwg.mxu0
        %v931 = vrot.slane %v782, 4
        %932 = vrot.lane.b32.xlu0 %v715, 120
        %v933 = vpop.permute.xlu0 %932
        %v935 = vsel %vm784, %v931, 0
        %v938 = vsel %vm788, %v933, 0
        %940 = vmatprep.subr.bf16.mxu0 0
        %941 = vmatpush1.bf16.msra.mxu0 0
        %942 = vmatprep.subr.bf16.mxu0 0
        %943 = vmatpush1.bf16.msra.mxu0 0
        %944 = vmatprep.subr.bf16.mxu0 0
        %945 = vmatpush1.bf16.msra.mxu0 0
        %946 = vmatprep.subr.bf16.mxu0 0
        %947 = vmatpush1.bf16.msra.mxu0 0
        %948 = vmatprep.subr.bf16.mxu0 0
        %949 = vmatpush1.bf16.msra.mxu0 0
        %950 = vmatprep.subr.bf16.mxu0 0
        %951 = vmatpush1.bf16.msra.mxu0 0
        %952 = vmatprep.subr.bf16.mxu0 0
        %953 = vmatpush1.bf16.msra.mxu0 0
        %954 = vmatprep.subr.bf16.mxu0 0
        %955 = vmatpush1.bf16.msra.mxu0 %v938
        %956 = vmatprep.subr.bf16.mxu0 0
        %957 = vmatpush2.bf16.msra.mxu0 0
        %958 = vmatprep.subr.bf16.mxu0 0
        %959 = vmatpush2.bf16.msra.mxu0 0
        %960 = vmatprep.subr.bf16.mxu0 0
        %961 = vmatpush2.bf16.msra.mxu0 0
        %962 = vmatprep.subr.bf16.mxu0 0
        %963 = vmatpush2.bf16.msra.mxu0 0
        %964 = vmatprep.subr.bf16.mxu0 0
        %965 = vmatpush2.bf16.msra.mxu0 0
        %966 = vmatprep.subr.bf16.mxu0 0
        %967 = vmatpush2.bf16.msra.mxu0 0
        %968 = vmatprep.subr.bf16.mxu0 0
        %969 = vmatpush2.bf16.msra.mxu0 0
        %970 = vmatprep.subr.bf16.mxu0 0
        %971 = vmatpush2.bf16.msra.mxu0 0
        %972 = vmatprep.mubr.bf16.mxu0 0
        %973 = vmatmul.mubr.bf16.gmra.mxu0 %v935
        %v974 = vpop.f32.mrf.mxu0
        %v975 = vadd.f32 0.0, %v974
        %v976 = vpop.f32.mrf.mxu0
        %v977 = vpop.f32.mrf.mxu0
        %v978 = vpop.f32.mrf.mxu0
        %979 = vdwg.mxu0
        %982 = vrot.lane.b32.xlu0 %v925, 8
        %v983 = vpop.permute.xlu0 %982
        %984 = vrot.lane.b32.xlu0 %v975, 8
        %v985 = vpop.permute.xlu0 %984
        %vm988 = vcmask 130112
        %989 = vst.msk [vmem:[#allocation2] sm:$0xff] %vm988, %v983
        %990 = vst.msk [vmem:[#allocation2 + $0x8] sm:$0xff] %vm988, %v985
        %991 = vrot.lane.b32.xlu0 %v714, 112
        %v992 = vpop.permute.xlu0 %991
        %v994 = vsel %vm784, %v781, 0
        %v997 = vsel %vm788, %v992, 0
        %999 = vmatprep.subr.bf16.mxu0 0
        %1000 = vmatpush1.bf16.msra.mxu0 0
        %1001 = vmatprep.subr.bf16.mxu0 0
        %1002 = vmatpush1.bf16.msra.mxu0 0
        %1003 = vmatprep.subr.bf16.mxu0 0
        %1004 = vmatpush1.bf16.msra.mxu0 0
        %1005 = vmatprep.subr.bf16.mxu0 0
        %1006 = vmatpush1.bf16.msra.mxu0 0
        %1007 = vmatprep.subr.bf16.mxu0 0
        %1008 = vmatpush1.bf16.msra.mxu0 0
        %1009 = vmatprep.subr.bf16.mxu0 0
        %1010 = vmatpush1.bf16.msra.mxu0 0
        %1011 = vmatprep.subr.bf16.mxu0 0
        %1012 = vmatpush1.bf16.msra.mxu0 0
        %1013 = vmatprep.subr.bf16.mxu0 0
        %1014 = vmatpush1.bf16.msra.mxu0 %v997
        %1015 = vmatprep.subr.bf16.mxu0 0
        %1016 = vmatpush2.bf16.msra.mxu0 0
        %1017 = vmatprep.subr.bf16.mxu0 0
        %1018 = vmatpush2.bf16.msra.mxu0 0
        %1019 = vmatprep.subr.bf16.mxu0 0
        %1020 = vmatpush2.bf16.msra.mxu0 0
        %1021 = vmatprep.subr.bf16.mxu0 0
        %1022 = vmatpush2.bf16.msra.mxu0 0
        %1023 = vmatprep.subr.bf16.mxu0 0
        %1024 = vmatpush2.bf16.msra.mxu0 0
        %1025 = vmatprep.subr.bf16.mxu0 0
        %1026 = vmatpush2.bf16.msra.mxu0 0
        %1027 = vmatprep.subr.bf16.mxu0 0
        %1028 = vmatpush2.bf16.msra.mxu0 0
        %1029 = vmatprep.subr.bf16.mxu0 0
        %1030 = vmatpush2.bf16.msra.mxu0 0
        %1031 = vmatprep.mubr.bf16.mxu0 0
        %1032 = vmatmul.mubr.bf16.gmra.mxu0 %v994
        %v1033 = vpop.f32.mrf.mxu0
        %v1034 = vadd.f32 0.0, %v1033
        %v1035 = vpop.f32.mrf.mxu0
        %v1036 = vpop.f32.mrf.mxu0
        %v1037 = vpop.f32.mrf.mxu0
        %1038 = vdwg.mxu0
        %1039 = vrot.lane.b32.xlu0 %v715, 112
        %v1040 = vpop.permute.xlu0 %1039
        %v1042 = vsel %vm784, %v783, 0
        %v1045 = vsel %vm788, %v1040, 0
        %1047 = vmatprep.subr.bf16.mxu0 0
        %1048 = vmatpush1.bf16.msra.mxu0 0
        %1049 = vmatprep.subr.bf16.mxu0 0
        %1050 = vmatpush1.bf16.msra.mxu0 0
        %1051 = vmatprep.subr.bf16.mxu0 0
        %1052 = vmatpush1.bf16.msra.mxu0 0
        %1053 = vmatprep.subr.bf16.mxu0 0
        %1054 = vmatpush1.bf16.msra.mxu0 0
        %1055 = vmatprep.subr.bf16.mxu0 0
        %1056 = vmatpush1.bf16.msra.mxu0 0
        %1057 = vmatprep.subr.bf16.mxu0 0
        %1058 = vmatpush1.bf16.msra.mxu0 0
        %1059 = vmatprep.subr.bf16.mxu0 0
        %1060 = vmatpush1.bf16.msra.mxu0 0
        %1061 = vmatprep.subr.bf16.mxu0 0
        %1062 = vmatpush1.bf16.msra.mxu0 %v1045
        %1063 = vmatprep.subr.bf16.mxu0 0
        %1064 = vmatpush2.bf16.msra.mxu0 0
        %1065 = vmatprep.subr.bf16.mxu0 0
        %1066 = vmatpush2.bf16.msra.mxu0 0
        %1067 = vmatprep.subr.bf16.mxu0 0
        %1068 = vmatpush2.bf16.msra.mxu0 0
        %1069 = vmatprep.subr.bf16.mxu0 0
        %1070 = vmatpush2.bf16.msra.mxu0 0
        %1071 = vmatprep.subr.bf16.mxu0 0
        %1072 = vmatpush2.bf16.msra.mxu0 0
        %1073 = vmatprep.subr.bf16.mxu0 0
        %1074 = vmatpush2.bf16.msra.mxu0 0
        %1075 = vmatprep.subr.bf16.mxu0 0
        %1076 = vmatpush2.bf16.msra.mxu0 0
        %1077 = vmatprep.subr.bf16.mxu0 0
        %1078 = vmatpush2.bf16.msra.mxu0 0
        %1079 = vmatprep.mubr.bf16.mxu0 0
        %1080 = vmatmul.mubr.bf16.gmra.mxu0 %v1042
        %v1081 = vpop.f32.mrf.mxu0
        %v1082 = vadd.f32 0.0, %v1081
        %v1083 = vpop.f32.mrf.mxu0
        %v1084 = vpop.f32.mrf.mxu0
        %v1085 = vpop.f32.mrf.mxu0
        %1086 = vdwg.mxu0
        %1089 = vrot.lane.b32.xlu0 %v1034, 16
        %v1090 = vpop.permute.xlu0 %1089
        %1091 = vrot.lane.b32.xlu0 %v1082, 16
        %v1092 = vpop.permute.xlu0 %1091
        %vm1095 = vcmask 195712
        %1096 = vst.msk [vmem:[#allocation2] sm:$0xff] %vm1095, %v1090
        %1097 = vst.msk [vmem:[#allocation2 + $0x8] sm:$0xff] %vm1095, %v1092
        %v1099 = vrot.slane %v781, 4
        %1100 = vrot.lane.b32.xlu0 %v714, 104
        %v1101 = vpop.permute.xlu0 %1100
        %v1103 = vsel %vm784, %v1099, 0
        %v1106 = vsel %vm788, %v1101, 0
        %1108 = vmatprep.subr.bf16.mxu0 0
        %1109 = vmatpush1.bf16.msra.mxu0 0
        %1110 = vmatprep.subr.bf16.mxu0 0
        %1111 = vmatpush1.bf16.msra.mxu0 0
        %1112 = vmatprep.subr.bf16.mxu0 0
        %1113 = vmatpush1.bf16.msra.mxu0 0
        %1114 = vmatprep.subr.bf16.mxu0 0
        %1115 = vmatpush1.bf16.msra.mxu0 0
        %1116 = vmatprep.subr.bf16.mxu0 0
        %1117 = vmatpush1.bf16.msra.mxu0 0
        %1118 = vmatprep.subr.bf16.mxu0 0
        %1119 = vmatpush1.bf16.msra.mxu0 0
        %1120 = vmatprep.subr.bf16.mxu0 0
        %1121 = vmatpush1.bf16.msra.mxu0 0
        %1122 = vmatprep.subr.bf16.mxu0 0
        %1123 = vmatpush1.bf16.msra.mxu0 %v1106
        %1124 = vmatprep.subr.bf16.mxu0 0
        %1125 = vmatpush2.bf16.msra.mxu0 0
        %1126 = vmatprep.subr.bf16.mxu0 0
        %1127 = vmatpush2.bf16.msra.mxu0 0
        %1128 = vmatprep.subr.bf16.mxu0 0
        %1129 = vmatpush2.bf16.msra.mxu0 0
        %1130 = vmatprep.subr.bf16.mxu0 0
        %1131 = vmatpush2.bf16.msra.mxu0 0
        %1132 = vmatprep.subr.bf16.mxu0 0
        %1133 = vmatpush2.bf16.msra.mxu0 0
        %1134 = vmatprep.subr.bf16.mxu0 0
        %1135 = vmatpush2.bf16.msra.mxu0 0
        %1136 = vmatprep.subr.bf16.mxu0 0
        %1137 = vmatpush2.bf16.msra.mxu0 0
        %1138 = vmatprep.subr.bf16.mxu0 0
        %1139 = vmatpush2.bf16.msra.mxu0 0
        %1140 = vmatprep.mubr.bf16.mxu0 0
        %1141 = vmatmul.mubr.bf16.gmra.mxu0 %v1103
        %v1142 = vpop.f32.mrf.mxu0
        %v1143 = vadd.f32 0.0, %v1142
        %v1144 = vpop.f32.mrf.mxu0
        %v1145 = vpop.f32.mrf.mxu0
        %v1146 = vpop.f32.mrf.mxu0
        %1147 = vdwg.mxu0
        %v1149 = vrot.slane %v783, 4
        %1150 = vrot.lane.b32.xlu0 %v715, 104
        %v1151 = vpop.permute.xlu0 %1150
        %v1153 = vsel %vm784, %v1149, 0
        %v1156 = vsel %vm788, %v1151, 0
        %1158 = vmatprep.subr.bf16.mxu0 0
        %1159 = vmatpush1.bf16.msra.mxu0 0
        %1160 = vmatprep.subr.bf16.mxu0 0
        %1161 = vmatpush1.bf16.msra.mxu0 0
        %1162 = vmatprep.subr.bf16.mxu0 0
        %1163 = vmatpush1.bf16.msra.mxu0 0
        %1164 = vmatprep.subr.bf16.mxu0 0
        %1165 = vmatpush1.bf16.msra.mxu0 0
        %1166 = vmatprep.subr.bf16.mxu0 0
        %1167 = vmatpush1.bf16.msra.mxu0 0
        %1168 = vmatprep.subr.bf16.mxu0 0
        %1169 = vmatpush1.bf16.msra.mxu0 0
        %1170 = vmatprep.subr.bf16.mxu0 0
        %1171 = vmatpush1.bf16.msra.mxu0 0
        %1172 = vmatprep.subr.bf16.mxu0 0
        %1173 = vmatpush1.bf16.msra.mxu0 %v1156
        %1174 = vmatprep.subr.bf16.mxu0 0
        %1175 = vmatpush2.bf16.msra.mxu0 0
        %1176 = vmatprep.subr.bf16.mxu0 0
        %1177 = vmatpush2.bf16.msra.mxu0 0
        %1178 = vmatprep.subr.bf16.mxu0 0
        %1179 = vmatpush2.bf16.msra.mxu0 0
        %1180 = vmatprep.subr.bf16.mxu0 0
        %1181 = vmatpush2.bf16.msra.mxu0 0
        %1182 = vmatprep.subr.bf16.mxu0 0
        %1183 = vmatpush2.bf16.msra.mxu0 0
        %1184 = vmatprep.subr.bf16.mxu0 0
        %1185 = vmatpush2.bf16.msra.mxu0 0
        %1186 = vmatprep.subr.bf16.mxu0 0
        %1187 = vmatpush2.bf16.msra.mxu0 0
        %1188 = vmatprep.subr.bf16.mxu0 0
        %1189 = vmatpush2.bf16.msra.mxu0 0
        %1190 = vmatprep.mubr.bf16.mxu0 0
        %1191 = vmatmul.mubr.bf16.gmra.mxu0 %v1153
        %v1192 = vpop.f32.mrf.mxu0
        %v1193 = vadd.f32 0.0, %v1192
        %v1194 = vpop.f32.mrf.mxu0
        %v1195 = vpop.f32.mrf.mxu0
        %v1196 = vpop.f32.mrf.mxu0
        %1197 = vdwg.mxu0
        %1200 = vrot.lane.b32.xlu0 %v1143, 24
        %v1201 = vpop.permute.xlu0 %1200
        %1202 = vrot.lane.b32.xlu0 %v1193, 24
        %v1203 = vpop.permute.xlu0 %1202
        %vm1206 = vcmask 261312
        %1207 = vst.msk [vmem:[#allocation2] sm:$0xff] %vm1206, %v1201
        %1208 = vst.msk [vmem:[#allocation2 + $0x8] sm:$0xff] %vm1206, %v1203
        %v1209 = vld [vmem:[#allocation2] sm:$0xff]
        %v1210 = vld [vmem:[#allocation2 + $0x8] sm:$0xff]
        %v1211 = vpack.c.bf16 %v1210, %v1209
        %v1212 = vld [vmem:[#allocation9] sm:$0xf]
        %v1213 = vld [vmem:[#allocation9 + $0x4] sm:$0xf]
        %v1214 = vld [vmem:[#allocation9 + $0x8] sm:$0xf]
        %v1215 = vld [vmem:[#allocation9 + $0xc] sm:$0xf]
        %v1216 = vld [vmem:[%s8] sm:$0x1]
        %v1218 = vlaneseq
        %v1219 = vshrl.u32 %v1218, 7
        %v1220 = vsub.s32 0, %v1219
        %v1221 = vrot.slane %v1216, %v1220
        %v1227 = vunpack.c.l.b16 %v1212
        %v1228 = vunpack.c.l.b16 %v1213
        %v1229 = vunpack.c.l.b16 %v1214
        %v1230 = vunpack.c.l.b16 %v1215
        %v1231 = vpack.c.b16 %v1228, %v1227
        %v1232 = vpack.c.b16 %v1230, %v1229
        %v1236 = vsel %vm480, %v1211, 0
        %1238 = vmatprep.subr.bf16.mxu0 0
        %1239 = vmatpush1.bf16.msra.mxu0 0
        %1240 = vmatprep.subr.bf16.mxu0 0
        %1241 = vmatpush1.bf16.msra.mxu0 0
        %1242 = vmatprep.subr.bf16.mxu0 0
        %1243 = vmatpush1.bf16.msra.mxu0 0
        %1244 = vmatprep.subr.bf16.mxu0 0
        %1245 = vmatpush1.bf16.msra.mxu0 0
        %1246 = vmatprep.subr.bf16.mxu0 0
        %1247 = vmatpush1.bf16.msra.mxu0 0
        %1248 = vmatprep.subr.bf16.mxu0 0
        %1249 = vmatpush1.bf16.msra.mxu0 0
        %1250 = vmatprep.subr.bf16.mxu0 0
        %1251 = vmatpush1.bf16.msra.mxu0 %v1232
        %1252 = vmatprep.subr.bf16.mxu0 0
        %1253 = vmatpush1.bf16.msra.mxu0 %v1231
        %1254 = vmatprep.subr.bf16.mxu0 0
        %1255 = vmatpush2.bf16.msra.mxu0 0
        %1256 = vmatprep.subr.bf16.mxu0 0
        %1257 = vmatpush2.bf16.msra.mxu0 0
        %1258 = vmatprep.subr.bf16.mxu0 0
        %1259 = vmatpush2.bf16.msra.mxu0 0
        %1260 = vmatprep.subr.bf16.mxu0 0
        %1261 = vmatpush2.bf16.msra.mxu0 0
        %1262 = vmatprep.subr.bf16.mxu0 0
        %1263 = vmatpush2.bf16.msra.mxu0 0
        %1264 = vmatprep.subr.bf16.mxu0 0
        %1265 = vmatpush2.bf16.msra.mxu0 0
        %1266 = vmatprep.subr.bf16.mxu0 0
        %1267 = vmatpush2.bf16.msra.mxu0 0
        %1268 = vmatprep.subr.bf16.mxu0 0
        %1269 = vmatpush2.bf16.msra.mxu0 0
        %1270 = vmatprep.mubr.bf16.mxu0 0
        %1271 = vmatmul.mubr.bf16.gmra.mxu0 %v1236
        %v1272 = vpop.f32.mrf.mxu0
        %v1273 = vadd.f32 %v1221, %v1272
        %v1274 = vpop.f32.mrf.mxu0
        %v1275 = vpop.f32.mrf.mxu0
        %v1276 = vadd.f32 %v1221, %v1275
        %v1277 = vpop.f32.mrf.mxu0
        %1278 = vdwg.mxu0
        %1279 = vst.msk [vmem:[%s410] sm:$0xff] %vm480, %v1273
        %1280 = vst.msk [vmem:[%s410 + $0x8] sm:$0xff] %vm480, %v1276
        %s1281 = sand.u32 %s235, 1
        %s1282 = scalar_lea.sflag [#allocation5], %s1281
        %s1283 = sand.u32 %s235, 1
        %s1284 = smul.addr %s1283, 16
        %s1285 = scalar_lea.vmem [#allocation11], %s1284
        // Predicated region
        $region73: #{tpu_custom_call.1} parent=55 // pred_check
          %p1286 = pneg %p245
        $region74: #{tpu_custom_call.1} parent=55 // pred_check_branch
          %1288 = sbr.rel (%p1286) target = $region76
        $region75: #{tpu_custom_call.1} parent=55 // pred_region
          %s1289 = smul.u32 2, %s28
          %s1291 = ssub.s32 256, 256
          %1292 = vsyncadd %s1282, %s1291
          %s1293 = smul.addr %s1289, 128
          %s1294 = scalar_lea.hbm %s9, %s1293
          %s1295 = sshll.u32 %s1285, 4
          %s1296 = int_to_ptr.vmem [resolvable:$true] %s1295
          %1301 = dma.vmem_to_hbm [thread:$0]  %s1296, 256, %s1294, %s1282, 128, 128, 8
        $region76: #{tpu_custom_call.1} parent=55 // pred_fallthru
          _
      $region56: #{tpu_custom_call.1} parent=5 // pred_fallthru
        _
      %p1302 = scmp.le.s32.totalorder 2, %s23
      // Predicated region
      $region77: #{tpu_custom_call.1} parent=5 // pred_check
        %p1303 = pneg %p1302
      $region78: #{tpu_custom_call.1} parent=5 // pred_check_branch
        %1305 = sbr.rel (%p1303) target = $region80
      $region79: #{tpu_custom_call.1} parent=5 // pred_region
        %s1306 = ssub.s32 %s23, 2
        // Predicated region
        $region81: #{tpu_custom_call.1} parent=79 // pred_check
          %p1307 = pneg %p251
        $region82: #{tpu_custom_call.1} parent=79 // pred_check_branch
          %1309 = sbr.rel (%p1307) target = $region84
        $region83: #{tpu_custom_call.1} parent=79 // pred_region
          %s1310 = sand.u32 %s236, 1
          %s1311 = scalar_lea.sflag [#allocation5], %s1310
          %s1312 = sand.u32 %s236, 1
          %s1313 = smul.addr %s1312, 16
          %s1314 = scalar_lea.vmem [#allocation11], %s1313
          %1315 = dma.done %s1311, 256
        $region84: #{tpu_custom_call.1} parent=79 // pred_fallthru
          _
      $region80: #{tpu_custom_call.1} parent=5 // pred_fallthru
        _
    $region6: #{tpu_custom_call.1} parent=1 // loop_footer
      %s27 = sadd.s32 1, %s23
    $region7: #{tpu_custom_call.1} parent=1 // loop_footer_branch
      %22 = sbr.rel target = $region3
    $region8: #{tpu_custom_call.1} parent=1 // loop_exit
      _
    %1316 = vsyncpa [#allocation4], 1
    %s1317 = scalar_lea.sflag [#allocation4], 1
    %1318 = vsyncpa %s1317, 1
    %1319 = vsyncpa [#allocation7], 1
    %1320 = vsyncpa [#allocation10], 1
    %1321 = vsyncpa [#allocation5], 1
    %s1322 = scalar_lea.sflag [#allocation5], 1
    %1323 = vsyncpa %s1322, 1

// kernel: tpu_custom_call.1
$region0: #{tpu_custom_call.1}
  #allocation0 [shape = 'u32[]', space=smem, size = 0x4, offset = 0x4, fixed_abs, tag = 'smem constant byte address 0x4 - core index']
  #allocation1 [shape = 'u32[144,128]{1,0:T(1,128)}', space=vmem, size = 0x12000, scoped, tag = 'internal scratch']
  #allocation2 [shape = 'f32[16,32]{1,0:T(8,128)}', space=vmem, size = 0x2000, scoped, tag = 'scratch operand']
  %s0 = inlined_call_operand.vmem [shape: bf16[32,32], index: 0, kind: input, shape index: {}]
  %s1 = inlined_call_operand.vmem [shape: f32[1,32], index: 1, kind: input, shape index: {}]
  %s2 = inlined_call_operand.hbm [shape: bf16[4,8,32], index: 2, kind: input, shape index: {}]
  %s3 = inlined_call_operand.vmem [shape: bf16[4,8,1], index: 3, kind: input, shape index: {}]
  %s4 = inlined_call_operand.hbm [shape: f32[32,32], index: 4, kind: input, shape index: {}]
  %s5 = inlined_call_operand.hbm [shape: bf16[32,32], index: 5, kind: input, shape index: {}]
  %s6 = inlined_call_operand.vmem [shape: f32[1,32], index: 6, kind: input, shape index: {}]
  %s7 = inlined_call_operand.hbm [shape: bf16[32,32], index: 7, kind: input, shape index: {}]
  %s8 = inlined_call_operand.vmem [shape: f32[1,32], index: 8, kind: input, shape index: {}]
  %s9 = inlined_call_operand.hbm [shape: f32[4,8,32], index: 9, kind: output, shape index: {}]
  %s10 = sld [smem:[#allocation0]]
  $region85: #{tpu_custom_call.1} parent=0
    _
  %s12 = ssub.s32 1, %s10
  %s13 = scalar_select 0, %s12, %s10
  $region1: #{tpu_custom_call.1} parent=0
    #allocation3 [shape = 'u8[8192]{0}', space=vmem, size = 0x2000, scoped, tag = 'input window, operand 2']
    #allocation4 [shape = 's32[2]{0}', space=sflag, size = 0x8, scoped, tag = 'scoped memory for tpu_custom_call.1']
    #allocation5 [shape = 's32[2]{0}', space=sflag, size = 0x8, scoped, tag = 'scoped memory for tpu_custom_call.1']
    #allocation6 [shape = 'u8[16384]{0}', space=vmem, size = 0x4000, scoped, tag = 'input window, operand 4, single buffered']
    #allocation7 [shape = 's32[1]{0}', space=sflag, size = 0x4, scoped, tag = 'scoped memory for tpu_custom_call.1']
    #allocation8 [shape = 'u8[8192]{0}', space=vmem, size = 0x2000, scoped, tag = 'input window, operand 5, single buffered']
    #allocation9 [shape = 'u8[8192]{0}', space=vmem, size = 0x2000, scoped, tag = 'input window, operand 7, single buffered']
    #allocation10 [shape = 's32[1]{0}', space=sflag, size = 0x4, scoped, tag = 'scoped memory for tpu_custom_call.1']
    #allocation11 [shape = 'u8[16384]{0}', space=vmem, size = 0x4000, scoped, tag = 'output window, operand 0']
    %14 = vsyncpa [#allocation4], 0
    %s15 = scalar_lea.sflag [#allocation4], 1
    %16 = vsyncpa %s15, 0
    %17 = vsyncpa [#allocation7], 0
    %18 = vsyncpa [#allocation10], 0
    %19 = vsyncpa [#allocation5], 0
    %s20 = scalar_lea.sflag [#allocation5], 1
    %21 = vsyncpa %s20, 0
    loop: start=0, step=1, limit=4
    $region2: #{tpu_custom_call.1} parent=1 // loop_pre_header
      _
    $region3: #{tpu_custom_call.1} parent=1 // loop_header
      %s23 = sphi 0, %s27
      %p24 = scmp.ge.s32.totalorder %s23, 4
      %s31 = sphi 0, %s31
      %s33 = sphi 0, %s31
      %s34 = sphi 0, %s33
      %s48 = sphi 0, %s34
      %s52 = sphi 0, %s52
      %s54 = sphi 0, %s52
      %s55 = sphi 0, %s54
      %s69 = sphi 0, %s55
      %s75 = sphi 0, %s77
      %s78 = sphi 0, %s75
      %s79 = sphi 0, %s78
      %s95 = sphi 0, %s79
      %s101 = sphi 0, %s103
      %s104 = sphi 0, %s101
      %s105 = sphi 0, %s104
      %s121 = sphi 0, %s105
      %s125 = sphi 0, %s125
      %s127 = sphi 0, %s125
      %s128 = sphi 0, %s127
      %s142 = sphi 0, %s128
      %s146 = sphi 0, %s146
      %s148 = sphi 0, %s146
      %s149 = sphi 0, %s148
      %s163 = sphi 0, %s149
      %s167 = sphi 0, %s167
      %s169 = sphi 0, %s167
      %s170 = sphi 0, %s169
      %s184 = sphi 0, %s170
      %s188 = sphi 0, %s188
      %s190 = sphi 0, %s188
      %s191 = sphi 0, %s190
      %s205 = sphi 0, %s191
      %s209 = sphi 0, %s209
      %s211 = sphi 0, %s209
      %s212 = sphi 0, %s211
      %s226 = sphi 0, %s212
      %s232 = sphi 0, %s234
      %s235 = sphi 0, %s232
      %s236 = sphi 0, %s235
      %s252 = sphi 0, %s236
    $region4: #{tpu_custom_call.1} parent=1 // loop_header_branch
      %26 = sbr.rel (%p24) target = $region8
    $region5: #{tpu_custom_call.1} parent=1 // loop_body
      %s28 = ssub.s32 %s23, 1
      %s29 = ssub.s32 %s23, 2
      %s30 = sadd.s32 %s23, 1
      %s32 = sadd.s32 %s31, 1
      %p35 = scmp.eq.s32.totalorder %s23, 1
      %p36 = scmp.ne.s32.totalorder %s31, %s33
      %p37 = scmp.eq.s32.totalorder %s23, 0
      %p38 = por %p36, %p37
      %p39 = scmp.ne.s32.totalorder %s31, %s33
      %p40 = scmp.eq.s32.totalorder %s28, 1
      %p41 = por %p39, %p40
      %p42 = scmp.ne.s32.totalorder %s33, %s34
      %p43 = scmp.eq.s32.totalorder %s28, 0
      %p44 = por %p42, %p43
      %p45 = scmp.ne.s32.totalorder %s33, %s34
      %p46 = scmp.eq.s32.totalorder %s29, 1
      %p47 = por %p45, %p46
      %p49 = scmp.ne.s32.totalorder %s34, %s48
      %p50 = scmp.eq.s32.totalorder %s29, 0
      %p51 = por %p49, %p50
      %s53 = sadd.s32 %s52, 1
      %p56 = scmp.eq.s32.totalorder %s23, 1
      %p57 = scmp.ne.s32.totalorder %s52, %s54
      %p58 = scmp.eq.s32.totalorder %s23, 0
      %p59 = por %p57, %p58
      %p60 = scmp.ne.s32.totalorder %s52, %s54
      %p61 = scmp.eq.s32.totalorder %s28, 1
      %p62 = por %p60, %p61
      %p63 = scmp.ne.s32.totalorder %s54, %s55
      %p64 = scmp.eq.s32.totalorder %s28, 0
      %p65 = por %p63, %p64
      %p66 = scmp.ne.s32.totalorder %s54, %s55
      %p67 = scmp.eq.s32.totalorder %s29, 1
      %p68 = por %p66, %p67
      %p70 = scmp.ne.s32.totalorder %s55, %s69
      %p71 = scmp.eq.s32.totalorder %s29, 0
      %p72 = por %p70, %p71
      %s73 = ssub.s32 %s23, %s30
      %p74 = scmp.eq.s32.totalorder %s73, 0
      %s76 = sadd.s32 %s75, 1
      %s77 = scalar_select %p74, %s75, %s76
      %p80 = pneg %p74
      %p81 = scmp.eq.s32.totalorder %s23, 1
      %p82 = por %p80, %p81
      %p83 = scmp.ne.s32.totalorder %s75, %s78
      %p84 = scmp.eq.s32.totalorder %s23, 0
      %p85 = por %p83, %p84
      %p86 = scmp.ne.s32.totalorder %s75, %s78
      %p87 = scmp.eq.s32.totalorder %s28, 1
      %p88 = por %p86, %p87
      %p89 = scmp.ne.s32.totalorder %s78, %s79
      %p90 = scmp.eq.s32.totalorder %s28, 0
      %p91 = por %p89, %p90
      %p92 = scmp.ne.s32.totalorder %s78, %s79
      %p93 = scmp.eq.s32.totalorder %s29, 1
      %p94 = por %p92, %p93
      %p96 = scmp.ne.s32.totalorder %s79, %s95
      %p97 = scmp.eq.s32.totalorder %s29, 0
      %p98 = por %p96, %p97
      %s99 = ssub.s32 %s23, %s30
      %p100 = scmp.eq.s32.totalorder %s99, 0
      %s102 = sadd.s32 %s101, 1
      %s103 = scalar_select %p100, %s101, %s102
      %p106 = pneg %p100
      %p107 = scmp.eq.s32.totalorder %s23, 1
      %p108 = por %p106, %p107
      %p109 = scmp.ne.s32.totalorder %s101, %s104
      %p110 = scmp.eq.s32.totalorder %s23, 0
      %p111 = por %p109, %p110
      %p112 = scmp.ne.s32.totalorder %s101, %s104
      %p113 = scmp.eq.s32.totalorder %s28, 1
      %p114 = por %p112, %p113
      %p115 = scmp.ne.s32.totalorder %s104, %s105
      %p116 = scmp.eq.s32.totalorder %s28, 0
      %p117 = por %p115, %p116
      %p118 = scmp.ne.s32.totalorder %s104, %s105
      %p119 = scmp.eq.s32.totalorder %s29, 1
      %p120 = por %p118, %p119
      %p122 = scmp.ne.s32.totalorder %s105, %s121
      %p123 = scmp.eq.s32.totalorder %s29, 0
      %p124 = por %p122, %p123
      %s126 = sadd.s32 %s125, 1
      %p129 = scmp.eq.s32.totalorder %s23, 1
      %p130 = scmp.ne.s32.totalorder %s125, %s127
      %p131 = scmp.eq.s32.totalorder %s23, 0
      %p132 = por %p130, %p131
      %p133 = scmp.ne.s32.totalorder %s125, %s127
      %p134 = scmp.eq.s32.totalorder %s28, 1
      %p135 = por %p133, %p134
      %p136 = scmp.ne.s32.totalorder %s127, %s128
      %p137 = scmp.eq.s32.totalorder %s28, 0
      %p138 = por %p136, %p137
      %p139 = scmp.ne.s32.totalorder %s127, %s128
      %p140 = scmp.eq.s32.totalorder %s29, 1
      %p141 = por %p139, %p140
      %p143 = scmp.ne.s32.totalorder %s128, %s142
      %p144 = scmp.eq.s32.totalorder %s29, 0
      %p145 = por %p143, %p144
      %s147 = sadd.s32 %s146, 1
      %p150 = scmp.eq.s32.totalorder %s23, 1
      %p151 = scmp.ne.s32.totalorder %s146, %s148
      %p152 = scmp.eq.s32.totalorder %s23, 0
      %p153 = por %p151, %p152
      %p154 = scmp.ne.s32.totalorder %s146, %s148
      %p155 = scmp.eq.s32.totalorder %s28, 1
      %p156 = por %p154, %p155
      %p157 = scmp.ne.s32.totalorder %s148, %s149
      %p158 = scmp.eq.s32.totalorder %s28, 0
      %p159 = por %p157, %p158
      %p160 = scmp.ne.s32.totalorder %s148, %s149
      %p161 = scmp.eq.s32.totalorder %s29, 1
      %p162 = por %p160, %p161
      %p164 = scmp.ne.s32.totalorder %s149, %s163
      %p165 = scmp.eq.s32.totalorder %s29, 0
      %p166 = por %p164, %p165
      %s168 = sadd.s32 %s167, 1
      %p171 = scmp.eq.s32.totalorder %s23, 1
      %p172 = scmp.ne.s32.totalorder %s167, %s169
      %p173 = scmp.eq.s32.totalorder %s23, 0
      %p174 = por %p172, %p173
      %p175 = scmp.ne.s32.totalorder %s167, %s169
      %p176 = scmp.eq.s32.totalorder %s28, 1
      %p177 = por %p175, %p176
      %p178 = scmp.ne.s32.totalorder %s169, %s170
      %p179 = scmp.eq.s32.totalorder %s28, 0
      %p180 = por %p178, %p179
      %p181 = scmp.ne.s32.totalorder %s169, %s170
      %p182 = scmp.eq.s32.totalorder %s29, 1
      %p183 = por %p181, %p182
      %p185 = scmp.ne.s32.totalorder %s170, %s184
      %p186 = scmp.eq.s32.totalorder %s29, 0
      %p187 = por %p185, %p186
      %s189 = sadd.s32 %s188, 1
      %p192 = scmp.eq.s32.totalorder %s23, 1
      %p193 = scmp.ne.s32.totalorder %s188, %s190
      %p194 = scmp.eq.s32.totalorder %s23, 0
      %p195 = por %p193, %p194
      %p196 = scmp.ne.s32.totalorder %s188, %s190
      %p197 = scmp.eq.s32.totalorder %s28, 1
      %p198 = por %p196, %p197
      %p199 = scmp.ne.s32.totalorder %s190, %s191
      %p200 = scmp.eq.s32.totalorder %s28, 0
      %p201 = por %p199, %p200
      %p202 = scmp.ne.s32.totalorder %s190, %s191
      %p203 = scmp.eq.s32.totalorder %s29, 1
      %p204 = por %p202, %p203
      %p206 = scmp.ne.s32.totalorder %s191, %s205
      %p207 = scmp.eq.s32.totalorder %s29, 0
      %p208 = por %p206, %p207
      %s210 = sadd.s32 %s209, 1
      %p213 = scmp.eq.s32.totalorder %s23, 1
      %p214 = scmp.ne.s32.totalorder %s209, %s211
      %p215 = scmp.eq.s32.totalorder %s23, 0
      %p216 = por %p214, %p215
      %p217 = scmp.ne.s32.totalorder %s209, %s211
      %p218 = scmp.eq.s32.totalorder %s28, 1
      %p219 = por %p217, %p218
      %p220 = scmp.ne.s32.totalorder %s211, %s212
      %p221 = scmp.eq.s32.totalorder %s28, 0
      %p222 = por %p220, %p221
      %p223 = scmp.ne.s32.totalorder %s211, %s212
      %p224 = scmp.eq.s32.totalorder %s29, 1
      %p225 = por %p223, %p224
      %p227 = scmp.ne.s32.totalorder %s212, %s226
      %p228 = scmp.eq.s32.totalorder %s29, 0
      %p229 = por %p227, %p228
      %s230 = ssub.s32 %s23, %s30
      %p231 = scmp.eq.s32.totalorder %s230, 0
      %s233 = sadd.s32 %s232, 1
      %s234 = scalar_select %p231, %s232, %s233
      %p237 = pneg %p231
      %p238 = scmp.eq.s32.totalorder %s23, 1
      %p239 = por %p237, %p238
      %p240 = scmp.ne.s32.totalorder %s232, %s235
      %p241 = scmp.eq.s32.totalorder %s23, 0
      %p242 = por %p240, %p241
      %p243 = scmp.ne.s32.totalorder %s232, %s235
      %p244 = scmp.eq.s32.totalorder %s28, 1
      %p245 = por %p243, %p244
      %p246 = scmp.ne.s32.totalorder %s235, %s236
      %p247 = scmp.eq.s32.totalorder %s28, 0
      %p248 = por %p246, %p247
      %p249 = scmp.ne.s32.totalorder %s235, %s236
      %p250 = scmp.eq.s32.totalorder %s29, 1
      %p251 = por %p249, %p250
      %p253 = scmp.ne.s32.totalorder %s236, %s252
      %p254 = scmp.eq.s32.totalorder %s29, 0
      %p255 = por %p253, %p254
      %p256 = scmp.le.s32.totalorder 1, %s23
      %p257 = scmp.lt.s32.totalorder %s23, 3
      %p258 = pnand %p256, %p257
      %p259 = pneg %p258
      // Predicated region
      $region9: #{tpu_custom_call.1} parent=5 // pred_check
        _
      $region10: #{tpu_custom_call.1} parent=5 // pred_check_branch
        %261 = sbr.rel (%p258) target = $region12
      $region11: #{tpu_custom_call.1} parent=5 // pred_region
        %s262 = ssub.s32 %s23, 1
        // Predicated region
        $region13: #{tpu_custom_call.1} parent=11 // pred_check
          %p263 = pneg %p44
        $region14: #{tpu_custom_call.1} parent=11 // pred_check_branch
          %265 = sbr.rel (%p263) target = $region16
        $region15: #{tpu_custom_call.1} parent=11 // pred_region
          _
        $region16: #{tpu_custom_call.1} parent=11 // pred_fallthru
          _
        // Predicated region
        $region17: #{tpu_custom_call.1} parent=11 // pred_check
          %p266 = pneg %p65
        $region18: #{tpu_custom_call.1} parent=11 // pred_check_branch
          %268 = sbr.rel (%p266) target = $region20
        $region19: #{tpu_custom_call.1} parent=11 // pred_region
          _
        $region20: #{tpu_custom_call.1} parent=11 // pred_fallthru
          _
        // Predicated region
        $region21: #{tpu_custom_call.1} parent=11 // pred_check
          %p269 = pneg %p138
        $region22: #{tpu_custom_call.1} parent=11 // pred_check_branch
          %271 = sbr.rel (%p269) target = $region24
        $region23: #{tpu_custom_call.1} parent=11 // pred_region
          %s273 = ssub.s32 512, 512
          %274 = vsyncadd [#allocation7], %s273
          %s275 = sshll.u32 [#allocation6], 4
          %s276 = int_to_ptr.vmem [resolvable:$true] %s275
          %281 = dma.hbm_to_vmem [thread:$0]  %s4, 512, %s276, [#allocation7], 128, 128, 8
        $region24: #{tpu_custom_call.1} parent=11 // pred_fallthru
          _
        // Predicated region
        $region25: #{tpu_custom_call.1} parent=11 // pred_check
          %p282 = pneg %p159
        $region26: #{tpu_custom_call.1} parent=11 // pred_check_branch
          %284 = sbr.rel (%p282) target = $region28
        $region27: #{tpu_custom_call.1} parent=11 // pred_region
          %s286 = ssub.s32 256, 256
          %287 = vsyncadd [#allocation7], %s286
          %s288 = sshll.u32 [#allocation8], 4
          %s289 = int_to_ptr.vmem [resolvable:$true] %s288
          %294 = dma.hbm_to_vmem [thread:$0]  %s5, 256, %s289, [#allocation7], 64, 64, 4
        $region28: #{tpu_custom_call.1} parent=11 // pred_fallthru
          _
        // Predicated region
        $region29: #{tpu_custom_call.1} parent=11 // pred_check
          %p295 = pneg %p180
        $region30: #{tpu_custom_call.1} parent=11 // pred_check_branch
          %297 = sbr.rel (%p295) target = $region32
        $region31: #{tpu_custom_call.1} parent=11 // pred_region
          _
        $region32: #{tpu_custom_call.1} parent=11 // pred_fallthru
          _
        // Predicated region
        $region33: #{tpu_custom_call.1} parent=11 // pred_check
          %p298 = pneg %p201
        $region34: #{tpu_custom_call.1} parent=11 // pred_check_branch
          %300 = sbr.rel (%p298) target = $region36
        $region35: #{tpu_custom_call.1} parent=11 // pred_region
          %s302 = ssub.s32 256, 256
          %303 = vsyncadd [#allocation10], %s302
          %s304 = sshll.u32 [#allocation9], 4
          %s305 = int_to_ptr.vmem [resolvable:$true] %s304
          %310 = dma.hbm_to_vmem [thread:$0]  %s7, 256, %s305, [#allocation10], 64, 64, 4
        $region36: #{tpu_custom_call.1} parent=11 // pred_fallthru
          _
        // Predicated region
        $region37: #{tpu_custom_call.1} parent=11 // pred_check
          %p311 = pneg %p222
        $region38: #{tpu_custom_call.1} parent=11 // pred_check_branch
          %313 = sbr.rel (%p311) target = $region40
        $region39: #{tpu_custom_call.1} parent=11 // pred_region
          _
        $region40: #{tpu_custom_call.1} parent=11 // pred_fallthru
          _
      $region12: #{tpu_custom_call.1} parent=5 // pred_fallthru
        _
      %p314 = scmp.lt.s32.totalorder %s23, 2
      // Predicated region
      $region41: #{tpu_custom_call.1} parent=5 // pred_check
        %p315 = pneg %p314
      $region42: #{tpu_custom_call.1} parent=5 // pred_check_branch
        %317 = sbr.rel (%p315) target = $region44
      $region43: #{tpu_custom_call.1} parent=5 // pred_region
        // Predicated region
        $region45: #{tpu_custom_call.1} parent=43 // pred_check
          %p318 = pneg %p85
        $region46: #{tpu_custom_call.1} parent=43 // pred_check_branch
          %320 = sbr.rel (%p318) target = $region48
        $region47: #{tpu_custom_call.1} parent=43 // pred_region
          %s321 = sand.u32 %s75, 1
          %s322 = scalar_lea.sflag [#allocation4], %s321
          %s323 = sand.u32 %s75, 1
          %s324 = smul.addr %s323, 8
          %s325 = scalar_lea.vmem [#allocation3], %s324
          %s326 = smul.u32 2, %s23
          %s328 = ssub.s32 128, 128
          %329 = vsyncadd %s322, %s328
          %s330 = smul.addr %s326, 64
          %s331 = scalar_lea.hbm %s2, %s330
          %s332 = sshll.u32 %s325, 4
          %s333 = int_to_ptr.vmem [resolvable:$true] %s332
          %338 = dma.hbm_to_vmem [thread:$0]  %s331, 128, %s333, %s322, 64, 64, 4
        $region48: #{tpu_custom_call.1} parent=43 // pred_fallthru
          _
        // Predicated region
        $region49: #{tpu_custom_call.1} parent=43 // pred_check
          %p339 = pneg %p111
        $region50: #{tpu_custom_call.1} parent=43 // pred_check_branch
          %341 = sbr.rel (%p339) target = $region52
        $region51: #{tpu_custom_call.1} parent=43 // pred_region
          %s342 = smul.u32 2, %s23
          %p343 = scmp.lt.s32.totalorder %s342, 3
          %s344 = scalar_select %p343, %s342, 3
          %s345 = smul.addr %s344, 4
          %s346 = scalar_lea.vmem %s3, %s345
          %s347 = smul.u32 2, %s23
        $region52: #{tpu_custom_call.1} parent=43 // pred_fallthru
          _
      $region44: #{tpu_custom_call.1} parent=5 // pred_fallthru
        _
      %p348 = scmp.le.s32.totalorder 1, %s23
      %p349 = scmp.lt.s32.totalorder %s23, 3
      %p350 = pnand %p348, %p349
      %p351 = pneg %p350
      // Predicated region
      $region53: #{tpu_custom_call.1} parent=5 // pred_check
        _
      $region54: #{tpu_custom_call.1} parent=5 // pred_check_branch
        %353 = sbr.rel (%p350) target = $region56
      $region55: #{tpu_custom_call.1} parent=5 // pred_region
        %s354 = ssub.s32 %s23, 1
        %s355 = sand.u32 %s78, 1
        %s356 = scalar_lea.sflag [#allocation4], %s355
        %s357 = sand.u32 %s78, 1
        %s358 = smul.addr %s357, 8
        %s359 = scalar_lea.vmem [#allocation3], %s358
        // Predicated region
        $region57: #{tpu_custom_call.1} parent=55 // pred_check
          %p360 = pneg %p91
        $region58: #{tpu_custom_call.1} parent=55 // pred_check_branch
          %362 = sbr.rel (%p360) target = $region60
        $region59: #{tpu_custom_call.1} parent=55 // pred_region
          %363 = dma.done %s356, 128
        $region60: #{tpu_custom_call.1} parent=55 // pred_fallthru
          _
        // Predicated region
        $region61: #{tpu_custom_call.1} parent=55 // pred_check
          %p364 = pneg %p138
        $region62: #{tpu_custom_call.1} parent=55 // pred_check_branch
          %366 = sbr.rel (%p364) target = $region64
        $region63: #{tpu_custom_call.1} parent=55 // pred_region
          %367 = dma.done [#allocation7], 512
        $region64: #{tpu_custom_call.1} parent=55 // pred_fallthru
          _
        // Predicated region
        $region65: #{tpu_custom_call.1} parent=55 // pred_check
          %p368 = pneg %p159
        $region66: #{tpu_custom_call.1} parent=55 // pred_check_branch
          %370 = sbr.rel (%p368) target = $region68
        $region67: #{tpu_custom_call.1} parent=55 // pred_region
          %371 = dma.done [#allocation7], 256
        $region68: #{tpu_custom_call.1} parent=55 // pred_fallthru
          _
        // Predicated region
        $region69: #{tpu_custom_call.1} parent=55 // pred_check
          %p372 = pneg %p201
        $region70: #{tpu_custom_call.1} parent=55 // pred_check_branch
          %374 = sbr.rel (%p372) target = $region72
        $region71: #{tpu_custom_call.1} parent=55 // pred_region
          %375 = dma.done [#allocation10], 256
        $region72: #{tpu_custom_call.1} parent=55 // pred_fallthru
          _
        %p376 = pneg %p44
        %p377 = pneg %p41
        %p378 = pneg %p65
        %p379 = pneg %p62
        %s380 = sand.u32 %s78, 1
        %s381 = scalar_lea.sflag [#allocation4], %s380
        %s382 = sand.u32 %s78, 1
        %s383 = smul.addr %s382, 8
        %s384 = scalar_lea.vmem [#allocation3], %s383
        %p385 = pneg %p91
        %p386 = pneg %p88
        %s387 = smul.u32 2, %s28
        %p388 = scmp.lt.s32.totalorder %s387, 3
        %s389 = scalar_select %p388, %s387, 3
        %s390 = smul.addr %s389, 4
        %s391 = scalar_lea.vmem %s3, %s390
        %p392 = pneg %p117
        %p393 = pneg %p114
        %p394 = pneg %p138
        %p395 = pneg %p135
        %p396 = pneg %p159
        %p397 = pneg %p156
        %p398 = pneg %p180
        %p399 = pneg %p177
        %p400 = pneg %p201
        %p401 = pneg %p198
        %p402 = pneg %p222
        %p403 = pneg %p219
        %p404 = pneg %p248
        %p405 = pneg %p245
        %s406 = sand.u32 %s235, 1
        %s407 = scalar_lea.sflag [#allocation5], %s406
        %s408 = sand.u32 %s235, 1
        %s409 = smul.addr %s408, 16
        %s410 = scalar_lea.vmem [#allocation11], %s409
        %s411 = smul.u32 2, %s28
        %s412 = smul.u32 2, %s28
        %p413 = scmp.lt.s32.totalorder %s412, 3
        %s414 = scalar_select %p413, %s412, 3
        %s415 = smul.addr %s414, 4
        %s416 = scalar_lea.vmem %s3, %s415
        %s417 = smul.u32 2, %s28
        %s418 = smul.u32 2, %s28
        %v422 = vld [vmem:[%s359] sm:$0xf]
        %v423 = vld [vmem:[%s359 + $0x4] sm:$0xf]
        %v424 = vld [vmem:[%s416] sm:$0xf]
        %v425 = vld [vmem:[%s416 + $0x4] sm:$0xf]
        %427 = vset.pattern.permute.xlu0 0
        %428 = vperm.xlu0 %427, %v424
        %v429 = vpop.permute.xlu0 %428
        %v432 = vunpack.c.l.s4 839922192
        %v433 = vunpack.c.0.s8 %v432
        %v434 = vlaneseq
        %v435 = vshrl.u32 %v434, 7
        %v436 = vsub.s32 %v433, %v435
        %v437 = vrot.slane %v429, %v436
        %439 = vset.pattern.permute.xlu0 0
        %440 = vperm.xlu0 %439, %v425
        %v441 = vpop.permute.xlu0 %440
        %v444 = vunpack.c.l.s4 839922192
        %v445 = vunpack.c.0.s8 %v444
        %v446 = vlaneseq
        %v447 = vshrl.u32 %v446, 7
        %v448 = vsub.s32 %v445, %v447
        %v449 = vrot.slane %v441, %v448
        %v450 = vmul.bf16 %v422, %v437
        %v451 = vmul.bf16 %v423, %v449
        %v452 = vld [vmem:[%s0] sm:$0xf]
        %v453 = vld [vmem:[%s0 + $0x4] sm:$0xf]
        %v454 = vld [vmem:[%s0 + $0x8] sm:$0xf]
        %v455 = vld [vmem:[%s0 + $0xc] sm:$0xf]
        %v456 = vld [vmem:[%s1] sm:$0x1]
        %v458 = vlaneseq
        %v459 = vshrl.u32 %v458, 7
        %v460 = vsub.s32 0, %v459
        %v461 = vrot.slane %v456, %v460
        %v465 = vunpack.c.l.b16 %v450
        %v466 = vunpack.c.l.b16 %v451
        %v467 = vpack.c.b16 %v466, %v465
        %v472 = vunpack.c.l.b16 %v452
        %v473 = vunpack.c.l.b16 %v453
        %v474 = vunpack.c.l.b16 %v454
        %v475 = vunpack.c.l.b16 %v455
        %v476 = vpack.c.b16 %v473, %v472
        %v477 = vpack.c.b16 %v475, %v474
        %vm480 = vcmask 261120
        %v482 = vsel %vm480, %v467, 0
        %484 = vmatprep.subr.bf16.mxu0 0
        %485 = vmatpush1.bf16.msra.mxu0 0
        %486 = vmatprep.subr.bf16.mxu0 0
        %487 = vmatpush1.bf16.msra.mxu0 0
        %488 = vmatprep.subr.bf16.mxu0 0
        %489 = vmatpush1.bf16.msra.mxu0 0
        %490 = vmatprep.subr.bf16.mxu0 0
        %491 = vmatpush1.bf16.msra.mxu0 0
        %492 = vmatprep.subr.bf16.mxu0 0
        %493 = vmatpush1.bf16.msra.mxu0 0
        %494 = vmatprep.subr.bf16.mxu0 0
        %495 = vmatpush1.bf16.msra.mxu0 0
        %496 = vmatprep.subr.bf16.mxu0 0
        %497 = vmatpush1.bf16.msra.mxu0 %v477
        %498 = vmatprep.subr.bf16.mxu0 0
        %499 = vmatpush1.bf16.msra.mxu0 %v476
        %500 = vmatprep.subr.bf16.mxu0 0
        %501 = vmatpush2.bf16.msra.mxu0 0
        %502 = vmatprep.subr.bf16.mxu0 0
        %503 = vmatpush2.bf16.msra.mxu0 0
        %504 = vmatprep.subr.bf16.mxu0 0
        %505 = vmatpush2.bf16.msra.mxu0 0
        %506 = vmatprep.subr.bf16.mxu0 0
        %507 = vmatpush2.bf16.msra.mxu0 0
        %508 = vmatprep.subr.bf16.mxu0 0
        %509 = vmatpush2.bf16.msra.mxu0 0
        %510 = vmatprep.subr.bf16.mxu0 0
        %511 = vmatpush2.bf16.msra.mxu0 0
        %512 = vmatprep.subr.bf16.mxu0 0
        %513 = vmatpush2.bf16.msra.mxu0 0
        %514 = vmatprep.subr.bf16.mxu0 0
        %515 = vmatpush2.bf16.msra.mxu0 0
        %516 = vmatprep.mubr.bf16.mxu0 0
        %517 = vmatmul.mubr.bf16.gmra.mxu0 %v482
        %v518 = vpop.f32.mrf.mxu0
        %v519 = vadd.f32 %v461, %v518
        %v520 = vpop.f32.mrf.mxu0
        %v521 = vpop.f32.mrf.mxu0
        %v522 = vadd.f32 %v461, %v521
        %v523 = vpop.f32.mrf.mxu0
        %524 = vdwg.mxu0
        %vm525 = vcmp.eq.bf16.partialorder %v424, 0
        %vm526 = vcmp.eq.bf16.partialorder %v425, 0
        %v527 = vsel %vm525, 65537, 0
        %v528 = vsel %vm526, 65537, 0
        %v529 = vunpack.c.l.b16 %v527
        %v530 = vunpack.c.l.b16 %v528
        %vm531 = vcmp.ne.s32.totalorder %v529, 0
        %vm532 = vcmp.ne.s32.totalorder %v530, 0
        %v533 = vsel %vm531, 1, 0
        %v534 = vsel %vm532, 1, 0
        %535 = vset.pattern.permute.xlu0 0
        %536 = vperm.xlu0 %535, %v533
        %v537 = vpop.permute.xlu0 %536
        %538 = vset.pattern.permute.xlu0 0
        %539 = vperm.xlu0 %538, %v534
        %v540 = vpop.permute.xlu0 %539
        %vm541 = vcmp.eq.s32.totalorder %v537, 1
        %vm542 = vcmp.eq.s32.totalorder %v540, 1
        %v543 = vsel %vm541, -1e+09, %v519
        %v544 = vsel %vm542, -1e+09, %v522
        %v545 = vsel %vm480, %v543, -inf
        %546 = vmax.xlane.f32.xlu0 %v545
        %v547 = vpop.xlane.xlu0 %546
        %v548 = vsel %vm480, %v544, -inf
        %549 = vmax.xlane.f32.xlu0 %v548
        %v550 = vpop.xlane.xlu0 %549
        %v551 = vsub.f32 %v543, %v547
        %v552 = vsub.f32 %v544, %v550
        %v553 = vmul.f32 %v551, 1.442695
        %v554 = vpow.pop %v553
        %v555 = vmul.f32 %v552, 1.442695
        %v556 = vpow.pop %v555
        %v557 = vld [vmem:[#allocation6] sm:$0xff]
        %v558 = vld [vmem:[#allocation6 + $0x8] sm:$0xff]
        %v559 = vld [vmem:[#allocation6 + $0x10] sm:$0xff]
        %v560 = vld [vmem:[#allocation6 + $0x18] sm:$0xff]
        %v562 = vsel %vm480, %v554, 0
        %v565 = vsel %vm480, %v556, 0
        %567 = vmatprep.subr.mxu0 0.0
        %568 = vmatpush1.msra.mxu0 0.0
        %569 = vmatprep.subr.mxu0 0.0
        %570 = vmatpush1.msra.mxu0 0.0
        %571 = vmatprep.subr.mxu0 0.0
        %572 = vmatpush1.msra.mxu0 0.0
        %573 = vmatprep.subr.mxu0 0.0
        %574 = vmatpush1.msra.mxu0 0.0
        %575 = vmatprep.subr.mxu0 0.0
        %576 = vmatpush1.msra.mxu0 0.0
        %577 = vmatprep.subr.mxu0 0.0
        %578 = vmatpush1.msra.mxu0 0.0
        %579 = vmatprep.subr.mxu0 0.0
        %580 = vmatpush1.msra.mxu0 0.0
        %581 = vmatprep.subr.mxu0 0.0
        %582 = vmatpush1.msra.mxu0 0.0
        %583 = vmatprep.subr.mxu0 0.0
        %584 = vmatpush1.msra.mxu0 0.0
        %585 = vmatprep.subr.mxu0 0.0
        %586 = vmatpush1.msra.mxu0 0.0
        %587 = vmatprep.subr.mxu0 0.0
        %588 = vmatpush1.msra.mxu0 0.0
        %589 = vmatprep.subr.mxu0 0.0
        %590 = vmatpush1.msra.mxu0 0.0
        %591 = vmatprep.subr.mxu0 0.0
        %592 = vmatpush1.msra.mxu0 %v560
        %593 = vmatprep.subr.mxu0 0.0
        %594 = vmatpush1.msra.mxu0 %v559
        %595 = vmatprep.subr.mxu0 0.0
        %596 = vmatpush1.msra.mxu0 %v558
        %597 = vmatprep.subr.mxu0 0.0
        %598 = vmatpush1.msra.mxu0 %v557
        %599 = vmatprep.subr.mxu0 0.0
        %600 = vmatpush2.msra.mxu0 0.0
        %601 = vmatprep.subr.mxu0 0.0
        %602 = vmatpush2.msra.mxu0 0.0
        %603 = vmatprep.subr.mxu0 0.0
        %604 = vmatpush2.msra.mxu0 0.0
        %605 = vmatprep.subr.mxu0 0.0
        %606 = vmatpush2.msra.mxu0 0.0
        %607 = vmatprep.subr.mxu0 0.0
        %608 = vmatpush2.msra.mxu0 0.0
        %609 = vmatprep.subr.mxu0 0.0
        %610 = vmatpush2.msra.mxu0 0.0
        %611 = vmatprep.subr.mxu0 0.0
        %612 = vmatpush2.msra.mxu0 0.0
        %613 = vmatprep.subr.mxu0 0.0
        %614 = vmatpush2.msra.mxu0 0.0
        %615 = vmatprep.subr.mxu0 0.0
        %616 = vmatpush2.msra.mxu0 0.0
        %617 = vmatprep.subr.mxu0 0.0
        %618 = vmatpush2.msra.mxu0 0.0
        %619 = vmatprep.subr.mxu0 0.0
        %620 = vmatpush2.msra.mxu0 0.0
        %621 = vmatprep.subr.mxu0 0.0
        %622 = vmatpush2.msra.mxu0 0.0
        %623 = vmatprep.subr.mxu0 0.0
        %624 = vmatpush2.msra.mxu0 0.0
        %625 = vmatprep.subr.mxu0 0.0
        %626 = vmatpush2.msra.mxu0 0.0
        %627 = vmatprep.subr.mxu0 0.0
        %628 = vmatpush2.msra.mxu0 0.0
        %629 = vmatprep.subr.mxu0 0.0
        %630 = vmatpush2.msra.mxu0 0.0
        %631 = vmatprep.mubr.f32.mxu0 0.0
        %632 = vmatmul.mubr.f32.gmra.mxu0 %v562
        %v633 = vpop.f32.mrf.mxu0
        %v634 = vadd.f32 0.0, %v633
        %v635 = vpop.f32.mrf.mxu0
        %636 = vmatprep.mubr.f32.mxu0 0.0
        %637 = vmatmul.mubr.f32.gmra.mxu0 %v565
        %v638 = vpop.f32.mrf.mxu0
        %v639 = vadd.f32 0.0, %v638
        %v640 = vpop.f32.mrf.mxu0
        %641 = vdwg.mxu0
        %v642 = vrcp.pop %v634
        %v643 = vrcp.pop %v639
        %v644 = vmul.f32 %v554, %v642
        %v645 = vmul.f32 %v556, %v643
        %v646 = vld [vmem:[#allocation8] sm:$0xf]
        %v647 = vld [vmem:[#allocation8 + $0x4] sm:$0xf]
        %v648 = vld [vmem:[#allocation8 + $0x8] sm:$0xf]
        %v649 = vld [vmem:[#allocation8 + $0xc] sm:$0xf]
        %v650 = vld [vmem:[%s6] sm:$0x1]
        %v652 = vlaneseq
        %v653 = vshrl.u32 %v652, 7
        %v654 = vsub.s32 0, %v653
        %v655 = vrot.slane %v650, %v654
        %v661 = vunpack.c.l.b16 %v646
        %v662 = vunpack.c.l.b16 %v647
        %v663 = vunpack.c.l.b16 %v648
        %v664 = vunpack.c.l.b16 %v649
        %v665 = vpack.c.b16 %v662, %v661
        %v666 = vpack.c.b16 %v664, %v663
        %669 = vmatprep.subr.bf16.mxu0 0
        %670 = vmatpush1.bf16.msra.mxu0 0
        %671 = vmatprep.subr.bf16.mxu0 0
        %672 = vmatpush1.bf16.msra.mxu0 0
        %673 = vmatprep.subr.bf16.mxu0 0
        %674 = vmatpush1.bf16.msra.mxu0 0
        %675 = vmatprep.subr.bf16.mxu0 0
        %676 = vmatpush1.bf16.msra.mxu0 0
        %677 = vmatprep.subr.bf16.mxu0 0
        %678 = vmatpush1.bf16.msra.mxu0 0
        %679 = vmatprep.subr.bf16.mxu0 0
        %680 = vmatpush1.bf16.msra.mxu0 0
        %681 = vmatprep.subr.bf16.mxu0 0
        %682 = vmatpush1.bf16.msra.mxu0 %v666
        %683 = vmatprep.subr.bf16.mxu0 0
        %684 = vmatpush1.bf16.msra.mxu0 %v665
        %685 = vmatprep.subr.bf16.mxu0 0
        %686 = vmatpush2.bf16.msra.mxu0 0
        %687 = vmatprep.subr.bf16.mxu0 0
        %688 = vmatpush2.bf16.msra.mxu0 0
        %689 = vmatprep.subr.bf16.mxu0 0
        %690 = vmatpush2.bf16.msra.mxu0 0
        %691 = vmatprep.subr.bf16.mxu0 0
        %692 = vmatpush2.bf16.msra.mxu0 0
        %693 = vmatprep.subr.bf16.mxu0 0
        %694 = vmatpush2.bf16.msra.mxu0 0
        %695 = vmatprep.subr.bf16.mxu0 0
        %696 = vmatpush2.bf16.msra.mxu0 0
        %697 = vmatprep.subr.bf16.mxu0 0
        %698 = vmatpush2.bf16.msra.mxu0 0
        %699 = vmatprep.subr.bf16.mxu0 0
        %700 = vmatpush2.bf16.msra.mxu0 0
        %701 = vmatprep.mubr.bf16.mxu0 0
        %702 = vmatmul.mubr.bf16.gmra.mxu0 %v482
        %v703 = vpop.f32.mrf.mxu0
        %v704 = vadd.f32 %v655, %v703
        %v705 = vpop.f32.mrf.mxu0
        %v706 = vpop.f32.mrf.mxu0
        %v707 = vadd.f32 %v655, %v706
        %v708 = vpop.f32.mrf.mxu0
        %709 = vdwg.mxu0
        %v710 = vpack.c.bf16 %v707, %v704
        %v712 = vunpack.c.l.b16 %v710
        %v713 = vunpack.c.h.b16 %v710
        %v714 = vpack.c.b16 %v712, %v712
        %v715 = vpack.c.b16 %v713, %v713
        %716 = vxpose.xlu0.b32.start [1/16] %v644, 128
        %717 = vxpose.xlu0.b32.cont [2/16] 0.0, 128
        %718 = vxpose.xlu0.b32.cont [3/16] 0.0, 128
        %719 = vxpose.xlu0.b32.cont [4/16] 0.0, 128
        %720 = vxpose.xlu0.b32.cont [5/16] 0.0, 128
        %721 = vxpose.xlu0.b32.cont [6/16] 0.0, 128
        %722 = vxpose.xlu0.b32.cont [7/16] 0.0, 128
        %723 = vxpose.xlu0.b32.cont [8/16] 0.0, 128
        %724 = vxpose.xlu0.b32.cont [9/16] 0.0, 128
        %725 = vxpose.xlu0.b32.cont [10/16] 0.0, 128
        %726 = vxpose.xlu0.b32.cont [11/16] 0.0, 128
        %727 = vxpose.xlu0.b32.cont [12/16] 0.0, 128
        %728 = vxpose.xlu0.b32.cont [13/16] 0.0, 128
        %729 = vxpose.xlu0.b32.cont [14/16] 0.0, 128
        %730 = vxpose.xlu0.b32.cont [15/16] 0.0, 128
        %731 = vxpose.xlu0.b32.end [16/16] 0.0, 128
        %v732 = vpop.trf.xlu0
        %v733 = vpop.trf.xlu0
        %v734 = vpop.trf.xlu0
        %v735 = vpop.trf.xlu0
        %v736 = vpop.trf.xlu0
        %v737 = vpop.trf.xlu0
        %v738 = vpop.trf.xlu0
        %v739 = vpop.trf.xlu0
        %v740 = vpop.trf.xlu0
        %v741 = vpop.trf.xlu0
        %v742 = vpop.trf.xlu0
        %v743 = vpop.trf.xlu0
        %v744 = vpop.trf.xlu0
        %v745 = vpop.trf.xlu0
        %v746 = vpop.trf.xlu0
        %v747 = vpop.trf.xlu0
        %748 = vxpose.xlu0.b32.start [1/16] %v645, 128
        %749 = vxpose.xlu0.b32.cont [2/16] 0.0, 128
        %750 = vxpose.xlu0.b32.cont [3/16] 0.0, 128
        %751 = vxpose.xlu0.b32.cont [4/16] 0.0, 128
        %752 = vxpose.xlu0.b32.cont [5/16] 0.0, 128
        %753 = vxpose.xlu0.b32.cont [6/16] 0.0, 128
        %754 = vxpose.xlu0.b32.cont [7/16] 0.0, 128
        %755 = vxpose.xlu0.b32.cont [8/16] 0.0, 128
        %756 = vxpose.xlu0.b32.cont [9/16] 0.0, 128
        %757 = vxpose.xlu0.b32.cont [10/16] 0.0, 128
        %758 = vxpose.xlu0.b32.cont [11/16] 0.0, 128
        %759 = vxpose.xlu0.b32.cont [12/16] 0.0, 128
        %760 = vxpose.xlu0.b32.cont [13/16] 0.0, 128
        %761 = vxpose.xlu0.b32.cont [14/16] 0.0, 128
        %762 = vxpose.xlu0.b32.cont [15/16] 0.0, 128
        %763 = vxpose.xlu0.b32.end [16/16] 0.0, 128
        %v764 = vpop.trf.xlu0
        %v765 = vpop.trf.xlu0
        %v766 = vpop.trf.xlu0
        %v767 = vpop.trf.xlu0
        %v768 = vpop.trf.xlu0
        %v769 = vpop.trf.xlu0
        %v770 = vpop.trf.xlu0
        %v771 = vpop.trf.xlu0
        %v772 = vpop.trf.xlu0
        %v773 = vpop.trf.xlu0
        %v774 = vpop.trf.xlu0
        %v775 = vpop.trf.xlu0
        %v776 = vpop.trf.xlu0
        %v777 = vpop.trf.xlu0
        %v778 = vpop.trf.xlu0
        %v779 = vpop.trf.xlu0
        %v780 = vpack.c.bf16 %v733, %v732
        %v781 = vpack.c.bf16 %v735, %v734
        %v782 = vpack.c.bf16 %v765, %v764
        %v783 = vpack.c.bf16 %v767, %v766
        %vm784 = vcmask 64512
        %v786 = vsel %vm784, %v780, 0
        %vm788 = vcmask 1043456
        %v790 = vsel %vm788, %v714, 0
        %792 = vmatprep.subr.bf16.mxu0 0
        %793 = vmatpush1.bf16.msra.mxu0 0
        %794 = vmatprep.subr.bf16.mxu0 0
        %795 = vmatpush1.bf16.msra.mxu0 0
        %796 = vmatprep.subr.bf16.mxu0 0
        %797 = vmatpush1.bf16.msra.mxu0 0
        %798 = vmatprep.subr.bf16.mxu0 0
        %799 = vmatpush1.bf16.msra.mxu0 0
        %800 = vmatprep.subr.bf16.mxu0 0
        %801 = vmatpush1.bf16.msra.mxu0 0
        %802 = vmatprep.subr.bf16.mxu0 0
        %803 = vmatpush1.bf16.msra.mxu0 0
        %804 = vmatprep.subr.bf16.mxu0 0
        %805 = vmatpush1.bf16.msra.mxu0 0
        %806 = vmatprep.subr.bf16.mxu0 0
        %807 = vmatpush1.bf16.msra.mxu0 %v790
        %808 = vmatprep.subr.bf16.mxu0 0
        %809 = vmatpush2.bf16.msra.mxu0 0
        %810 = vmatprep.subr.bf16.mxu0 0
        %811 = vmatpush2.bf16.msra.mxu0 0
        %812 = vmatprep.subr.bf16.mxu0 0
        %813 = vmatpush2.bf16.msra.mxu0 0
        %814 = vmatprep.subr.bf16.mxu0 0
        %815 = vmatpush2.bf16.msra.mxu0 0
        %816 = vmatprep.subr.bf16.mxu0 0
        %817 = vmatpush2.bf16.msra.mxu0 0
        %818 = vmatprep.subr.bf16.mxu0 0
        %819 = vmatpush2.bf16.msra.mxu0 0
        %820 = vmatprep.subr.bf16.mxu0 0
        %821 = vmatpush2.bf16.msra.mxu0 0
        %822 = vmatprep.subr.bf16.mxu0 0
        %823 = vmatpush2.bf16.msra.mxu0 0
        %824 = vmatprep.mubr.bf16.mxu0 0
        %825 = vmatmul.mubr.bf16.gmra.mxu0 %v786
        %v826 = vpop.f32.mrf.mxu0
        %v827 = vadd.f32 0.0, %v826
        %v828 = vpop.f32.mrf.mxu0
        %v829 = vpop.f32.mrf.mxu0
        %v830 = vpop.f32.mrf.mxu0
        %831 = vdwg.mxu0
        %v833 = vsel %vm784, %v782, 0
        %v836 = vsel %vm788, %v715, 0
        %838 = vmatprep.subr.bf16.mxu0 0
        %839 = vmatpush1.bf16.msra.mxu0 0
        %840 = vmatprep.subr.bf16.mxu0 0
        %841 = vmatpush1.bf16.msra.mxu0 0
        %842 = vmatprep.subr.bf16.mxu0 0
        %843 = vmatpush1.bf16.msra.mxu0 0
        %844 = vmatprep.subr.bf16.mxu0 0
        %845 = vmatpush1.bf16.msra.mxu0 0
        %846 = vmatprep.subr.bf16.mxu0 0
        %847 = vmatpush1.bf16.msra.mxu0 0
        %848 = vmatprep.subr.bf16.mxu0 0
        %849 = vmatpush1.bf16.msra.mxu0 0
        %850 = vmatprep.subr.bf16.mxu0 0
        %851 = vmatpush1.bf16.msra.mxu0 0
        %852 = vmatprep.subr.bf16.mxu0 0
        %853 = vmatpush1.bf16.msra.mxu0 %v836
        %854 = vmatprep.subr.bf16.mxu0 0
        %855 = vmatpush2.bf16.msra.mxu0 0
        %856 = vmatprep.subr.bf16.mxu0 0
        %857 = vmatpush2.bf16.msra.mxu0 0
        %858 = vmatprep.subr.bf16.mxu0 0
        %859 = vmatpush2.bf16.msra.mxu0 0
        %860 = vmatprep.subr.bf16.mxu0 0
        %861 = vmatpush2.bf16.msra.mxu0 0
        %862 = vmatprep.subr.bf16.mxu0 0
        %863 = vmatpush2.bf16.msra.mxu0 0
        %864 = vmatprep.subr.bf16.mxu0 0
        %865 = vmatpush2.bf16.msra.mxu0 0
        %866 = vmatprep.subr.bf16.mxu0 0
        %867 = vmatpush2.bf16.msra.mxu0 0
        %868 = vmatprep.subr.bf16.mxu0 0
        %869 = vmatpush2.bf16.msra.mxu0 0
        %870 = vmatprep.mubr.bf16.mxu0 0
        %871 = vmatmul.mubr.bf16.gmra.mxu0 %v833
        %v872 = vpop.f32.mrf.mxu0
        %v873 = vadd.f32 0.0, %v872
        %v874 = vpop.f32.mrf.mxu0
        %v875 = vpop.f32.mrf.mxu0
        %v876 = vpop.f32.mrf.mxu0
        %877 = vdwg.mxu0
        %878 = vst.msk [vmem:[#allocation2] sm:$0xff] %vm784, %v827
        %879 = vst.msk [vmem:[#allocation2 + $0x8] sm:$0xff] %vm784, %v873
        %v881 = vrot.slane %v780, 4
        %882 = vrot.lane.b32.xlu0 %v714, 120
        %v883 = vpop.permute.xlu0 %882
        %v885 = vsel %vm784, %v881, 0
        %v888 = vsel %vm788, %v883, 0
        %890 = vmatprep.subr.bf16.mxu0 0
        %891 = vmatpush1.bf16.msra.mxu0 0
        %892 = vmatprep.subr.bf16.mxu0 0
        %893 = vmatpush1.bf16.msra.mxu0 0
        %894 = vmatprep.subr.bf16.mxu0 0
        %895 = vmatpush1.bf16.msra.mxu0 0
        %896 = vmatprep.subr.bf16.mxu0 0
        %897 = vmatpush1.bf16.msra.mxu0 0
        %898 = vmatprep.subr.bf16.mxu0 0
        %899 = vmatpush1.bf16.msra.mxu0 0
        %900 = vmatprep.subr.bf16.mxu0 0
        %901 = vmatpush1.bf16.msra.mxu0 0
        %902 = vmatprep.subr.bf16.mxu0 0
        %903 = vmatpush1.bf16.msra.mxu0 0
        %904 = vmatprep.subr.bf16.mxu0 0
        %905 = vmatpush1.bf16.msra.mxu0 %v888
        %906 = vmatprep.subr.bf16.mxu0 0
        %907 = vmatpush2.bf16.msra.mxu0 0
        %908 = vmatprep.subr.bf16.mxu0 0
        %909 = vmatpush2.bf16.msra.mxu0 0
        %910 = vmatprep.subr.bf16.mxu0 0
        %911 = vmatpush2.bf16.msra.mxu0 0
        %912 = vmatprep.subr.bf16.mxu0 0
        %913 = vmatpush2.bf16.msra.mxu0 0
        %914 = vmatprep.subr.bf16.mxu0 0
        %915 = vmatpush2.bf16.msra.mxu0 0
        %916 = vmatprep.subr.bf16.mxu0 0
        %917 = vmatpush2.bf16.msra.mxu0 0
        %918 = vmatprep.subr.bf16.mxu0 0
        %919 = vmatpush2.bf16.msra.mxu0 0
        %920 = vmatprep.subr.bf16.mxu0 0
        %921 = vmatpush2.bf16.msra.mxu0 0
        %922 = vmatprep.mubr.bf16.mxu0 0
        %923 = vmatmul.mubr.bf16.gmra.mxu0 %v885
        %v924 = vpop.f32.mrf.mxu0
        %v925 = vadd.f32 0.0, %v924
        %v926 = vpop.f32.mrf.mxu0
        %v927 = vpop.f32.mrf.mxu0
        %v928 = vpop.f32.mrf.mxu0
        %929 = vdwg.mxu0
        %v931 = vrot.slane %v782, 4
        %932 = vrot.lane.b32.xlu0 %v715, 120
        %v933 = vpop.permute.xlu0 %932
        %v935 = vsel %vm784, %v931, 0
        %v938 = vsel %vm788, %v933, 0
        %940 = vmatprep.subr.bf16.mxu0 0
        %941 = vmatpush1.bf16.msra.mxu0 0
        %942 = vmatprep.subr.bf16.mxu0 0
        %943 = vmatpush1.bf16.msra.mxu0 0
        %944 = vmatprep.subr.bf16.mxu0 0
        %945 = vmatpush1.bf16.msra.mxu0 0
        %946 = vmatprep.subr.bf16.mxu0 0
        %947 = vmatpush1.bf16.msra.mxu0 0
        %948 = vmatprep.subr.bf16.mxu0 0
        %949 = vmatpush1.bf16.msra.mxu0 0
        %950 = vmatprep.subr.bf16.mxu0 0
        %951 = vmatpush1.bf16.msra.mxu0 0
        %952 = vmatprep.subr.bf16.mxu0 0
        %953 = vmatpush1.bf16.msra.mxu0 0
        %954 = vmatprep.subr.bf16.mxu0 0
        %955 = vmatpush1.bf16.msra.mxu0 %v938
        %956 = vmatprep.subr.bf16.mxu0 0
        %957 = vmatpush2.bf16.msra.mxu0 0
        %958 = vmatprep.subr.bf16.mxu0 0
        %959 = vmatpush2.bf16.msra.mxu0 0
        %960 = vmatprep.subr.bf16.mxu0 0
        %961 = vmatpush2.bf16.msra.mxu0 0
        %962 = vmatprep.subr.bf16.mxu0 0
        %963 = vmatpush2.bf16.msra.mxu0 0
        %964 = vmatprep.subr.bf16.mxu0 0
        %965 = vmatpush2.bf16.msra.mxu0 0
        %966 = vmatprep.subr.bf16.mxu0 0
        %967 = vmatpush2.bf16.msra.mxu0 0
        %968 = vmatprep.subr.bf16.mxu0 0
        %969 = vmatpush2.bf16.msra.mxu0 0
        %970 = vmatprep.subr.bf16.mxu0 0
        %971 = vmatpush2.bf16.msra.mxu0 0
        %972 = vmatprep.mubr.bf16.mxu0 0
        %973 = vmatmul.mubr.bf16.gmra.mxu0 %v935
        %v974 = vpop.f32.mrf.mxu0
        %v975 = vadd.f32 0.0, %v974
        %v976 = vpop.f32.mrf.mxu0
        %v977 = vpop.f32.mrf.mxu0
        %v978 = vpop.f32.mrf.mxu0
        %979 = vdwg.mxu0
        %982 = vrot.lane.b32.xlu0 %v925, 8
        %v983 = vpop.permute.xlu0 %982
        %984 = vrot.lane.b32.xlu0 %v975, 8
        %v985 = vpop.permute.xlu0 %984
        %vm988 = vcmask 130112
        %989 = vst.msk [vmem:[#allocation2] sm:$0xff] %vm988, %v983
        %990 = vst.msk [vmem:[#allocation2 + $0x8] sm:$0xff] %vm988, %v985
        %991 = vrot.lane.b32.xlu0 %v714, 112
        %v992 = vpop.permute.xlu0 %991
        %v994 = vsel %vm784, %v781, 0
        %v997 = vsel %vm788, %v992, 0
        %999 = vmatprep.subr.bf16.mxu0 0
        %1000 = vmatpush1.bf16.msra.mxu0 0
        %1001 = vmatprep.subr.bf16.mxu0 0
        %1002 = vmatpush1.bf16.msra.mxu0 0
        %1003 = vmatprep.subr.bf16.mxu0 0
        %1004 = vmatpush1.bf16.msra.mxu0 0
        %1005 = vmatprep.subr.bf16.mxu0 0
        %1006 = vmatpush1.bf16.msra.mxu0 0
        %1007 = vmatprep.subr.bf16.mxu0 0
        %1008 = vmatpush1.bf16.msra.mxu0 0
        %1009 = vmatprep.subr.bf16.mxu0 0
        %1010 = vmatpush1.bf16.msra.mxu0 0
        %1011 = vmatprep.subr.bf16.mxu0 0
        %1012 = vmatpush1.bf16.msra.mxu0 0
        %1013 = vmatprep.subr.bf16.mxu0 0
        %1014 = vmatpush1.bf16.msra.mxu0 %v997
        %1015 = vmatprep.subr.bf16.mxu0 0
        %1016 = vmatpush2.bf16.msra.mxu0 0
        %1017 = vmatprep.subr.bf16.mxu0 0
        %1018 = vmatpush2.bf16.msra.mxu0 0
        %1019 = vmatprep.subr.bf16.mxu0 0
        %1020 = vmatpush2.bf16.msra.mxu0 0
        %1021 = vmatprep.subr.bf16.mxu0 0
        %1022 = vmatpush2.bf16.msra.mxu0 0
        %1023 = vmatprep.subr.bf16.mxu0 0
        %1024 = vmatpush2.bf16.msra.mxu0 0
        %1025 = vmatprep.subr.bf16.mxu0 0
        %1026 = vmatpush2.bf16.msra.mxu0 0
        %1027 = vmatprep.subr.bf16.mxu0 0
        %1028 = vmatpush2.bf16.msra.mxu0 0
        %1029 = vmatprep.subr.bf16.mxu0 0
        %1030 = vmatpush2.bf16.msra.mxu0 0
        %1031 = vmatprep.mubr.bf16.mxu0 0
        %1032 = vmatmul.mubr.bf16.gmra.mxu0 %v994
        %v1033 = vpop.f32.mrf.mxu0
        %v1034 = vadd.f32 0.0, %v1033
        %v1035 = vpop.f32.mrf.mxu0
        %v1036 = vpop.f32.mrf.mxu0
        %v1037 = vpop.f32.mrf.mxu0
        %1038 = vdwg.mxu0
        %1039 = vrot.lane.b32.xlu0 %v715, 112
        %v1040 = vpop.permute.xlu0 %1039
        %v1042 = vsel %vm784, %v783, 0
        %v1045 = vsel %vm788, %v1040, 0
        %1047 = vmatprep.subr.bf16.mxu0 0
        %1048 = vmatpush1.bf16.msra.mxu0 0
        %1049 = vmatprep.subr.bf16.mxu0 0
        %1050 = vmatpush1.bf16.msra.mxu0 0
        %1051 = vmatprep.subr.bf16.mxu0 0
        %1052 = vmatpush1.bf16.msra.mxu0 0
        %1053 = vmatprep.subr.bf16.mxu0 0
        %1054 = vmatpush1.bf16.msra.mxu0 0
        %1055 = vmatprep.subr.bf16.mxu0 0
        %1056 = vmatpush1.bf16.msra.mxu0 0
        %1057 = vmatprep.subr.bf16.mxu0 0
        %1058 = vmatpush1.bf16.msra.mxu0 0
        %1059 = vmatprep.subr.bf16.mxu0 0
        %1060 = vmatpush1.bf16.msra.mxu0 0
        %1061 = vmatprep.subr.bf16.mxu0 0
        %1062 = vmatpush1.bf16.msra.mxu0 %v1045
        %1063 = vmatprep.subr.bf16.mxu0 0
        %1064 = vmatpush2.bf16.msra.mxu0 0
        %1065 = vmatprep.subr.bf16.mxu0 0
        %1066 = vmatpush2.bf16.msra.mxu0 0
        %1067 = vmatprep.subr.bf16.mxu0 0
        %1068 = vmatpush2.bf16.msra.mxu0 0
        %1069 = vmatprep.subr.bf16.mxu0 0
        %1070 = vmatpush2.bf16.msra.mxu0 0
        %1071 = vmatprep.subr.bf16.mxu0 0
        %1072 = vmatpush2.bf16.msra.mxu0 0
        %1073 = vmatprep.subr.bf16.mxu0 0
        %1074 = vmatpush2.bf16.msra.mxu0 0
        %1075 = vmatprep.subr.bf16.mxu0 0
        %1076 = vmatpush2.bf16.msra.mxu0 0
        %1077 = vmatprep.subr.bf16.mxu0 0
        %1078 = vmatpush2.bf16.msra.mxu0 0
        %1079 = vmatprep.mubr.bf16.mxu0 0
        %1080 = vmatmul.mubr.bf16.gmra.mxu0 %v1042
        %v1081 = vpop.f32.mrf.mxu0
        %v1082 = vadd.f32 0.0, %v1081
        %v1083 = vpop.f32.mrf.mxu0
        %v1084 = vpop.f32.mrf.mxu0
        %v1085 = vpop.f32.mrf.mxu0
        %1086 = vdwg.mxu0
        %1089 = vrot.lane.b32.xlu0 %v1034, 16
        %v1090 = vpop.permute.xlu0 %1089
        %1091 = vrot.lane.b32.xlu0 %v1082, 16
        %v1092 = vpop.permute.xlu0 %1091
        %vm1095 = vcmask 195712
        %1096 = vst.msk [vmem:[#allocation2] sm:$0xff] %vm1095, %v1090
        %1097 = vst.msk [vmem:[#allocation2 + $0x8] sm:$0xff] %vm1095, %v1092
        %v1099 = vrot.slane %v781, 4
        %1100 = vrot.lane.b32.xlu0 %v714, 104
        %v1101 = vpop.permute.xlu0 %1100
        %v1103 = vsel %vm784, %v1099, 0
        %v1106 = vsel %vm788, %v1101, 0
        %1108 = vmatprep.subr.bf16.mxu0 0
        %1109 = vmatpush1.bf16.msra.mxu0 0
        %1110 = vmatprep.subr.bf16.mxu0 0
        %1111 = vmatpush1.bf16.msra.mxu0 0
        %1112 = vmatprep.subr.bf16.mxu0 0
        %1113 = vmatpush1.bf16.msra.mxu0 0
        %1114 = vmatprep.subr.bf16.mxu0 0
        %1115 = vmatpush1.bf16.msra.mxu0 0
        %1116 = vmatprep.subr.bf16.mxu0 0
        %1117 = vmatpush1.bf16.msra.mxu0 0
        %1118 = vmatprep.subr.bf16.mxu0 0
        %1119 = vmatpush1.bf16.msra.mxu0 0
        %1120 = vmatprep.subr.bf16.mxu0 0
        %1121 = vmatpush1.bf16.msra.mxu0 0
        %1122 = vmatprep.subr.bf16.mxu0 0
        %1123 = vmatpush1.bf16.msra.mxu0 %v1106
        %1124 = vmatprep.subr.bf16.mxu0 0
        %1125 = vmatpush2.bf16.msra.mxu0 0
        %1126 = vmatprep.subr.bf16.mxu0 0
        %1127 = vmatpush2.bf16.msra.mxu0 0
        %1128 = vmatprep.subr.bf16.mxu0 0
        %1129 = vmatpush2.bf16.msra.mxu0 0
        %1130 = vmatprep.subr.bf16.mxu0 0
        %1131 = vmatpush2.bf16.msra.mxu0 0
        %1132 = vmatprep.subr.bf16.mxu0 0
        %1133 = vmatpush2.bf16.msra.mxu0 0
        %1134 = vmatprep.subr.bf16.mxu0 0
        %1135 = vmatpush2.bf16.msra.mxu0 0
        %1136 = vmatprep.subr.bf16.mxu0 0
        %1137 = vmatpush2.bf16.msra.mxu0 0
        %1138 = vmatprep.subr.bf16.mxu0 0
        %1139 = vmatpush2.bf16.msra.mxu0 0
        %1140 = vmatprep.mubr.bf16.mxu0 0
        %1141 = vmatmul.mubr.bf16.gmra.mxu0 %v1103
        %v1142 = vpop.f32.mrf.mxu0
        %v1143 = vadd.f32 0.0, %v1142
        %v1144 = vpop.f32.mrf.mxu0
        %v1145 = vpop.f32.mrf.mxu0
        %v1146 = vpop.f32.mrf.mxu0
        %1147 = vdwg.mxu0
        %v1149 = vrot.slane %v783, 4
        %1150 = vrot.lane.b32.xlu0 %v715, 104
        %v1151 = vpop.permute.xlu0 %1150
        %v1153 = vsel %vm784, %v1149, 0
        %v1156 = vsel %vm788, %v1151, 0
        %1158 = vmatprep.subr.bf16.mxu0 0
        %1159 = vmatpush1.bf16.msra.mxu0 0
        %1160 = vmatprep.subr.bf16.mxu0 0
        %1161 = vmatpush1.bf16.msra.mxu0 0
        %1162 = vmatprep.subr.bf16.mxu0 0
        %1163 = vmatpush1.bf16.msra.mxu0 0
        %1164 = vmatprep.subr.bf16.mxu0 0
        %1165 = vmatpush1.bf16.msra.mxu0 0
        %1166 = vmatprep.subr.bf16.mxu0 0
        %1167 = vmatpush1.bf16.msra.mxu0 0
        %1168 = vmatprep.subr.bf16.mxu0 0
        %1169 = vmatpush1.bf16.msra.mxu0 0
        %1170 = vmatprep.subr.bf16.mxu0 0
        %1171 = vmatpush1.bf16.msra.mxu0 0
        %1172 = vmatprep.subr.bf16.mxu0 0
        %1173 = vmatpush1.bf16.msra.mxu0 %v1156
        %1174 = vmatprep.subr.bf16.mxu0 0
        %1175 = vmatpush2.bf16.msra.mxu0 0
        %1176 = vmatprep.subr.bf16.mxu0 0
        %1177 = vmatpush2.bf16.msra.mxu0 0
        %1178 = vmatprep.subr.bf16.mxu0 0
        %1179 = vmatpush2.bf16.msra.mxu0 0
        %1180 = vmatprep.subr.bf16.mxu0 0
        %1181 = vmatpush2.bf16.msra.mxu0 0
        %1182 = vmatprep.subr.bf16.mxu0 0
        %1183 = vmatpush2.bf16.msra.mxu0 0
        %1184 = vmatprep.subr.bf16.mxu0 0
        %1185 = vmatpush2.bf16.msra.mxu0 0
        %1186 = vmatprep.subr.bf16.mxu0 0
        %1187 = vmatpush2.bf16.msra.mxu0 0
        %1188 = vmatprep.subr.bf16.mxu0 0
        %1189 = vmatpush2.bf16.msra.mxu0 0
        %1190 = vmatprep.mubr.bf16.mxu0 0
        %1191 = vmatmul.mubr.bf16.gmra.mxu0 %v1153
        %v1192 = vpop.f32.mrf.mxu0
        %v1193 = vadd.f32 0.0, %v1192
        %v1194 = vpop.f32.mrf.mxu0
        %v1195 = vpop.f32.mrf.mxu0
        %v1196 = vpop.f32.mrf.mxu0
        %1197 = vdwg.mxu0
        %1200 = vrot.lane.b32.xlu0 %v1143, 24
        %v1201 = vpop.permute.xlu0 %1200
        %1202 = vrot.lane.b32.xlu0 %v1193, 24
        %v1203 = vpop.permute.xlu0 %1202
        %vm1206 = vcmask 261312
        %1207 = vst.msk [vmem:[#allocation2] sm:$0xff] %vm1206, %v1201
        %1208 = vst.msk [vmem:[#allocation2 + $0x8] sm:$0xff] %vm1206, %v1203
        %v1209 = vld [vmem:[#allocation2] sm:$0xff]
        %v1210 = vld [vmem:[#allocation2 + $0x8] sm:$0xff]
        %v1211 = vpack.c.bf16 %v1210, %v1209
        %v1212 = vld [vmem:[#allocation9] sm:$0xf]
        %v1213 = vld [vmem:[#allocation9 + $0x4] sm:$0xf]
        %v1214 = vld [vmem:[#allocation9 + $0x8] sm:$0xf]
        %v1215 = vld [vmem:[#allocation9 + $0xc] sm:$0xf]
        %v1216 = vld [vmem:[%s8] sm:$0x1]
        %v1218 = vlaneseq
        %v1219 = vshrl.u32 %v1218, 7
        %v1220 = vsub.s32 0, %v1219
        %v1221 = vrot.slane %v1216, %v1220
        %v1227 = vunpack.c.l.b16 %v1212
        %v1228 = vunpack.c.l.b16 %v1213
        %v1229 = vunpack.c.l.b16 %v1214
        %v1230 = vunpack.c.l.b16 %v1215
        %v1231 = vpack.c.b16 %v1228, %v1227
        %v1232 = vpack.c.b16 %v1230, %v1229
        %v1236 = vsel %vm480, %v1211, 0
        %1238 = vmatprep.subr.bf16.mxu0 0
        %1239 = vmatpush1.bf16.msra.mxu0 0
        %1240 = vmatprep.subr.bf16.mxu0 0
        %1241 = vmatpush1.bf16.msra.mxu0 0
        %1242 = vmatprep.subr.bf16.mxu0 0
        %1243 = vmatpush1.bf16.msra.mxu0 0
        %1244 = vmatprep.subr.bf16.mxu0 0
        %1245 = vmatpush1.bf16.msra.mxu0 0
        %1246 = vmatprep.subr.bf16.mxu0 0
        %1247 = vmatpush1.bf16.msra.mxu0 0
        %1248 = vmatprep.subr.bf16.mxu0 0
        %1249 = vmatpush1.bf16.msra.mxu0 0
        %1250 = vmatprep.subr.bf16.mxu0 0
        %1251 = vmatpush1.bf16.msra.mxu0 %v1232
        %1252 = vmatprep.subr.bf16.mxu0 0
        %1253 = vmatpush1.bf16.msra.mxu0 %v1231
        %1254 = vmatprep.subr.bf16.mxu0 0
        %1255 = vmatpush2.bf16.msra.mxu0 0
        %1256 = vmatprep.subr.bf16.mxu0 0
        %1257 = vmatpush2.bf16.msra.mxu0 0
        %1258 = vmatprep.subr.bf16.mxu0 0
        %1259 = vmatpush2.bf16.msra.mxu0 0
        %1260 = vmatprep.subr.bf16.mxu0 0
        %1261 = vmatpush2.bf16.msra.mxu0 0
        %1262 = vmatprep.subr.bf16.mxu0 0
        %1263 = vmatpush2.bf16.msra.mxu0 0
        %1264 = vmatprep.subr.bf16.mxu0 0
        %1265 = vmatpush2.bf16.msra.mxu0 0
        %1266 = vmatprep.subr.bf16.mxu0 0
        %1267 = vmatpush2.bf16.msra.mxu0 0
        %1268 = vmatprep.subr.bf16.mxu0 0
        %1269 = vmatpush2.bf16.msra.mxu0 0
        %1270 = vmatprep.mubr.bf16.mxu0 0
        %1271 = vmatmul.mubr.bf16.gmra.mxu0 %v1236
        %v1272 = vpop.f32.mrf.mxu0
        %v1273 = vadd.f32 %v1221, %v1272
        %v1274 = vpop.f32.mrf.mxu0
        %v1275 = vpop.f32.mrf.mxu0
        %v1276 = vadd.f32 %v1221, %v1275
        %v1277 = vpop.f32.mrf.mxu0
        %1278 = vdwg.mxu0
        %1279 = vst.msk [vmem:[%s410] sm:$0xff] %vm480, %v1273
        %1280 = vst.msk [vmem:[%s410 + $0x8] sm:$0xff] %vm480, %v1276
        %s1281 = sand.u32 %s235, 1
        %s1282 = scalar_lea.sflag [#allocation5], %s1281
        %s1283 = sand.u32 %s235, 1
        %s1284 = smul.addr %s1283, 16
        %s1285 = scalar_lea.vmem [#allocation11], %s1284
        // Predicated region
        $region73: #{tpu_custom_call.1} parent=55 // pred_check
          %p1286 = pneg %p245
        $region74: #{tpu_custom_call.1} parent=55 // pred_check_branch
          %1288 = sbr.rel (%p1286) target = $region76
        $region75: #{tpu_custom_call.1} parent=55 // pred_region
          %s1289 = smul.u32 2, %s28
          %s1291 = ssub.s32 256, 256
          %1292 = vsyncadd %s1282, %s1291
          %s1293 = smul.addr %s1289, 128
          %s1294 = scalar_lea.hbm %s9, %s1293
          %s1295 = sshll.u32 %s1285, 4
          %s1296 = int_to_ptr.vmem [resolvable:$true] %s1295
          %1301 = dma.vmem_to_hbm [thread:$0]  %s1296, 256, %s1294, %s1282, 128, 128, 8
        $region76: #{tpu_custom_call.1} parent=55 // pred_fallthru
          _
      $region56: #{tpu_custom_call.1} parent=5 // pred_fallthru
        _
      %p1302 = scmp.le.s32.totalorder 2, %s23
      // Predicated region
      $region77: #{tpu_custom_call.1} parent=5 // pred_check
        %p1303 = pneg %p1302
      $region78: #{tpu_custom_call.1} parent=5 // pred_check_branch
        %1305 = sbr.rel (%p1303) target = $region80
      $region79: #{tpu_custom_call.1} parent=5 // pred_region
        %s1306 = ssub.s32 %s23, 2
        // Predicated region
        $region81: #{tpu_custom_call.1} parent=79 // pred_check
          %p1307 = pneg %p251
        $region82: #{tpu_custom_call.1} parent=79 // pred_check_branch
          %1309 = sbr.rel (%p1307) target = $region84
        $region83: #{tpu_custom_call.1} parent=79 // pred_region
          %s1310 = sand.u32 %s236, 1
          %s1311 = scalar_lea.sflag [#allocation5], %s1310
          %s1312 = sand.u32 %s236, 1
          %s1313 = smul.addr %s1312, 16
          %s1314 = scalar_lea.vmem [#allocation11], %s1313
          %1315 = dma.done %s1311, 256
        $region84: #{tpu_custom_call.1} parent=79 // pred_fallthru
          _
      $region80: #{tpu_custom_call.1} parent=5 // pred_fallthru
        _
    $region6: #{tpu_custom_call.1} parent=1 // loop_footer
      %s27 = sadd.s32 1, %s23
    $region7: #{tpu_custom_call.1} parent=1 // loop_footer_branch
      %22 = sbr.rel target = $region3
    $region8: #{tpu_custom_call.1} parent=1 // loop_exit
      _
    %1316 = vsyncpa [#allocation4], 1
    %s1317 = scalar_lea.sflag [#allocation4], 1
    %1318 = vsyncpa %s1317, 1
    %1319 = vsyncpa [#allocation7], 1
    %1320 = vsyncpa [#allocation10], 1
    %1321 = vsyncpa [#allocation5], 1
    %s1322 = scalar_lea.sflag [#allocation5], 1
    %1323 = vsyncpa %s1322, 1

</llo_original>
